<compile_context>
chip_gen: v7x
topology: tpu7x:2x2x1
jax: 0.10.0
libtpu: 0.0.40
codegen_flags: <defaults>
</compile_context>

<pallas_src>
import jax
import jax.numpy as jnp
from jax.experimental import pallas as pl
from jax.experimental.pallas import tpu as pltpu

NUM_CLASSES = 10
LEAKY_SLOPE = 0.01  # nn.LeakyReLU() default negative_slope


# ----------------------------------------------------------------------------
# Fused kernel: conv(3x3 as im2col matmul) + bias + LeakyReLU + MaxPool2d((2,2))
# ----------------------------------------------------------------------------
def _conv_pool_kernel(p_ref, w_ref, b_ref, o_ref):
    # p_ref: (4, M, K)   im2col patches, one slab per 2x2-pool position
    # w_ref: (K, Cout)   conv weight as a 2-D matmul operand
    # b_ref: (1, Cout)   bias
    # o_ref: (M, Cout)   pooled activation (rows ordered (hp, wp))
    w = w_ref[...]
    m = jnp.dot(p_ref[0], w, preferred_element_type=jnp.float32)
    for i in range(1, 4):  # static unroll: 3 more full-size MXU pushes
        m = jnp.maximum(m, jnp.dot(p_ref[i], w, preferred_element_type=jnp.float32))
    # bias-add and LeakyReLU are monotonic / shift-invariant -> apply once after max.
    y = m + b_ref[...]
    o_ref[...] = jnp.where(y >= 0, y, LEAKY_SLOPE * y)


# ----------------------------------------------------------------------------
# Fused kernel: fc1 (+ eval-mode dropout) + fc2 for one branch
# ----------------------------------------------------------------------------
def _mlp_kernel(x_ref, w1_ref, b1_ref, w2_ref, b2_ref, o_ref):
    h = jnp.dot(x_ref[...], w1_ref[...], preferred_element_type=jnp.float32) + b1_ref[...]
    # TODO(synk): nn.Dropout(p=0.75) is stochastic in train mode; eval-mode identity here.
    o_ref[...] = jnp.dot(h, w2_ref[...], preferred_element_type=jnp.float32) + b2_ref[...]


# ----------------------------------------------------------------------------
# XLA glue: im2col grouped by pool position, weight reshuffles (trace-time only)
# ----------------------------------------------------------------------------
def _pool_patches(x_nhwc):
    """3x3-valid-conv im2col grouped by 2x2 max-pool position.

    Returns ((N, 4, Hp*Wp, 9*Cin), Hp, Wp); K ordered as (dy, dx, ci)."""
    N, H, W, Cin = x_nhwc.shape
    Hc, Wc = H - 2, W - 2
    Hp, Wp = Hc // 2, Wc // 2
    cols = [x_nhwc[:, dy:dy + Hc, dx:dx + Wc, :] for dy in range(3) for dx in range(3)]
    patches = jnp.concatenate(cols, axis=-1)                       # (N, Hc, Wc, 9*Cin)
    pos = [patches[:, i:2 * Hp:2, j:2 * Wp:2, :].reshape(N, Hp * Wp, 9 * Cin)
           for i in range(2) for j in range(2)]
    return jnp.stack(pos, axis=1), Hp, Wp                          # (N, 4, Hp*Wp, K)


def _conv_w2d(w_torch):
    """PyTorch conv weight (Cout, Cin, 3, 3) -> (9*Cin, Cout), K ordered (dy, dx, ci)."""
    Cout, Cin = w_torch.shape[0], w_torch.shape[1]
    return jnp.transpose(w_torch, (2, 3, 1, 0)).reshape(9 * Cin, Cout).astype(jnp.float32)


def _fc1_weight_hwc_order(fc1_w, c, h, w):
    """Permute torch fc1 weight (Dout, c*h*w) -> (h*w*c, Dout) to match the NHWC
    flatten coming out of the conv kernel (parameter-only, trace-time)."""
    Dout = fc1_w.shape[0]
    return (fc1_w.reshape(Dout, c, h, w)
            .transpose(2, 3, 1, 0)
            .reshape(h * w * c, Dout)
            .astype(jnp.float32))


# ----------------------------------------------------------------------------
# pallas_call wrappers
# ----------------------------------------------------------------------------
def conv1_both(x_nhwc, w_a, b_a, w_b, b_b):
    """conv1 of both branches in one call (weights concatenated along Cout)."""
    p, Hp, Wp = _pool_patches(x_nhwc)                              # (N, 4, M, 9)
    N, _, M, K = p.shape
    w2d = jnp.concatenate([_conv_w2d(w_a), _conv_w2d(w_b)], axis=1)          # (9, 64)
    b2d = jnp.concatenate([b_a, b_b]).reshape(1, -1).astype(jnp.float32)      # (1, 64)
    Cout = w2d.shape[1]
    out = pl.pallas_call(
        _conv_pool_kernel,
        out_shape=jax.ShapeDtypeStruct((N, M, Cout), jnp.float32),
        grid_spec=pltpu.PrefetchScalarGridSpec(
            num_scalar_prefetch=0,
            grid=(N,),
            in_specs=[
                pl.BlockSpec((None, 4, M, K), lambda n: (n, 0, 0, 0)),
                pl.BlockSpec((K, Cout), lambda n: (0, 0)),
                pl.BlockSpec((1, Cout), lambda n: (0, 0)),
            ],
            out_specs=pl.BlockSpec((None, M, Cout), lambda n: (n, 0, 0)),
        ),
        compiler_params=pltpu.CompilerParams(dimension_semantics=("parallel",)),
    )(p, w2d, b2d)
    return out.reshape(N, Hp, Wp, Cout)


def conv2_branches(h_first, h_second, w_list, b_list):
    """conv2 for both branches, grid over (branch, batch)."""
    p_first, Hp, Wp = _pool_patches(h_first)
    p_second, _, _ = _pool_patches(h_second)
    p = jnp.stack([p_first, p_second], axis=0)                     # (2, N, 4, M, K)
    B, N, _, M, K = p.shape
    w2d = jnp.stack([_conv_w2d(w) for w in w_list], axis=0)                       # (2, K, 64)
    b2d = jnp.stack([b.reshape(1, -1).astype(jnp.float32) for b in b_list], 0)     # (2, 1, 64)
    Cout = w2d.shape[-1]
    out = pl.pallas_call(
        _conv_pool_kernel,
        out_shape=jax.ShapeDtypeStruct((B, N, M, Cout), jnp.float32),
        grid_spec=pltpu.PrefetchScalarGridSpec(
            num_scalar_prefetch=0,
            grid=(B, N),
            in_specs=[
                pl.BlockSpec((None, None, 4, M, K), lambda b, n: (b, n, 0, 0, 0)),
                pl.BlockSpec((None, K, Cout), lambda b, n: (b, 0, 0)),
                pl.BlockSpec((None, 1, Cout), lambda b, n: (b, 0, 0)),
            ],
            out_specs=pl.BlockSpec((None, None, M, Cout), lambda b, n: (b, n, 0, 0)),
        ),
        compiler_params=pltpu.CompilerParams(
            dimension_semantics=("parallel", "parallel")),
    )(p, w2d, b2d)
    return out, Hp, Wp


def mlp_both(flat_both, params_first, params_second, c, h, w):
    """fc1 + (eval) dropout + fc2 for both branches in one call, grid over branch."""
    B, N, Din = flat_both.shape
    w1 = jnp.stack([_fc1_weight_hwc_order(params_first["fc1_w"], c, h, w),
                    _fc1_weight_hwc_order(params_second["fc1_w"], c, h, w)], axis=0)
    b1 = jnp.stack([params_first["fc1_b"].reshape(1, -1),
                    params_second["fc1_b"].reshape(1, -1)], axis=0).astype(jnp.float32)
    w2 = jnp.stack([params_first["fc2_w"].T,
                    params_second["fc2_w"].T], axis=0).astype(jnp.float32)
    b2 = jnp.stack([params_first["fc2_b"].reshape(1, -1),
                    params_second["fc2_b"].reshape(1, -1)], axis=0).astype(jnp.float32)
    Dh, Dout = w1.shape[-1], w2.shape[-1]
    return pl.pallas_call(
        _mlp_kernel,
        out_shape=jax.ShapeDtypeStruct((B, N, Dout), jnp.float32),
        grid_spec=pltpu.PrefetchScalarGridSpec(
            num_scalar_prefetch=0,
            grid=(B,),
            in_specs=[
                pl.BlockSpec((None, N, Din), lambda b: (b, 0, 0)),
                pl.BlockSpec((None, Din, Dh), lambda b: (b, 0, 0)),
                pl.BlockSpec((None, 1, Dh), lambda b: (b, 0, 0)),
                pl.BlockSpec((None, Dh, Dout), lambda b: (b, 0, 0)),
                pl.BlockSpec((None, 1, Dout), lambda b: (b, 0, 0)),
            ],
            out_specs=pl.BlockSpec((None, N, Dout), lambda b: (b, 0, 0)),
        ),
        compiler_params=pltpu.CompilerParams(dimension_semantics=("parallel",)),
    )(flat_both.astype(jnp.float32), w1, b1, w2, b2)


# ----------------------------------------------------------------------------
# Full two-branch CNN forward
# ----------------------------------------------------------------------------
def cnn_forward(x_nchw, params_first, params_second):
    x_nhwc = jnp.transpose(x_nchw, (0, 2, 3, 1)).astype(jnp.float32)   # (N, 28, 42, 1)

    # conv1 + LeakyReLU + pool of BOTH branches (channels 0:32 first, 32:64 second).
    h1 = conv1_both(x_nhwc,
                    params_first["conv1_w"], params_first["conv1_b"],
                    params_second["conv1_w"], params_second["conv1_b"])  # (N, 13, 20, 64)
    c1 = params_first["conv1_w"].shape[0]
    h_first, h_second = h1[..., :c1], h1[..., c1:]

    # conv2 + LeakyReLU + pool, grid over (branch, batch).
    h2, Hp2, Wp2 = conv2_branches(
        h_first, h_second,
        [params_first["conv2_w"], params_second["conv2_w"]],
        [params_first["conv2_b"], params_second["conv2_b"]])             # (2, N, 45, 64)
    B, N, M2, C2 = h2.shape

    # NHWC flatten (free reshape); the (C,H,W) torch flatten order is absorbed
    # into the fc1 weight permutation inside mlp_both.
    flat = h2.reshape(B, N, M2 * C2)                                     # (2, N, 2880)

    out = mlp_both(flat, params_first, params_second, C2, Hp2, Wp2)      # (2, N, 10)
    return out[0], out[1]


# ----------------------------------------------------------------------------
# Params + reference + driver
# ----------------------------------------------------------------------------
def init_branch_params(key):
    ks = jax.random.split(key, 8)

    def rnd(k, shape, scale=0.1):
        return (scale * jax.random.normal(k, shape)).astype(jnp.float32)

    return {
        "conv1_w": rnd(ks[0], (32, 1, 3, 3)),
        "conv1_b": rnd(ks[1], (32,)),
        "conv2_w": rnd(ks[2], (64, 32, 3, 3)),
        "conv2_b": rnd(ks[3], (64,)),
        "fc1_w": rnd(ks[4], (128, 2880), 0.02),
        "fc1_b": rnd(ks[5], (128,)),
        "fc2_w": rnd(ks[6], (NUM_CLASSES, 128), 0.05),
        "fc2_b": rnd(ks[7], (NUM_CLASSES,)),
    }


def _reference_branch(x_nchw, p):
    """Plain-XLA reference matching the PyTorch forward (eval mode)."""
    y = jax.lax.conv_general_dilated(x_nchw, p["conv1_w"], (1, 1), "VALID",
                                     dimension_numbers=("NCHW", "OIHW", "NCHW"))
    y = y + p["conv1_b"][None, :, None, None]
    y = jnp.where(y >= 0, y, LEAKY_SLOPE * y)
    y = jax.lax.reduce_window(y, -jnp.inf, jax.lax.max, (1, 1, 2, 2), (1, 1, 2, 2), "VALID")
    y = jax.lax.conv_general_dilated(y, p["conv2_w"], (1, 1), "VALID",
                                     dimension_numbers=("NCHW", "OIHW", "NCHW"))
    y = y + p["conv2_b"][None, :, None, None]
    y = jnp.where(y >= 0, y, LEAKY_SLOPE * y)
    y = jax.lax.reduce_window(y, -jnp.inf, jax.lax.max, (1, 1, 2, 2), (1, 1, 2, 2), "VALID")
    flat = y.reshape(y.shape[0], -1)
    h = flat @ p["fc1_w"].T + p["fc1_b"]
    return h @ p["fc2_w"].T + p["fc2_b"]


if __name__ == "__main__":
    key = jax.random.PRNGKey(0)
    kx, k1, k2 = jax.random.split(key, 3)
    # NCHW input, batch=2, 1 channel, 28x42 image (so the flatten is 2880).
    x = jax.random.normal(kx, (2, 1, 28, 42), dtype=jnp.float32)
    params_first = init_branch_params(k1)
    params_second = init_branch_params(k2)

    out_first, out_second = jax.jit(cnn_forward)(x, params_first, params_second)
    out_first = jax.block_until_ready(out_first)
    out_second = jax.block_until_ready(out_second)

    assert out_first.shape == (2, NUM_CLASSES), out_first.shape
    assert out_second.shape == (2, NUM_CLASSES), out_second.shape
    assert out_first.dtype == jnp.float32 and out_second.dtype == jnp.float32
    assert bool(jnp.all(jnp.isfinite(out_first))) and bool(jnp.all(jnp.isfinite(out_second)))

    # Numerical check against a plain-XLA reference (loose tol for MXU fp32 passes).
    ref_first = _reference_branch(x, params_first)
    ref_second = _reference_branch(x, params_second)
    assert bool(jnp.allclose(out_first, ref_first, rtol=2e-2, atol=2e-2)), (
        float(jnp.max(jnp.abs(out_first - ref_first))))
    assert bool(jnp.allclose(out_second, ref_second, rtol=2e-2, atol=2e-2)), (
        float(jnp.max(jnp.abs(out_second - ref_second))))

    print("KERNEL_OK")
</pallas_src>

<mosaic_0001>
module attributes {stable_mosaic.version = 11 : i64} {
  func.func @_conv_pool_kernel(%arg0: i32, %arg1: memref<1x4x260x9xf32, #tpu.memory_space<vmem>>, %arg2: memref<9x64xf32, #tpu.memory_space<vmem>>, %arg3: memref<1x64xf32, #tpu.memory_space<vmem>>, %arg4: memref<1x260x64xf32, #tpu.memory_space<vmem>>) attributes {dimension_semantics = [#tpu.dimension_semantics<parallel>], iteration_bounds = array<i64: 2>, scalar_prefetch = 0 : i64, scratch_operands = 0 : i64, tpu.core_type = #tpu.core_type<tc>, window_params = [{transform_indices = @transform_0, window_bounds = array<i64: 1, 4, 260, 9>}, {pipeline_mode = #tpu.pipeline_mode<synchronous>, transform_indices = @transform_1, window_bounds = array<i64: 9, 64>}, {pipeline_mode = #tpu.pipeline_mode<synchronous>, transform_indices = @transform_2, window_bounds = array<i64: 1, 64>}, {transform_indices = @transform_3, window_bounds = array<i64: 1, 260, 64>}]} {
    %c0 = arith.constant 0 : index
    %c0_0 = arith.constant 0 : index
    %0 = vector.load %arg2[%c0, %c0_0] : memref<9x64xf32, #tpu.memory_space<vmem>>, vector<9x64xf32>
    %c0_1 = arith.constant 0 : index
    %c0_2 = arith.constant 0 : index
    %c0_3 = arith.constant 0 : index
    %c0_4 = arith.constant 0 : index
    %1 = vector.load %arg1[%c0_1, %c0_2, %c0_3, %c0_4] : memref<1x4x260x9xf32, #tpu.memory_space<vmem>>, vector<1x1x260x9xf32>
    %2 = vector.shape_cast %1 : vector<1x1x260x9xf32> to vector<260x9xf32>
    %cst = arith.constant dense<0.000000e+00> : vector<260x64xf32>
    %3 = tpu.matmul %2, %0, %cst {dimension_numbers = #tpu.dot_dimension_numbers<[1], [0], [0], [1], [0, 0, 1, 1], [], []>} : vector<260x9xf32>, vector<9x64xf32>, vector<260x64xf32> -> vector<260x64xf32>
    %c0_5 = arith.constant 0 : index
    %c1 = arith.constant 1 : index
    %c0_6 = arith.constant 0 : index
    %c0_7 = arith.constant 0 : index
    %4 = vector.load %arg1[%c0_5, %c1, %c0_6, %c0_7] : memref<1x4x260x9xf32, #tpu.memory_space<vmem>>, vector<1x1x260x9xf32>
    %5 = vector.shape_cast %4 : vector<1x1x260x9xf32> to vector<260x9xf32>
    %cst_8 = arith.constant dense<0.000000e+00> : vector<260x64xf32>
    %6 = tpu.matmul %5, %0, %cst_8 {dimension_numbers = #tpu.dot_dimension_numbers<[1], [0], [0], [1], [0, 0, 1, 1], [], []>} : vector<260x9xf32>, vector<9x64xf32>, vector<260x64xf32> -> vector<260x64xf32>
    %7 = arith.maximumf %3, %6 : vector<260x64xf32>
    %c0_9 = arith.constant 0 : index
    %c2 = arith.constant 2 : index
    %c0_10 = arith.constant 0 : index
    %c0_11 = arith.constant 0 : index
    %8 = vector.load %arg1[%c0_9, %c2, %c0_10, %c0_11] : memref<1x4x260x9xf32, #tpu.memory_space<vmem>>, vector<1x1x260x9xf32>
    %9 = vector.shape_cast %8 : vector<1x1x260x9xf32> to vector<260x9xf32>
    %cst_12 = arith.constant dense<0.000000e+00> : vector<260x64xf32>
    %10 = tpu.matmul %9, %0, %cst_12 {dimension_numbers = #tpu.dot_dimension_numbers<[1], [0], [0], [1], [0, 0, 1, 1], [], []>} : vector<260x9xf32>, vector<9x64xf32>, vector<260x64xf32> -> vector<260x64xf32>
    %11 = arith.maximumf %7, %10 : vector<260x64xf32>
    %c0_13 = arith.constant 0 : index
    %c3 = arith.constant 3 : index
    %c0_14 = arith.constant 0 : index
    %c0_15 = arith.constant 0 : index
    %12 = vector.load %arg1[%c0_13, %c3, %c0_14, %c0_15] : memref<1x4x260x9xf32, #tpu.memory_space<vmem>>, vector<1x1x260x9xf32>
    %13 = vector.shape_cast %12 : vector<1x1x260x9xf32> to vector<260x9xf32>
    %cst_16 = arith.constant dense<0.000000e+00> : vector<260x64xf32>
    %14 = tpu.matmul %13, %0, %cst_16 {dimension_numbers = #tpu.dot_dimension_numbers<[1], [0], [0], [1], [0, 0, 1, 1], [], []>} : vector<260x9xf32>, vector<9x64xf32>, vector<260x64xf32> -> vector<260x64xf32>
    %15 = arith.maximumf %11, %14 : vector<260x64xf32>
    %c0_17 = arith.constant 0 : index
    %c0_18 = arith.constant 0 : index
    %16 = vector.load %arg3[%c0_17, %c0_18] : memref<1x64xf32, #tpu.memory_space<vmem>>, vector<1x64xf32>
    %17 = vector.broadcast %16 : vector<1x64xf32> to vector<260x64xf32>
    %18 = arith.addf %15, %17 : vector<260x64xf32>
    %cst_19 = arith.constant 0.000000e+00 : f32
    %19 = vector.broadcast %cst_19 : f32 to vector<260x64xf32>
    %20 = arith.cmpf oge, %18, %19 : vector<260x64xf32>
    %cst_20 = arith.constant 0.00999999977 : f32
    %21 = vector.broadcast %cst_20 : f32 to vector<260x64xf32>
    %22 = arith.mulf %21, %18 : vector<260x64xf32>
    %23 = arith.select %20, %18, %22 : vector<260x64xi1>, vector<260x64xf32>
    %c0_21 = arith.constant 0 : index
    %c0_22 = arith.constant 0 : index
    %c0_23 = arith.constant 0 : index
    %24 = vector.load %arg4[%c0_21, %c0_22, %c0_23] : memref<1x260x64xf32, #tpu.memory_space<vmem>>, vector<1x260x64xf32>
    %25 = vector.shape_cast %24 : vector<1x260x64xf32> to vector<260x64xf32>
    %26 = vector.shape_cast %23 : vector<260x64xf32> to vector<1x260x64xf32>
    tpu.vector_store %arg4[%c0_21, %c0_22, %c0_23], %26 {strides = array<i32>} : memref<1x260x64xf32, #tpu.memory_space<vmem>>, vector<1x260x64xf32>,
    return
  }
  func.func @transform_0(%arg0: i32) -> (i32, i32, i32, i32) {
    %c0_i32 = arith.constant 0 : i32
    %c0_i32_0 = arith.constant 0 : i32
    %c0_i32_1 = arith.constant 0 : i32
    %c0_i32_2 = arith.constant 0 : i32
    return %arg0, %c0_i32, %c0_i32_0, %c0_i32_1 : i32, i32, i32, i32
  }
  func.func @transform_1(%arg0: i32) -> (i32, i32) {
    %c0_i32 = arith.constant 0 : i32
    %c0_i32_0 = arith.constant 0 : i32
    %c0_i32_1 = arith.constant 0 : i32
    return %c0_i32, %c0_i32_0 : i32, i32
  }
  func.func @transform_2(%arg0: i32) -> (i32, i32) {
    %c0_i32 = arith.constant 0 : i32
    %c0_i32_0 = arith.constant 0 : i32
    %c0_i32_1 = arith.constant 0 : i32
    return %c0_i32, %c0_i32_0 : i32, i32
  }
  func.func @transform_3(%arg0: i32) -> (i32, i32, i32) {
    %c0_i32 = arith.constant 0 : i32
    %c0_i32_0 = arith.constant 0 : i32
    %c0_i32_1 = arith.constant 0 : i32
    return %arg0, %c0_i32, %c0_i32_0 : i32, i32, i32
  }
}

module attributes {stable_mosaic.version = 11 : i64} {
  func.func @_conv_pool_kernel(%arg0: i32, %arg1: i32, %arg2: memref<1x1x4x45x288xf32, #tpu.memory_space<vmem>>, %arg3: memref<1x288x64xf32, #tpu.memory_space<vmem>>, %arg4: memref<1x1x64xf32, #tpu.memory_space<vmem>>, %arg5: memref<1x1x45x64xf32, #tpu.memory_space<vmem>>) attributes {dimension_semantics = [#tpu.dimension_semantics<parallel>, #tpu.dimension_semantics<parallel>], iteration_bounds = array<i64: 2, 2>, scalar_prefetch = 0 : i64, scratch_operands = 0 : i64, tpu.core_type = #tpu.core_type<tc>, window_params = [{transform_indices = @transform_0, window_bounds = array<i64: 1, 1, 4, 45, 288>}, {transform_indices = @transform_1, window_bounds = array<i64: 1, 288, 64>}, {transform_indices = @transform_2, window_bounds = array<i64: 1, 1, 64>}, {transform_indices = @transform_3, window_bounds = array<i64: 1, 1, 45, 64>}]} {
    %c0 = arith.constant 0 : index
    %c0_0 = arith.constant 0 : index
    %c0_1 = arith.constant 0 : index
    %0 = vector.load %arg3[%c0, %c0_0, %c0_1] : memref<1x288x64xf32, #tpu.memory_space<vmem>>, vector<1x288x64xf32>
    %1 = vector.shape_cast %0 : vector<1x288x64xf32> to vector<288x64xf32>
    %c0_2 = arith.constant 0 : index
    %c0_3 = arith.constant 0 : index
    %c0_4 = arith.constant 0 : index
    %c0_5 = arith.constant 0 : index
    %c0_6 = arith.constant 0 : index
    %2 = vector.load %arg2[%c0_2, %c0_3, %c0_4, %c0_5, %c0_6] : memref<1x1x4x45x288xf32, #tpu.memory_space<vmem>>, vector<1x1x1x45x288xf32>
    %3 = vector.shape_cast %2 : vector<1x1x1x45x288xf32> to vector<45x288xf32>
    %cst = arith.constant dense<0.000000e+00> : vector<45x64xf32>
    %4 = tpu.matmul %3, %1, %cst {dimension_numbers = #tpu.dot_dimension_numbers<[1], [0], [0], [1], [0, 0, 1, 1], [], []>} : vector<45x288xf32>, vector<288x64xf32>, vector<45x64xf32> -> vector<45x64xf32>
    %c0_7 = arith.constant 0 : index
    %c0_8 = arith.constant 0 : index
    %c1 = arith.constant 1 : index
    %c0_9 = arith.constant 0 : index
    %c0_10 = arith.constant 0 : index
    %5 = vector.load %arg2[%c0_7, %c0_8, %c1, %c0_9, %c0_10] : memref<1x1x4x45x288xf32, #tpu.memory_space<vmem>>, vector<1x1x1x45x288xf32>
    %6 = vector.shape_cast %5 : vector<1x1x1x45x288xf32> to vector<45x288xf32>
    %cst_11 = arith.constant dense<0.000000e+00> : vector<45x64xf32>
    %7 = tpu.matmul %6, %1, %cst_11 {dimension_numbers = #tpu.dot_dimension_numbers<[1], [0], [0], [1], [0, 0, 1, 1], [], []>} : vector<45x288xf32>, vector<288x64xf32>, vector<45x64xf32> -> vector<45x64xf32>
    %8 = arith.maximumf %4, %7 : vector<45x64xf32>
    %c0_12 = arith.constant 0 : index
    %c0_13 = arith.constant 0 : index
    %c2 = arith.constant 2 : index
    %c0_14 = arith.constant 0 : index
    %c0_15 = arith.constant 0 : index
    %9 = vector.load %arg2[%c0_12, %c0_13, %c2, %c0_14, %c0_15] : memref<1x1x4x45x288xf32, #tpu.memory_space<vmem>>, vector<1x1x1x45x288xf32>
    %10 = vector.shape_cast %9 : vector<1x1x1x45x288xf32> to vector<45x288xf32>
    %cst_16 = arith.constant dense<0.000000e+00> : vector<45x64xf32>
    %11 = tpu.matmul %10, %1, %cst_16 {dimension_numbers = #tpu.dot_dimension_numbers<[1], [0], [0], [1], [0, 0, 1, 1], [], []>} : vector<45x288xf32>, vector<288x64xf32>, vector<45x64xf32> -> vector<45x64xf32>
    %12 = arith.maximumf %8, %11 : vector<45x64xf32>
    %c0_17 = arith.constant 0 : index
    %c0_18 = arith.constant 0 : index
    %c3 = arith.constant 3 : index
    %c0_19 = arith.constant 0 : index
    %c0_20 = arith.constant 0 : index
    %13 = vector.load %arg2[%c0_17, %c0_18, %c3, %c0_19, %c0_20] : memref<1x1x4x45x288xf32, #tpu.memory_space<vmem>>, vector<1x1x1x45x288xf32>
    %14 = vector.shape_cast %13 : vector<1x1x1x45x288xf32> to vector<45x288xf32>
    %cst_21 = arith.constant dense<0.000000e+00> : vector<45x64xf32>
    %15 = tpu.matmul %14, %1, %cst_21 {dimension_numbers = #tpu.dot_dimension_numbers<[1], [0], [0], [1], [0, 0, 1, 1], [], []>} : vector<45x288xf32>, vector<288x64xf32>, vector<45x64xf32> -> vector<45x64xf32>
    %16 = arith.maximumf %12, %15 : vector<45x64xf32>
    %c0_22 = arith.constant 0 : index
    %c0_23 = arith.constant 0 : index
    %c0_24 = arith.constant 0 : index
    %17 = vector.load %arg4[%c0_22, %c0_23, %c0_24] : memref<1x1x64xf32, #tpu.memory_space<vmem>>, vector<1x1x64xf32>
    %18 = vector.shape_cast %17 : vector<1x1x64xf32> to vector<1x64xf32>
    %19 = vector.broadcast %18 : vector<1x64xf32> to vector<45x64xf32>
    %20 = arith.addf %16, %19 : vector<45x64xf32>
    %cst_25 = arith.constant 0.000000e+00 : f32
    %21 = vector.broadcast %cst_25 : f32 to vector<45x64xf32>
    %22 = arith.cmpf oge, %20, %21 : vector<45x64xf32>
    %cst_26 = arith.constant 0.00999999977 : f32
    %23 = vector.broadcast %cst_26 : f32 to vector<45x64xf32>
    %24 = arith.mulf %23, %20 : vector<45x64xf32>
    %25 = arith.select %22, %20, %24 : vector<45x64xi1>, vector<45x64xf32>
    %c0_27 = arith.constant 0 : index
    %c0_28 = arith.constant 0 : index
    %c0_29 = arith.constant 0 : index
    %c0_30 = arith.constant 0 : index
    %26 = vector.load %arg5[%c0_27, %c0_28, %c0_29, %c0_30] : memref<1x1x45x64xf32, #tpu.memory_space<vmem>>, vector<1x1x45x64xf32>
    %27 = vector.shape_cast %26 : vector<1x1x45x64xf32> to vector<45x64xf32>
    %28 = vector.shape_cast %25 : vector<45x64xf32> to vector<1x1x45x64xf32>
    tpu.vector_store %arg5[%c0_27, %c0_28, %c0_29, %c0_30], %28 {strides = array<i32>} : memref<1x1x45x64xf32, #tpu.memory_space<vmem>>, vector<1x1x45x64xf32>,
    return
  }
  func.func @transform_0(%arg0: i32, %arg1: i32) -> (i32, i32, i32, i32, i32) {
    %c0_i32 = arith.constant 0 : i32
    %c0_i32_0 = arith.constant 0 : i32
    %c0_i32_1 = arith.constant 0 : i32
    %c0_i32_2 = arith.constant 0 : i32
    return %arg0, %arg1, %c0_i32, %c0_i32_0, %c0_i32_1 : i32, i32, i32, i32, i32
  }
  func.func @transform_1(%arg0: i32, %arg1: i32) -> (i32, i32, i32) {
    %c0_i32 = arith.constant 0 : i32
    %c0_i32_0 = arith.constant 0 : i32
    %c0_i32_1 = arith.constant 0 : i32
    return %arg0, %c0_i32, %c0_i32_0 : i32, i32, i32
  }
  func.func @transform_2(%arg0: i32, %arg1: i32) -> (i32, i32, i32) {
    %c0_i32 = arith.constant 0 : i32
    %c0_i32_0 = arith.constant 0 : i32
    %c0_i32_1 = arith.constant 0 : i32
    return %arg0, %c0_i32, %c0_i32_0 : i32, i32, i32
  }
  func.func @transform_3(%arg0: i32, %arg1: i32) -> (i32, i32, i32, i32) {
    %c0_i32 = arith.constant 0 : i32
    %c0_i32_0 = arith.constant 0 : i32
    %c0_i32_1 = arith.constant 0 : i32
    return %arg0, %arg1, %c0_i32, %c0_i32_0 : i32, i32, i32, i32
  }
}

module attributes {stable_mosaic.version = 11 : i64} {
  func.func @_mlp_kernel(%arg0: i32, %arg1: memref<1x2x2880xf32, #tpu.memory_space<vmem>>, %arg2: memref<1x2880x128xf32, #tpu.memory_space<vmem>>, %arg3: memref<1x1x128xf32, #tpu.memory_space<vmem>>, %arg4: memref<1x128x10xf32, #tpu.memory_space<vmem>>, %arg5: memref<1x1x10xf32, #tpu.memory_space<vmem>>, %arg6: memref<1x2x10xf32, #tpu.memory_space<vmem>>) attributes {dimension_semantics = [#tpu.dimension_semantics<parallel>], iteration_bounds = array<i64: 2>, scalar_prefetch = 0 : i64, scratch_operands = 0 : i64, tpu.core_type = #tpu.core_type<tc>, window_params = [{transform_indices = @transform_0, window_bounds = array<i64: 1, 2, 2880>}, {transform_indices = @transform_1, window_bounds = array<i64: 1, 2880, 128>}, {transform_indices = @transform_2, window_bounds = array<i64: 1, 1, 128>}, {transform_indices = @transform_3, window_bounds = array<i64: 1, 128, 10>}, {transform_indices = @transform_4, window_bounds = array<i64: 1, 1, 10>}, {transform_indices = @transform_5, window_bounds = array<i64: 1, 2, 10>}]} {
    %c0 = arith.constant 0 : index
    %c0_0 = arith.constant 0 : index
    %c0_1 = arith.constant 0 : index
    %0 = vector.load %arg1[%c0, %c0_0, %c0_1] : memref<1x2x2880xf32, #tpu.memory_space<vmem>>, vector<1x2x2880xf32>
    %1 = vector.shape_cast %0 : vector<1x2x2880xf32> to vector<2x2880xf32>
    %c0_2 = arith.constant 0 : index
    %c0_3 = arith.constant 0 : index
    %c0_4 = arith.constant 0 : index
    %2 = vector.load %arg2[%c0_2, %c0_3, %c0_4] : memref<1x2880x128xf32, #tpu.memory_space<vmem>>, vector<1x2880x128xf32>
    %3 = vector.shape_cast %2 : vector<1x2880x128xf32> to vector<2880x128xf32>
    %cst = arith.constant dense<0.000000e+00> : vector<2x128xf32>
    %4 = tpu.matmul %1, %3, %cst {dimension_numbers = #tpu.dot_dimension_numbers<[1], [0], [0], [1], [0, 0, 1, 1], [], []>} : vector<2x2880xf32>, vector<2880x128xf32>, vector<2x128xf32> -> vector<2x128xf32>
    %c0_5 = arith.constant 0 : index
    %c0_6 = arith.constant 0 : index
    %c0_7 = arith.constant 0 : index
    %5 = vector.load %arg3[%c0_5, %c0_6, %c0_7] : memref<1x1x128xf32, #tpu.memory_space<vmem>>, vector<1x1x128xf32>
    %6 = vector.shape_cast %5 : vector<1x1x128xf32> to vector<1x128xf32>
    %7 = vector.broadcast %6 : vector<1x128xf32> to vector<2x128xf32>
    %8 = arith.addf %4, %7 : vector<2x128xf32>
    %c0_8 = arith.constant 0 : index
    %c0_9 = arith.constant 0 : index
    %c0_10 = arith.constant 0 : index
    %9 = vector.load %arg4[%c0_8, %c0_9, %c0_10] : memref<1x128x10xf32, #tpu.memory_space<vmem>>, vector<1x128x10xf32>
    %10 = vector.shape_cast %9 : vector<1x128x10xf32> to vector<128x10xf32>
    %cst_11 = arith.constant dense<0.000000e+00> : vector<2x10xf32>
    %11 = tpu.matmul %8, %10, %cst_11 {dimension_numbers = #tpu.dot_dimension_numbers<[1], [0], [0], [1], [0, 0, 1, 1], [], []>} : vector<2x128xf32>, vector<128x10xf32>, vector<2x10xf32> -> vector<2x10xf32>
    %c0_12 = arith.constant 0 : index
    %c0_13 = arith.constant 0 : index
    %c0_14 = arith.constant 0 : index
    %12 = vector.load %arg5[%c0_12, %c0_13, %c0_14] : memref<1x1x10xf32, #tpu.memory_space<vmem>>, vector<1x1x10xf32>
    %13 = vector.shape_cast %12 : vector<1x1x10xf32> to vector<1x10xf32>
    %14 = vector.broadcast %13 : vector<1x10xf32> to vector<2x10xf32>
    %15 = arith.addf %11, %14 : vector<2x10xf32>
    %c0_15 = arith.constant 0 : index
    %c0_16 = arith.constant 0 : index
    %c0_17 = arith.constant 0 : index
    %16 = vector.load %arg6[%c0_15, %c0_16, %c0_17] : memref<1x2x10xf32, #tpu.memory_space<vmem>>, vector<1x2x10xf32>
    %17 = vector.shape_cast %16 : vector<1x2x10xf32> to vector<2x10xf32>
    %18 = vector.shape_cast %15 : vector<2x10xf32> to vector<1x2x10xf32>
    tpu.vector_store %arg6[%c0_15, %c0_16, %c0_17], %18 {strides = array<i32>} : memref<1x2x10xf32, #tpu.memory_space<vmem>>, vector<1x2x10xf32>,
    return
  }
  func.func @transform_0(%arg0: i32) -> (i32, i32, i32) {
    %c0_i32 = arith.constant 0 : i32
    %c0_i32_0 = arith.constant 0 : i32
    %c0_i32_1 = arith.constant 0 : i32
    return %arg0, %c0_i32, %c0_i32_0 : i32, i32, i32
  }
  func.func @transform_1(%arg0: i32) -> (i32, i32, i32) {
    %c0_i32 = arith.constant 0 : i32
    %c0_i32_0 = arith.constant 0 : i32
    %c0_i32_1 = arith.constant 0 : i32
    return %arg0, %c0_i32, %c0_i32_0 : i32, i32, i32
  }
  func.func @transform_2(%arg0: i32) -> (i32, i32, i32) {
    %c0_i32 = arith.constant 0 : i32
    %c0_i32_0 = arith.constant 0 : i32
    %c0_i32_1 = arith.constant 0 : i32
    return %arg0, %c0_i32, %c0_i32_0 : i32, i32, i32
  }
  func.func @transform_3(%arg0: i32) -> (i32, i32, i32) {
    %c0_i32 = arith.constant 0 : i32
    %c0_i32_0 = arith.constant 0 : i32
    %c0_i32_1 = arith.constant 0 : i32
    return %arg0, %c0_i32, %c0_i32_0 : i32, i32, i32
  }
  func.func @transform_4(%arg0: i32) -> (i32, i32, i32) {
    %c0_i32 = arith.constant 0 : i32
    %c0_i32_0 = arith.constant 0 : i32
    %c0_i32_1 = arith.constant 0 : i32
    return %arg0, %c0_i32, %c0_i32_0 : i32, i32, i32
  }
  func.func @transform_5(%arg0: i32) -> (i32, i32, i32) {
    %c0_i32 = arith.constant 0 : i32
    %c0_i32_0 = arith.constant 0 : i32
    %c0_i32_1 = arith.constant 0 : i32
    return %arg0, %c0_i32, %c0_i32_0 : i32, i32, i32
  }
}

</mosaic_0001>

<llo_original>
// kernel: cnn_forward.3
$region0: #{cnn_forward.3}
  #allocation0 [shape = 'u32[]', space=smem, size = 0x4, offset = 0x4, fixed_abs, tag = 'smem constant byte address 0x4 - core index']
  #allocation1 [shape = 'u32[144,128]{1,0:T(1,128)}', space=vmem, size = 0x12000, scoped, tag = 'internal scratch']
  %s0 = inlined_call_operand.vmem [shape: f32[2,4,260,9], index: 0, kind: input, shape index: {}]
  %s1 = inlined_call_operand.vmem [shape: f32[9,64], index: 1, kind: input, shape index: {}]
  %s2 = inlined_call_operand.vmem [shape: f32[1,64], index: 2, kind: input, shape index: {}]
  %s3 = inlined_call_operand.vmem [shape: f32[2,260,64], index: 3, kind: output, shape index: {}]
  %s4 = sld [smem:[#allocation0]]
  $region45: #{cnn_forward.3} parent=0
    _
  %s6 = ssub.s32 1, %s4
  %s7 = scalar_select 0, %s6, %s4
  loop: start=0, step=1, limit=4
  $region2: #{cnn_forward.3} parent=0 // loop_pre_header
    _
  $region3: #{cnn_forward.3} parent=0 // loop_header
    %s9 = sphi 0, %s13
    %p10 = scmp.ge.s32.totalorder %s9, 4
    %s19 = sphi 0, %s21
    %s22 = sphi 0, %s19
    %s23 = sphi 0, %s22
    %s39 = sphi 0, %s23
    %s43 = sphi 0, %s43
    %s45 = sphi 0, %s43
    %s46 = sphi 0, %s45
    %s60 = sphi 0, %s46
    %s64 = sphi 0, %s64
    %s66 = sphi 0, %s64
    %s67 = sphi 0, %s66
    %s81 = sphi 0, %s67
    %s87 = sphi 0, %s89
    %s90 = sphi 0, %s87
    %s91 = sphi 0, %s90
    %s107 = sphi 0, %s91
  $region4: #{cnn_forward.3} parent=0 // loop_header_branch
    %12 = sbr.rel (%p10) target = $region8
  $region5: #{cnn_forward.3} parent=0 // loop_body
    %s14 = ssub.s32 %s9, 1
    %s15 = ssub.s32 %s9, 2
    %s16 = sadd.s32 %s9, 1
    %s17 = ssub.s32 %s9, %s16
    %p18 = scmp.eq.s32.totalorder %s17, 0
    %s20 = sadd.s32 %s19, 1
    %s21 = scalar_select %p18, %s19, %s20
    %p24 = pneg %p18
    %p25 = scmp.eq.s32.totalorder %s9, 1
    %p26 = por %p24, %p25
    %p27 = scmp.ne.s32.totalorder %s19, %s22
    %p28 = scmp.eq.s32.totalorder %s9, 0
    %p29 = por %p27, %p28
    %p30 = scmp.ne.s32.totalorder %s19, %s22
    %p31 = scmp.eq.s32.totalorder %s14, 1
    %p32 = por %p30, %p31
    %p33 = scmp.ne.s32.totalorder %s22, %s23
    %p34 = scmp.eq.s32.totalorder %s14, 0
    %p35 = por %p33, %p34
    %p36 = scmp.ne.s32.totalorder %s22, %s23
    %p37 = scmp.eq.s32.totalorder %s15, 1
    %p38 = por %p36, %p37
    %p40 = scmp.ne.s32.totalorder %s23, %s39
    %p41 = scmp.eq.s32.totalorder %s15, 0
    %p42 = por %p40, %p41
    %s44 = sadd.s32 %s43, 1
    %p47 = scmp.eq.s32.totalorder %s9, 1
    %p48 = scmp.ne.s32.totalorder %s43, %s45
    %p49 = scmp.eq.s32.totalorder %s9, 0
    %p50 = por %p48, %p49
    %p51 = scmp.ne.s32.totalorder %s43, %s45
    %p52 = scmp.eq.s32.totalorder %s14, 1
    %p53 = por %p51, %p52
    %p54 = scmp.ne.s32.totalorder %s45, %s46
    %p55 = scmp.eq.s32.totalorder %s14, 0
    %p56 = por %p54, %p55
    %p57 = scmp.ne.s32.totalorder %s45, %s46
    %p58 = scmp.eq.s32.totalorder %s15, 1
    %p59 = por %p57, %p58
    %p61 = scmp.ne.s32.totalorder %s46, %s60
    %p62 = scmp.eq.s32.totalorder %s15, 0
    %p63 = por %p61, %p62
    %s65 = sadd.s32 %s64, 1
    %p68 = scmp.eq.s32.totalorder %s9, 1
    %p69 = scmp.ne.s32.totalorder %s64, %s66
    %p70 = scmp.eq.s32.totalorder %s9, 0
    %p71 = por %p69, %p70
    %p72 = scmp.ne.s32.totalorder %s64, %s66
    %p73 = scmp.eq.s32.totalorder %s14, 1
    %p74 = por %p72, %p73
    %p75 = scmp.ne.s32.totalorder %s66, %s67
    %p76 = scmp.eq.s32.totalorder %s14, 0
    %p77 = por %p75, %p76
    %p78 = scmp.ne.s32.totalorder %s66, %s67
    %p79 = scmp.eq.s32.totalorder %s15, 1
    %p80 = por %p78, %p79
    %p82 = scmp.ne.s32.totalorder %s67, %s81
    %p83 = scmp.eq.s32.totalorder %s15, 0
    %p84 = por %p82, %p83
    %s85 = ssub.s32 %s9, %s16
    %p86 = scmp.eq.s32.totalorder %s85, 0
    %s88 = sadd.s32 %s87, 1
    %s89 = scalar_select %p86, %s87, %s88
    %p92 = pneg %p86
    %p93 = scmp.eq.s32.totalorder %s9, 1
    %p94 = por %p92, %p93
    %p95 = scmp.ne.s32.totalorder %s87, %s90
    %p96 = scmp.eq.s32.totalorder %s9, 0
    %p97 = por %p95, %p96
    %p98 = scmp.ne.s32.totalorder %s87, %s90
    %p99 = scmp.eq.s32.totalorder %s14, 1
    %p100 = por %p98, %p99
    %p101 = scmp.ne.s32.totalorder %s90, %s91
    %p102 = scmp.eq.s32.totalorder %s14, 0
    %p103 = por %p101, %p102
    %p104 = scmp.ne.s32.totalorder %s90, %s91
    %p105 = scmp.eq.s32.totalorder %s15, 1
    %p106 = por %p104, %p105
    %p108 = scmp.ne.s32.totalorder %s91, %s107
    %p109 = scmp.eq.s32.totalorder %s15, 0
    %p110 = por %p108, %p109
    %p111 = scmp.le.s32.totalorder 1, %s9
    %p112 = scmp.lt.s32.totalorder %s9, 3
    %p113 = pnand %p111, %p112
    %p114 = pneg %p113
    // Predicated region
    $region9: #{cnn_forward.3} parent=5 // pred_check
      _
    $region10: #{cnn_forward.3} parent=5 // pred_check_branch
      %116 = sbr.rel (%p113) target = $region12
    $region11: #{cnn_forward.3} parent=5 // pred_region
      %s117 = ssub.s32 %s9, 1
      // Predicated region
      $region13: #{cnn_forward.3} parent=11 // pred_check
        %p118 = pneg %p56
      $region14: #{cnn_forward.3} parent=11 // pred_check_branch
        %120 = sbr.rel (%p118) target = $region16
      $region15: #{cnn_forward.3} parent=11 // pred_region
        _
      $region16: #{cnn_forward.3} parent=11 // pred_fallthru
        _
      // Predicated region
      $region17: #{cnn_forward.3} parent=11 // pred_check
        %p121 = pneg %p77
      $region18: #{cnn_forward.3} parent=11 // pred_check_branch
        %123 = sbr.rel (%p121) target = $region20
      $region19: #{cnn_forward.3} parent=11 // pred_region
        _
      $region20: #{cnn_forward.3} parent=11 // pred_fallthru
        _
    $region12: #{cnn_forward.3} parent=5 // pred_fallthru
      _
    %p124 = scmp.lt.s32.totalorder %s9, 2
    // Predicated region
    $region21: #{cnn_forward.3} parent=5 // pred_check
      %p125 = pneg %p124
    $region22: #{cnn_forward.3} parent=5 // pred_check_branch
      %127 = sbr.rel (%p125) target = $region24
    $region23: #{cnn_forward.3} parent=5 // pred_region
      // Predicated region
      $region25: #{cnn_forward.3} parent=23 // pred_check
        %p128 = pneg %p29
      $region26: #{cnn_forward.3} parent=23 // pred_check_branch
        %130 = sbr.rel (%p128) target = $region28
      $region27: #{cnn_forward.3} parent=23 // pred_region
        %p131 = scmp.lt.s32.totalorder %s9, 1
        %s132 = scalar_select %p131, %s9, 1
        %s133 = smul.addr %s132, 132
        %s134 = smul.addr %s133, 8
        %s135 = scalar_lea.vmem %s0, %s134
      $region28: #{cnn_forward.3} parent=23 // pred_fallthru
        _
    $region24: #{cnn_forward.3} parent=5 // pred_fallthru
      _
    %p136 = scmp.le.s32.totalorder 1, %s9
    %p137 = scmp.lt.s32.totalorder %s9, 3
    %p138 = pnand %p136, %p137
    %p139 = pneg %p138
    // Predicated region
    $region29: #{cnn_forward.3} parent=5 // pred_check
      _
    $region30: #{cnn_forward.3} parent=5 // pred_check_branch
      %141 = sbr.rel (%p138) target = $region32
    $region31: #{cnn_forward.3} parent=5 // pred_region
      %s142 = ssub.s32 %s9, 1
      %p143 = scmp.lt.s32.totalorder %s14, 1
      %s144 = scalar_select %p143, %s14, 1
      %s145 = smul.addr %s144, 132
      %s146 = smul.addr %s145, 8
      %s147 = scalar_lea.vmem %s0, %s146
      %p148 = pneg %p35
      %p149 = pneg %p32
      %p150 = pneg %p56
      %p151 = pneg %p53
      %p152 = pneg %p77
      %p153 = pneg %p74
      %p154 = pneg %p103
      %p155 = pneg %p100
      %p156 = scmp.lt.s32.totalorder %s14, 1
      %s157 = scalar_select %p156, %s14, 1
      %s158 = smul.addr %s157, 33
      %s159 = smul.addr %s158, 8
      %s160 = scalar_lea.vmem %s3, %s159
      %p161 = scmp.lt.s32.totalorder %s14, 1
      %s162 = scalar_select %p161, %s14, 1
      %s163 = smul.addr %s162, 132
      %s164 = smul.addr %s163, 8
      %s165 = scalar_lea.vmem %s0, %s164
      %p166 = scmp.lt.s32.totalorder %s14, 1
      %s167 = scalar_select %p166, %s14, 1
      %s168 = smul.addr %s167, 33
      %s169 = smul.addr %s168, 8
      %s170 = scalar_lea.vmem %s3, %s169
      %v171 = vld [vmem:[%s1] sm:$0xff]
      %v172 = vld [vmem:[%s1 + $0x8] sm:$0x1]
      %v173 = vld [vmem:[%s165] sm:$0xff]
      %v174 = vld [vmem:[%s165 + $0x8] sm:$0xff]
      %v175 = vld [vmem:[%s165 + $0x10] sm:$0xff]
      %v176 = vld [vmem:[%s165 + $0x18] sm:$0xff]
      %v177 = vld [vmem:[%s165 + $0x20] sm:$0xff]
      %v178 = vld [vmem:[%s165 + $0x28] sm:$0xff]
      %v179 = vld [vmem:[%s165 + $0x30] sm:$0xff]
      %v180 = vld [vmem:[%s165 + $0x38] sm:$0xff]
      %v181 = vld [vmem:[%s165 + $0x40] sm:$0xff]
      %v182 = vld [vmem:[%s165 + $0x48] sm:$0xff]
      %v183 = vld [vmem:[%s165 + $0x50] sm:$0xff]
      %v184 = vld [vmem:[%s165 + $0x58] sm:$0xff]
      %v185 = vld [vmem:[%s165 + $0x60] sm:$0xff]
      %v186 = vld [vmem:[%s165 + $0x68] sm:$0xff]
      %v187 = vld [vmem:[%s165 + $0x70] sm:$0xff]
      %v188 = vld [vmem:[%s165 + $0x78] sm:$0xff]
      %v189 = vld [vmem:[%s165 + $0x80] sm:$0xff]
      %v190 = vld [vmem:[%s165 + $0x88] sm:$0xff]
      %v191 = vld [vmem:[%s165 + $0x90] sm:$0xff]
      %v192 = vld [vmem:[%s165 + $0x98] sm:$0xff]
      %v193 = vld [vmem:[%s165 + $0xa0] sm:$0xff]
      %v194 = vld [vmem:[%s165 + $0xa8] sm:$0xff]
      %v195 = vld [vmem:[%s165 + $0xb0] sm:$0xff]
      %v196 = vld [vmem:[%s165 + $0xb8] sm:$0xff]
      %v197 = vld [vmem:[%s165 + $0xc0] sm:$0xff]
      %v198 = vld [vmem:[%s165 + $0xc8] sm:$0xff]
      %v199 = vld [vmem:[%s165 + $0xd0] sm:$0xff]
      %v200 = vld [vmem:[%s165 + $0xd8] sm:$0xff]
      %v201 = vld [vmem:[%s165 + $0xe0] sm:$0xff]
      %v202 = vld [vmem:[%s165 + $0xe8] sm:$0xff]
      %v203 = vld [vmem:[%s165 + $0xf0] sm:$0xff]
      %v204 = vld [vmem:[%s165 + $0xf8] sm:$0xff]
      %v205 = vld [vmem:[%s165 + $0x100] sm:$0xf]
      %vm206 = vcmask 72704
      %v208 = vsel %vm206, %v173, 0
      %v211 = vsel %vm206, %v174, 0
      %v214 = vsel %vm206, %v175, 0
      %v217 = vsel %vm206, %v176, 0
      %v220 = vsel %vm206, %v177, 0
      %v223 = vsel %vm206, %v178, 0
      %v226 = vsel %vm206, %v179, 0
      %v229 = vsel %vm206, %v180, 0
      %v232 = vsel %vm206, %v181, 0
      %v235 = vsel %vm206, %v182, 0
      %v238 = vsel %vm206, %v183, 0
      %v241 = vsel %vm206, %v184, 0
      %v244 = vsel %vm206, %v185, 0
      %v247 = vsel %vm206, %v186, 0
      %v250 = vsel %vm206, %v187, 0
      %v253 = vsel %vm206, %v188, 0
      %v256 = vsel %vm206, %v189, 0
      %v259 = vsel %vm206, %v190, 0
      %v262 = vsel %vm206, %v191, 0
      %v265 = vsel %vm206, %v192, 0
      %v268 = vsel %vm206, %v193, 0
      %v271 = vsel %vm206, %v194, 0
      %v274 = vsel %vm206, %v195, 0
      %v277 = vsel %vm206, %v196, 0
      %v280 = vsel %vm206, %v197, 0
      %v283 = vsel %vm206, %v198, 0
      %v286 = vsel %vm206, %v199, 0
      %v289 = vsel %vm206, %v200, 0
      %v292 = vsel %vm206, %v201, 0
      %v295 = vsel %vm206, %v202, 0
      %v298 = vsel %vm206, %v203, 0
      %v301 = vsel %vm206, %v204, 0
      %v304 = vsel %vm206, %v205, 0
      %vm306 = vcmask 1040384
      %v308 = vsel %vm306, %v172, 0
      %310 = vmatprep.subr.mxu0 0.0
      %311 = vmatpush1.msra.mxu0 %v171
      %312 = vmatprep.subr.mxu0 0.0
      %313 = vmatpush1.msra.mxu0 %v308
      %314 = vmatprep.subr.mxu0 0.0
      %315 = vmatpush1.msra.mxu0 0.0
      %316 = vmatprep.subr.mxu0 0.0
      %317 = vmatpush1.msra.mxu0 0.0
      %318 = vmatprep.subr.mxu0 0.0
      %319 = vmatpush1.msra.mxu0 0.0
      %320 = vmatprep.subr.mxu0 0.0
      %321 = vmatpush1.msra.mxu0 0.0
      %322 = vmatprep.subr.mxu0 0.0
      %323 = vmatpush1.msra.mxu0 0.0
      %324 = vmatprep.subr.mxu0 0.0
      %325 = vmatpush1.msra.mxu0 0.0
      %326 = vmatprep.subr.mxu0 0.0
      %327 = vmatpush1.msra.mxu0 0.0
      %328 = vmatprep.subr.mxu0 0.0
      %329 = vmatpush1.msra.mxu0 0.0
      %330 = vmatprep.subr.mxu0 0.0
      %331 = vmatpush1.msra.mxu0 0.0
      %332 = vmatprep.subr.mxu0 0.0
      %333 = vmatpush1.msra.mxu0 0.0
      %334 = vmatprep.subr.mxu0 0.0
      %335 = vmatpush1.msra.mxu0 0.0
      %336 = vmatprep.subr.mxu0 0.0
      %337 = vmatpush1.msra.mxu0 0.0
      %338 = vmatprep.subr.mxu0 0.0
      %339 = vmatpush1.msra.mxu0 0.0
      %340 = vmatprep.subr.mxu0 0.0
      %341 = vmatpush1.msra.mxu0 0.0
      %342 = vmatprep.subr.mxu0 0.0
      %343 = vmatpush1.msra.mxu0 0.0
      %344 = vmatprep.subr.mxu0 0.0
      %345 = vmatpush1.msra.mxu0 0.0
      %346 = vmatprep.subr.mxu0 0.0
      %347 = vmatpush1.msra.mxu0 0.0
      %348 = vmatprep.subr.mxu0 0.0
      %349 = vmatpush1.msra.mxu0 0.0
      %350 = vmatprep.subr.mxu0 0.0
      %351 = vmatpush1.msra.mxu0 0.0
      %352 = vmatprep.subr.mxu0 0.0
      %353 = vmatpush1.msra.mxu0 0.0
      %354 = vmatprep.subr.mxu0 0.0
      %355 = vmatpush1.msra.mxu0 0.0
      %356 = vmatprep.subr.mxu0 0.0
      %357 = vmatpush1.msra.mxu0 0.0
      %358 = vmatprep.subr.mxu0 0.0
      %359 = vmatpush1.msra.mxu0 0.0
      %360 = vmatprep.subr.mxu0 0.0
      %361 = vmatpush1.msra.mxu0 0.0
      %362 = vmatprep.subr.mxu0 0.0
      %363 = vmatpush1.msra.mxu0 0.0
      %364 = vmatprep.subr.mxu0 0.0
      %365 = vmatpush1.msra.mxu0 0.0
      %366 = vmatprep.subr.mxu0 0.0
      %367 = vmatpush1.msra.mxu0 0.0
      %368 = vmatprep.subr.mxu0 0.0
      %369 = vmatpush1.msra.mxu0 0.0
      %370 = vmatprep.subr.mxu0 0.0
      %371 = vmatpush1.msra.mxu0 0.0
      %372 = vmatprep.subr.mxu0 0.0
      %373 = vmatpush1.msra.mxu0 0.0
      %374 = vmatprep.mubr.f32.mxu0 0.0
      %375 = vmatmul.mubr.f32.gmra.mrb[0].mxu0 %v208
      %v376 = vpop.f32.mrb[0].mxu0
      %v377 = vadd.f32 0.0, %v376
      %v378 = vpop.f32.mrb[0].mxu0
      %379 = vmatprep.mubr.f32.mxu0 0.0
      %380 = vmatmul.mubr.f32.gmra.mrb[0].mxu0 %v211
      %v381 = vpop.f32.mrb[0].mxu0
      %v382 = vadd.f32 0.0, %v381
      %v383 = vpop.f32.mrb[0].mxu0
      %384 = vmatprep.mubr.f32.mxu0 0.0
      %385 = vmatmul.mubr.f32.gmra.mrb[0].mxu0 %v214
      %v386 = vpop.f32.mrb[0].mxu0
      %v387 = vadd.f32 0.0, %v386
      %v388 = vpop.f32.mrb[0].mxu0
      %389 = vmatprep.mubr.f32.mxu0 0.0
      %390 = vmatmul.mubr.f32.gmra.mrb[0].mxu0 %v217
      %v391 = vpop.f32.mrb[0].mxu0
      %v392 = vadd.f32 0.0, %v391
      %v393 = vpop.f32.mrb[0].mxu0
      %394 = vmatprep.mubr.f32.mxu0 0.0
      %395 = vmatmul.mubr.f32.gmra.mrb[0].mxu0 %v220
      %v396 = vpop.f32.mrb[0].mxu0
      %v397 = vadd.f32 0.0, %v396
      %v398 = vpop.f32.mrb[0].mxu0
      %399 = vmatprep.mubr.f32.mxu0 0.0
      %400 = vmatmul.mubr.f32.gmra.mrb[0].mxu0 %v223
      %v401 = vpop.f32.mrb[0].mxu0
      %v402 = vadd.f32 0.0, %v401
      %v403 = vpop.f32.mrb[0].mxu0
      %404 = vmatprep.mubr.f32.mxu0 0.0
      %405 = vmatmul.mubr.f32.gmra.mrb[0].mxu0 %v226
      %v406 = vpop.f32.mrb[0].mxu0
      %v407 = vadd.f32 0.0, %v406
      %v408 = vpop.f32.mrb[0].mxu0
      %409 = vmatprep.mubr.f32.mxu0 0.0
      %410 = vmatmul.mubr.f32.gmra.mrb[0].mxu0 %v229
      %v411 = vpop.f32.mrb[0].mxu0
      %v412 = vadd.f32 0.0, %v411
      %v413 = vpop.f32.mrb[0].mxu0
      %414 = vmatprep.mubr.f32.mxu0 0.0
      %415 = vmatmul.mubr.f32.gmra.mrb[0].mxu0 %v232
      %v416 = vpop.f32.mrb[0].mxu0
      %v417 = vadd.f32 0.0, %v416
      %v418 = vpop.f32.mrb[0].mxu0
      %419 = vmatprep.mubr.f32.mxu0 0.0
      %420 = vmatmul.mubr.f32.gmra.mrb[0].mxu0 %v235
      %v421 = vpop.f32.mrb[0].mxu0
      %v422 = vadd.f32 0.0, %v421
      %v423 = vpop.f32.mrb[0].mxu0
      %424 = vmatprep.mubr.f32.mxu0 0.0
      %425 = vmatmul.mubr.f32.gmra.mrb[0].mxu0 %v238
      %v426 = vpop.f32.mrb[0].mxu0
      %v427 = vadd.f32 0.0, %v426
      %v428 = vpop.f32.mrb[0].mxu0
      %429 = vmatprep.mubr.f32.mxu0 0.0
      %430 = vmatmul.mubr.f32.gmra.mrb[0].mxu0 %v241
      %v431 = vpop.f32.mrb[0].mxu0
      %v432 = vadd.f32 0.0, %v431
      %v433 = vpop.f32.mrb[0].mxu0
      %434 = vmatprep.mubr.f32.mxu0 0.0
      %435 = vmatmul.mubr.f32.gmra.mrb[0].mxu0 %v244
      %v436 = vpop.f32.mrb[0].mxu0
      %v437 = vadd.f32 0.0, %v436
      %v438 = vpop.f32.mrb[0].mxu0
      %439 = vmatprep.mubr.f32.mxu0 0.0
      %440 = vmatmul.mubr.f32.gmra.mrb[0].mxu0 %v247
      %v441 = vpop.f32.mrb[0].mxu0
      %v442 = vadd.f32 0.0, %v441
      %v443 = vpop.f32.mrb[0].mxu0
      %444 = vmatprep.mubr.f32.mxu0 0.0
      %445 = vmatmul.mubr.f32.gmra.mrb[0].mxu0 %v250
      %v446 = vpop.f32.mrb[0].mxu0
      %v447 = vadd.f32 0.0, %v446
      %v448 = vpop.f32.mrb[0].mxu0
      %449 = vmatprep.mubr.f32.mxu0 0.0
      %450 = vmatmul.mubr.f32.gmra.mrb[0].mxu0 %v253
      %v451 = vpop.f32.mrb[0].mxu0
      %v452 = vadd.f32 0.0, %v451
      %v453 = vpop.f32.mrb[0].mxu0
      %454 = vmatprep.mubr.f32.mxu0 0.0
      %455 = vmatmul.mubr.f32.gmra.mrb[0].mxu0 %v256
      %v456 = vpop.f32.mrb[0].mxu0
      %v457 = vadd.f32 0.0, %v456
      %v458 = vpop.f32.mrb[0].mxu0
      %459 = vmatprep.mubr.f32.mxu0 0.0
      %460 = vmatmul.mubr.f32.gmra.mrb[0].mxu0 %v259
      %v461 = vpop.f32.mrb[0].mxu0
      %v462 = vadd.f32 0.0, %v461
      %v463 = vpop.f32.mrb[0].mxu0
      %464 = vmatprep.mubr.f32.mxu0 0.0
      %465 = vmatmul.mubr.f32.gmra.mrb[0].mxu0 %v262
      %v466 = vpop.f32.mrb[0].mxu0
      %v467 = vadd.f32 0.0, %v466
      %v468 = vpop.f32.mrb[0].mxu0
      %469 = vmatprep.mubr.f32.mxu0 0.0
      %470 = vmatmul.mubr.f32.gmra.mrb[0].mxu0 %v265
      %v471 = vpop.f32.mrb[0].mxu0
      %v472 = vadd.f32 0.0, %v471
      %v473 = vpop.f32.mrb[0].mxu0
      %474 = vmatprep.mubr.f32.mxu0 0.0
      %475 = vmatmul.mubr.f32.gmra.mrb[0].mxu0 %v268
      %v476 = vpop.f32.mrb[0].mxu0
      %v477 = vadd.f32 0.0, %v476
      %v478 = vpop.f32.mrb[0].mxu0
      %479 = vmatprep.mubr.f32.mxu0 0.0
      %480 = vmatmul.mubr.f32.gmra.mrb[0].mxu0 %v271
      %v481 = vpop.f32.mrb[0].mxu0
      %v482 = vadd.f32 0.0, %v481
      %v483 = vpop.f32.mrb[0].mxu0
      %484 = vmatprep.mubr.f32.mxu0 0.0
      %485 = vmatmul.mubr.f32.gmra.mrb[0].mxu0 %v274
      %v486 = vpop.f32.mrb[0].mxu0
      %v487 = vadd.f32 0.0, %v486
      %v488 = vpop.f32.mrb[0].mxu0
      %489 = vmatprep.mubr.f32.mxu0 0.0
      %490 = vmatmul.mubr.f32.gmra.mrb[0].mxu0 %v277
      %v491 = vpop.f32.mrb[0].mxu0
      %v492 = vadd.f32 0.0, %v491
      %v493 = vpop.f32.mrb[0].mxu0
      %494 = vmatprep.mubr.f32.mxu0 0.0
      %495 = vmatmul.mubr.f32.gmra.mrb[0].mxu0 %v280
      %v496 = vpop.f32.mrb[0].mxu0
      %v497 = vadd.f32 0.0, %v496
      %v498 = vpop.f32.mrb[0].mxu0
      %499 = vmatprep.mubr.f32.mxu0 0.0
      %500 = vmatmul.mubr.f32.gmra.mrb[0].mxu0 %v283
      %v501 = vpop.f32.mrb[0].mxu0
      %v502 = vadd.f32 0.0, %v501
      %v503 = vpop.f32.mrb[0].mxu0
      %504 = vmatprep.mubr.f32.mxu0 0.0
      %505 = vmatmul.mubr.f32.gmra.mrb[0].mxu0 %v286
      %v506 = vpop.f32.mrb[0].mxu0
      %v507 = vadd.f32 0.0, %v506
      %v508 = vpop.f32.mrb[0].mxu0
      %509 = vmatprep.mubr.f32.mxu0 0.0
      %510 = vmatmul.mubr.f32.gmra.mrb[0].mxu0 %v289
      %v511 = vpop.f32.mrb[0].mxu0
      %v512 = vadd.f32 0.0, %v511
      %v513 = vpop.f32.mrb[0].mxu0
      %514 = vmatprep.mubr.f32.mxu0 0.0
      %515 = vmatmul.mubr.f32.gmra.mrb[0].mxu0 %v292
      %v516 = vpop.f32.mrb[0].mxu0
      %v517 = vadd.f32 0.0, %v516
      %v518 = vpop.f32.mrb[0].mxu0
      %519 = vmatprep.mubr.f32.mxu0 0.0
      %520 = vmatmul.mubr.f32.gmra.mrb[0].mxu0 %v295
      %v521 = vpop.f32.mrb[0].mxu0
      %v522 = vadd.f32 0.0, %v521
      %v523 = vpop.f32.mrb[0].mxu0
      %524 = vmatprep.mubr.f32.mxu0 0.0
      %525 = vmatmul.mubr.f32.gmra.mrb[0].mxu0 %v298
      %v526 = vpop.f32.mrb[0].mxu0
      %v527 = vadd.f32 0.0, %v526
      %v528 = vpop.f32.mrb[0].mxu0
      %529 = vmatprep.mubr.f32.mxu0 0.0
      %530 = vmatmul.mubr.f32.gmra.mrb[0].mxu0 %v301
      %v531 = vpop.f32.mrb[0].mxu0
      %v532 = vadd.f32 0.0, %v531
      %v533 = vpop.f32.mrb[0].mxu0
      %534 = vmatprep.mubr.f32.mxu0 0.0
      %535 = vmatmul.mubr.f32.gmra.mrb[0].mxu0 %v304
      %v536 = vpop.f32.mrb[0].mxu0
      %v537 = vadd.f32 0.0, %v536
      %v538 = vpop.f32.mrb[0].mxu0
      %539 = vdwg.mxu0
      %s540 = scalar_lea.vmem %s165, 264
      %v541 = vld [vmem:[%s540] sm:$0xff]
      %v542 = vld [vmem:[%s540 + $0x8] sm:$0xff]
      %v543 = vld [vmem:[%s540 + $0x10] sm:$0xff]
      %v544 = vld [vmem:[%s540 + $0x18] sm:$0xff]
      %v545 = vld [vmem:[%s540 + $0x20] sm:$0xff]
      %v546 = vld [vmem:[%s540 + $0x28] sm:$0xff]
      %v547 = vld [vmem:[%s540 + $0x30] sm:$0xff]
      %v548 = vld [vmem:[%s540 + $0x38] sm:$0xff]
      %v549 = vld [vmem:[%s540 + $0x40] sm:$0xff]
      %v550 = vld [vmem:[%s540 + $0x48] sm:$0xff]
      %v551 = vld [vmem:[%s540 + $0x50] sm:$0xff]
      %v552 = vld [vmem:[%s540 + $0x58] sm:$0xff]
      %v553 = vld [vmem:[%s540 + $0x60] sm:$0xff]
      %v554 = vld [vmem:[%s540 + $0x68] sm:$0xff]
      %v555 = vld [vmem:[%s540 + $0x70] sm:$0xff]
      %v556 = vld [vmem:[%s540 + $0x78] sm:$0xff]
      %v557 = vld [vmem:[%s540 + $0x80] sm:$0xff]
      %v558 = vld [vmem:[%s540 + $0x88] sm:$0xff]
      %v559 = vld [vmem:[%s540 + $0x90] sm:$0xff]
      %v560 = vld [vmem:[%s540 + $0x98] sm:$0xff]
      %v561 = vld [vmem:[%s540 + $0xa0] sm:$0xff]
      %v562 = vld [vmem:[%s540 + $0xa8] sm:$0xff]
      %v563 = vld [vmem:[%s540 + $0xb0] sm:$0xff]
      %v564 = vld [vmem:[%s540 + $0xb8] sm:$0xff]
      %v565 = vld [vmem:[%s540 + $0xc0] sm:$0xff]
      %v566 = vld [vmem:[%s540 + $0xc8] sm:$0xff]
      %v567 = vld [vmem:[%s540 + $0xd0] sm:$0xff]
      %v568 = vld [vmem:[%s540 + $0xd8] sm:$0xff]
      %v569 = vld [vmem:[%s540 + $0xe0] sm:$0xff]
      %v570 = vld [vmem:[%s540 + $0xe8] sm:$0xff]
      %v571 = vld [vmem:[%s540 + $0xf0] sm:$0xff]
      %v572 = vld [vmem:[%s540 + $0xf8] sm:$0xff]
      %v573 = vld [vmem:[%s540 + $0x100] sm:$0xf]
      %v575 = vsel %vm206, %v541, 0
      %v578 = vsel %vm206, %v542, 0
      %v581 = vsel %vm206, %v543, 0
      %v584 = vsel %vm206, %v544, 0
      %v587 = vsel %vm206, %v545, 0
      %v590 = vsel %vm206, %v546, 0
      %v593 = vsel %vm206, %v547, 0
      %v596 = vsel %vm206, %v548, 0
      %v599 = vsel %vm206, %v549, 0
      %v602 = vsel %vm206, %v550, 0
      %v605 = vsel %vm206, %v551, 0
      %v608 = vsel %vm206, %v552, 0
      %v611 = vsel %vm206, %v553, 0
      %v614 = vsel %vm206, %v554, 0
      %v617 = vsel %vm206, %v555, 0
      %v620 = vsel %vm206, %v556, 0
      %v623 = vsel %vm206, %v557, 0
      %v626 = vsel %vm206, %v558, 0
      %v629 = vsel %vm206, %v559, 0
      %v632 = vsel %vm206, %v560, 0
      %v635 = vsel %vm206, %v561, 0
      %v638 = vsel %vm206, %v562, 0
      %v641 = vsel %vm206, %v563, 0
      %v644 = vsel %vm206, %v564, 0
      %v647 = vsel %vm206, %v565, 0
      %v650 = vsel %vm206, %v566, 0
      %v653 = vsel %vm206, %v567, 0
      %v656 = vsel %vm206, %v568, 0
      %v659 = vsel %vm206, %v569, 0
      %v662 = vsel %vm206, %v570, 0
      %v665 = vsel %vm206, %v571, 0
      %v668 = vsel %vm206, %v572, 0
      %v671 = vsel %vm206, %v573, 0
      %673 = vmatprep.subr.mxu0 0.0
      %674 = vmatpush1.msra.mxu0 %v171
      %675 = vmatprep.subr.mxu0 0.0
      %676 = vmatpush1.msra.mxu0 %v308
      %677 = vmatprep.subr.mxu0 0.0
      %678 = vmatpush1.msra.mxu0 0.0
      %679 = vmatprep.subr.mxu0 0.0
      %680 = vmatpush1.msra.mxu0 0.0
      %681 = vmatprep.subr.mxu0 0.0
      %682 = vmatpush1.msra.mxu0 0.0
      %683 = vmatprep.subr.mxu0 0.0
      %684 = vmatpush1.msra.mxu0 0.0
      %685 = vmatprep.subr.mxu0 0.0
      %686 = vmatpush1.msra.mxu0 0.0
      %687 = vmatprep.subr.mxu0 0.0
      %688 = vmatpush1.msra.mxu0 0.0
      %689 = vmatprep.subr.mxu0 0.0
      %690 = vmatpush1.msra.mxu0 0.0
      %691 = vmatprep.subr.mxu0 0.0
      %692 = vmatpush1.msra.mxu0 0.0
      %693 = vmatprep.subr.mxu0 0.0
      %694 = vmatpush1.msra.mxu0 0.0
      %695 = vmatprep.subr.mxu0 0.0
      %696 = vmatpush1.msra.mxu0 0.0
      %697 = vmatprep.subr.mxu0 0.0
      %698 = vmatpush1.msra.mxu0 0.0
      %699 = vmatprep.subr.mxu0 0.0
      %700 = vmatpush1.msra.mxu0 0.0
      %701 = vmatprep.subr.mxu0 0.0
      %702 = vmatpush1.msra.mxu0 0.0
      %703 = vmatprep.subr.mxu0 0.0
      %704 = vmatpush1.msra.mxu0 0.0
      %705 = vmatprep.subr.mxu0 0.0
      %706 = vmatpush1.msra.mxu0 0.0
      %707 = vmatprep.subr.mxu0 0.0
      %708 = vmatpush1.msra.mxu0 0.0
      %709 = vmatprep.subr.mxu0 0.0
      %710 = vmatpush1.msra.mxu0 0.0
      %711 = vmatprep.subr.mxu0 0.0
      %712 = vmatpush1.msra.mxu0 0.0
      %713 = vmatprep.subr.mxu0 0.0
      %714 = vmatpush1.msra.mxu0 0.0
      %715 = vmatprep.subr.mxu0 0.0
      %716 = vmatpush1.msra.mxu0 0.0
      %717 = vmatprep.subr.mxu0 0.0
      %718 = vmatpush1.msra.mxu0 0.0
      %719 = vmatprep.subr.mxu0 0.0
      %720 = vmatpush1.msra.mxu0 0.0
      %721 = vmatprep.subr.mxu0 0.0
      %722 = vmatpush1.msra.mxu0 0.0
      %723 = vmatprep.subr.mxu0 0.0
      %724 = vmatpush1.msra.mxu0 0.0
      %725 = vmatprep.subr.mxu0 0.0
      %726 = vmatpush1.msra.mxu0 0.0
      %727 = vmatprep.subr.mxu0 0.0
      %728 = vmatpush1.msra.mxu0 0.0
      %729 = vmatprep.subr.mxu0 0.0
      %730 = vmatpush1.msra.mxu0 0.0
      %731 = vmatprep.subr.mxu0 0.0
      %732 = vmatpush1.msra.mxu0 0.0
      %733 = vmatprep.subr.mxu0 0.0
      %734 = vmatpush1.msra.mxu0 0.0
      %735 = vmatprep.subr.mxu0 0.0
      %736 = vmatpush1.msra.mxu0 0.0
      %737 = vmatprep.mubr.f32.mxu0 0.0
      %738 = vmatmul.mubr.f32.gmra.mrb[0].mxu0 %v575
      %v739 = vpop.f32.mrb[0].mxu0
      %v740 = vadd.f32 0.0, %v739
      %v741 = vpop.f32.mrb[0].mxu0
      %742 = vmatprep.mubr.f32.mxu0 0.0
      %743 = vmatmul.mubr.f32.gmra.mrb[0].mxu0 %v578
      %v744 = vpop.f32.mrb[0].mxu0
      %v745 = vadd.f32 0.0, %v744
      %v746 = vpop.f32.mrb[0].mxu0
      %747 = vmatprep.mubr.f32.mxu0 0.0
      %748 = vmatmul.mubr.f32.gmra.mrb[0].mxu0 %v581
      %v749 = vpop.f32.mrb[0].mxu0
      %v750 = vadd.f32 0.0, %v749
      %v751 = vpop.f32.mrb[0].mxu0
      %752 = vmatprep.mubr.f32.mxu0 0.0
      %753 = vmatmul.mubr.f32.gmra.mrb[0].mxu0 %v584
      %v754 = vpop.f32.mrb[0].mxu0
      %v755 = vadd.f32 0.0, %v754
      %v756 = vpop.f32.mrb[0].mxu0
      %757 = vmatprep.mubr.f32.mxu0 0.0
      %758 = vmatmul.mubr.f32.gmra.mrb[0].mxu0 %v587
      %v759 = vpop.f32.mrb[0].mxu0
      %v760 = vadd.f32 0.0, %v759
      %v761 = vpop.f32.mrb[0].mxu0
      %762 = vmatprep.mubr.f32.mxu0 0.0
      %763 = vmatmul.mubr.f32.gmra.mrb[0].mxu0 %v590
      %v764 = vpop.f32.mrb[0].mxu0
      %v765 = vadd.f32 0.0, %v764
      %v766 = vpop.f32.mrb[0].mxu0
      %767 = vmatprep.mubr.f32.mxu0 0.0
      %768 = vmatmul.mubr.f32.gmra.mrb[0].mxu0 %v593
      %v769 = vpop.f32.mrb[0].mxu0
      %v770 = vadd.f32 0.0, %v769
      %v771 = vpop.f32.mrb[0].mxu0
      %772 = vmatprep.mubr.f32.mxu0 0.0
      %773 = vmatmul.mubr.f32.gmra.mrb[0].mxu0 %v596
      %v774 = vpop.f32.mrb[0].mxu0
      %v775 = vadd.f32 0.0, %v774
      %v776 = vpop.f32.mrb[0].mxu0
      %777 = vmatprep.mubr.f32.mxu0 0.0
      %778 = vmatmul.mubr.f32.gmra.mrb[0].mxu0 %v599
      %v779 = vpop.f32.mrb[0].mxu0
      %v780 = vadd.f32 0.0, %v779
      %v781 = vpop.f32.mrb[0].mxu0
      %782 = vmatprep.mubr.f32.mxu0 0.0
      %783 = vmatmul.mubr.f32.gmra.mrb[0].mxu0 %v602
      %v784 = vpop.f32.mrb[0].mxu0
      %v785 = vadd.f32 0.0, %v784
      %v786 = vpop.f32.mrb[0].mxu0
      %787 = vmatprep.mubr.f32.mxu0 0.0
      %788 = vmatmul.mubr.f32.gmra.mrb[0].mxu0 %v605
      %v789 = vpop.f32.mrb[0].mxu0
      %v790 = vadd.f32 0.0, %v789
      %v791 = vpop.f32.mrb[0].mxu0
      %792 = vmatprep.mubr.f32.mxu0 0.0
      %793 = vmatmul.mubr.f32.gmra.mrb[0].mxu0 %v608
      %v794 = vpop.f32.mrb[0].mxu0
      %v795 = vadd.f32 0.0, %v794
      %v796 = vpop.f32.mrb[0].mxu0
      %797 = vmatprep.mubr.f32.mxu0 0.0
      %798 = vmatmul.mubr.f32.gmra.mrb[0].mxu0 %v611
      %v799 = vpop.f32.mrb[0].mxu0
      %v800 = vadd.f32 0.0, %v799
      %v801 = vpop.f32.mrb[0].mxu0
      %802 = vmatprep.mubr.f32.mxu0 0.0
      %803 = vmatmul.mubr.f32.gmra.mrb[0].mxu0 %v614
      %v804 = vpop.f32.mrb[0].mxu0
      %v805 = vadd.f32 0.0, %v804
      %v806 = vpop.f32.mrb[0].mxu0
      %807 = vmatprep.mubr.f32.mxu0 0.0
      %808 = vmatmul.mubr.f32.gmra.mrb[0].mxu0 %v617
      %v809 = vpop.f32.mrb[0].mxu0
      %v810 = vadd.f32 0.0, %v809
      %v811 = vpop.f32.mrb[0].mxu0
      %812 = vmatprep.mubr.f32.mxu0 0.0
      %813 = vmatmul.mubr.f32.gmra.mrb[0].mxu0 %v620
      %v814 = vpop.f32.mrb[0].mxu0
      %v815 = vadd.f32 0.0, %v814
      %v816 = vpop.f32.mrb[0].mxu0
      %817 = vmatprep.mubr.f32.mxu0 0.0
      %818 = vmatmul.mubr.f32.gmra.mrb[0].mxu0 %v623
      %v819 = vpop.f32.mrb[0].mxu0
      %v820 = vadd.f32 0.0, %v819
      %v821 = vpop.f32.mrb[0].mxu0
      %822 = vmatprep.mubr.f32.mxu0 0.0
      %823 = vmatmul.mubr.f32.gmra.mrb[0].mxu0 %v626
      %v824 = vpop.f32.mrb[0].mxu0
      %v825 = vadd.f32 0.0, %v824
      %v826 = vpop.f32.mrb[0].mxu0
      %827 = vmatprep.mubr.f32.mxu0 0.0
      %828 = vmatmul.mubr.f32.gmra.mrb[0].mxu0 %v629
      %v829 = vpop.f32.mrb[0].mxu0
      %v830 = vadd.f32 0.0, %v829
      %v831 = vpop.f32.mrb[0].mxu0
      %832 = vmatprep.mubr.f32.mxu0 0.0
      %833 = vmatmul.mubr.f32.gmra.mrb[0].mxu0 %v632
      %v834 = vpop.f32.mrb[0].mxu0
      %v835 = vadd.f32 0.0, %v834
      %v836 = vpop.f32.mrb[0].mxu0
      %837 = vmatprep.mubr.f32.mxu0 0.0
      %838 = vmatmul.mubr.f32.gmra.mrb[0].mxu0 %v635
      %v839 = vpop.f32.mrb[0].mxu0
      %v840 = vadd.f32 0.0, %v839
      %v841 = vpop.f32.mrb[0].mxu0
      %842 = vmatprep.mubr.f32.mxu0 0.0
      %843 = vmatmul.mubr.f32.gmra.mrb[0].mxu0 %v638
      %v844 = vpop.f32.mrb[0].mxu0
      %v845 = vadd.f32 0.0, %v844
      %v846 = vpop.f32.mrb[0].mxu0
      %847 = vmatprep.mubr.f32.mxu0 0.0
      %848 = vmatmul.mubr.f32.gmra.mrb[0].mxu0 %v641
      %v849 = vpop.f32.mrb[0].mxu0
      %v850 = vadd.f32 0.0, %v849
      %v851 = vpop.f32.mrb[0].mxu0
      %852 = vmatprep.mubr.f32.mxu0 0.0
      %853 = vmatmul.mubr.f32.gmra.mrb[0].mxu0 %v644
      %v854 = vpop.f32.mrb[0].mxu0
      %v855 = vadd.f32 0.0, %v854
      %v856 = vpop.f32.mrb[0].mxu0
      %857 = vmatprep.mubr.f32.mxu0 0.0
      %858 = vmatmul.mubr.f32.gmra.mrb[0].mxu0 %v647
      %v859 = vpop.f32.mrb[0].mxu0
      %v860 = vadd.f32 0.0, %v859
      %v861 = vpop.f32.mrb[0].mxu0
      %862 = vmatprep.mubr.f32.mxu0 0.0
      %863 = vmatmul.mubr.f32.gmra.mrb[0].mxu0 %v650
      %v864 = vpop.f32.mrb[0].mxu0
      %v865 = vadd.f32 0.0, %v864
      %v866 = vpop.f32.mrb[0].mxu0
      %867 = vmatprep.mubr.f32.mxu0 0.0
      %868 = vmatmul.mubr.f32.gmra.mrb[0].mxu0 %v653
      %v869 = vpop.f32.mrb[0].mxu0
      %v870 = vadd.f32 0.0, %v869
      %v871 = vpop.f32.mrb[0].mxu0
      %872 = vmatprep.mubr.f32.mxu0 0.0
      %873 = vmatmul.mubr.f32.gmra.mrb[0].mxu0 %v656
      %v874 = vpop.f32.mrb[0].mxu0
      %v875 = vadd.f32 0.0, %v874
      %v876 = vpop.f32.mrb[0].mxu0
      %877 = vmatprep.mubr.f32.mxu0 0.0
      %878 = vmatmul.mubr.f32.gmra.mrb[0].mxu0 %v659
      %v879 = vpop.f32.mrb[0].mxu0
      %v880 = vadd.f32 0.0, %v879
      %v881 = vpop.f32.mrb[0].mxu0
      %882 = vmatprep.mubr.f32.mxu0 0.0
      %883 = vmatmul.mubr.f32.gmra.mrb[0].mxu0 %v662
      %v884 = vpop.f32.mrb[0].mxu0
      %v885 = vadd.f32 0.0, %v884
      %v886 = vpop.f32.mrb[0].mxu0
      %887 = vmatprep.mubr.f32.mxu0 0.0
      %888 = vmatmul.mubr.f32.gmra.mrb[0].mxu0 %v665
      %v889 = vpop.f32.mrb[0].mxu0
      %v890 = vadd.f32 0.0, %v889
      %v891 = vpop.f32.mrb[0].mxu0
      %892 = vmatprep.mubr.f32.mxu0 0.0
      %893 = vmatmul.mubr.f32.gmra.mrb[0].mxu0 %v668
      %v894 = vpop.f32.mrb[0].mxu0
      %v895 = vadd.f32 0.0, %v894
      %v896 = vpop.f32.mrb[0].mxu0
      %897 = vmatprep.mubr.f32.mxu0 0.0
      %898 = vmatmul.mubr.f32.gmra.mrb[0].mxu0 %v671
      %v899 = vpop.f32.mrb[0].mxu0
      %v900 = vadd.f32 0.0, %v899
      %v901 = vpop.f32.mrb[0].mxu0
      %902 = vdwg.mxu0
      %v903 = vmax.f32 %v377, %v740
      %v904 = vmax.f32 %v382, %v745
      %v905 = vmax.f32 %v387, %v750
      %v906 = vmax.f32 %v392, %v755
      %v907 = vmax.f32 %v397, %v760
      %v908 = vmax.f32 %v402, %v765
      %v909 = vmax.f32 %v407, %v770
      %v910 = vmax.f32 %v412, %v775
      %v911 = vmax.f32 %v417, %v780
      %v912 = vmax.f32 %v422, %v785
      %v913 = vmax.f32 %v427, %v790
      %v914 = vmax.f32 %v432, %v795
      %v915 = vmax.f32 %v437, %v800
      %v916 = vmax.f32 %v442, %v805
      %v917 = vmax.f32 %v447, %v810
      %v918 = vmax.f32 %v452, %v815
      %v919 = vmax.f32 %v457, %v820
      %v920 = vmax.f32 %v462, %v825
      %v921 = vmax.f32 %v467, %v830
      %v922 = vmax.f32 %v472, %v835
      %v923 = vmax.f32 %v477, %v840
      %v924 = vmax.f32 %v482, %v845
      %v925 = vmax.f32 %v487, %v850
      %v926 = vmax.f32 %v492, %v855
      %v927 = vmax.f32 %v497, %v860
      %v928 = vmax.f32 %v502, %v865
      %v929 = vmax.f32 %v507, %v870
      %v930 = vmax.f32 %v512, %v875
      %v931 = vmax.f32 %v517, %v880
      %v932 = vmax.f32 %v522, %v885
      %v933 = vmax.f32 %v527, %v890
      %v934 = vmax.f32 %v532, %v895
      %v935 = vmax.f32 %v537, %v900
      %s936 = scalar_lea.vmem %s165, 528
      %v937 = vld [vmem:[%s936] sm:$0xff]
      %v938 = vld [vmem:[%s936 + $0x8] sm:$0xff]
      %v939 = vld [vmem:[%s936 + $0x10] sm:$0xff]
      %v940 = vld [vmem:[%s936 + $0x18] sm:$0xff]
      %v941 = vld [vmem:[%s936 + $0x20] sm:$0xff]
      %v942 = vld [vmem:[%s936 + $0x28] sm:$0xff]
      %v943 = vld [vmem:[%s936 + $0x30] sm:$0xff]
      %v944 = vld [vmem:[%s936 + $0x38] sm:$0xff]
      %v945 = vld [vmem:[%s936 + $0x40] sm:$0xff]
      %v946 = vld [vmem:[%s936 + $0x48] sm:$0xff]
      %v947 = vld [vmem:[%s936 + $0x50] sm:$0xff]
      %v948 = vld [vmem:[%s936 + $0x58] sm:$0xff]
      %v949 = vld [vmem:[%s936 + $0x60] sm:$0xff]
      %v950 = vld [vmem:[%s936 + $0x68] sm:$0xff]
      %v951 = vld [vmem:[%s936 + $0x70] sm:$0xff]
      %v952 = vld [vmem:[%s936 + $0x78] sm:$0xff]
      %v953 = vld [vmem:[%s936 + $0x80] sm:$0xff]
      %v954 = vld [vmem:[%s936 + $0x88] sm:$0xff]
      %v955 = vld [vmem:[%s936 + $0x90] sm:$0xff]
      %v956 = vld [vmem:[%s936 + $0x98] sm:$0xff]
      %v957 = vld [vmem:[%s936 + $0xa0] sm:$0xff]
      %v958 = vld [vmem:[%s936 + $0xa8] sm:$0xff]
      %v959 = vld [vmem:[%s936 + $0xb0] sm:$0xff]
      %v960 = vld [vmem:[%s936 + $0xb8] sm:$0xff]
      %v961 = vld [vmem:[%s936 + $0xc0] sm:$0xff]
      %v962 = vld [vmem:[%s936 + $0xc8] sm:$0xff]
      %v963 = vld [vmem:[%s936 + $0xd0] sm:$0xff]
      %v964 = vld [vmem:[%s936 + $0xd8] sm:$0xff]
      %v965 = vld [vmem:[%s936 + $0xe0] sm:$0xff]
      %v966 = vld [vmem:[%s936 + $0xe8] sm:$0xff]
      %v967 = vld [vmem:[%s936 + $0xf0] sm:$0xff]
      %v968 = vld [vmem:[%s936 + $0xf8] sm:$0xff]
      %v969 = vld [vmem:[%s936 + $0x100] sm:$0xf]
      %v971 = vsel %vm206, %v937, 0
      %v974 = vsel %vm206, %v938, 0
      %v977 = vsel %vm206, %v939, 0
      %v980 = vsel %vm206, %v940, 0
      %v983 = vsel %vm206, %v941, 0
      %v986 = vsel %vm206, %v942, 0
      %v989 = vsel %vm206, %v943, 0
      %v992 = vsel %vm206, %v944, 0
      %v995 = vsel %vm206, %v945, 0
      %v998 = vsel %vm206, %v946, 0
      %v1001 = vsel %vm206, %v947, 0
      %v1004 = vsel %vm206, %v948, 0
      %v1007 = vsel %vm206, %v949, 0
      %v1010 = vsel %vm206, %v950, 0
      %v1013 = vsel %vm206, %v951, 0
      %v1016 = vsel %vm206, %v952, 0
      %v1019 = vsel %vm206, %v953, 0
      %v1022 = vsel %vm206, %v954, 0
      %v1025 = vsel %vm206, %v955, 0
      %v1028 = vsel %vm206, %v956, 0
      %v1031 = vsel %vm206, %v957, 0
      %v1034 = vsel %vm206, %v958, 0
      %v1037 = vsel %vm206, %v959, 0
      %v1040 = vsel %vm206, %v960, 0
      %v1043 = vsel %vm206, %v961, 0
      %v1046 = vsel %vm206, %v962, 0
      %v1049 = vsel %vm206, %v963, 0
      %v1052 = vsel %vm206, %v964, 0
      %v1055 = vsel %vm206, %v965, 0
      %v1058 = vsel %vm206, %v966, 0
      %v1061 = vsel %vm206, %v967, 0
      %v1064 = vsel %vm206, %v968, 0
      %v1067 = vsel %vm206, %v969, 0
      %1069 = vmatprep.subr.mxu0 0.0
      %1070 = vmatpush1.msra.mxu0 %v171
      %1071 = vmatprep.subr.mxu0 0.0
      %1072 = vmatpush1.msra.mxu0 %v308
      %1073 = vmatprep.subr.mxu0 0.0
      %1074 = vmatpush1.msra.mxu0 0.0
      %1075 = vmatprep.subr.mxu0 0.0
      %1076 = vmatpush1.msra.mxu0 0.0
      %1077 = vmatprep.subr.mxu0 0.0
      %1078 = vmatpush1.msra.mxu0 0.0
      %1079 = vmatprep.subr.mxu0 0.0
      %1080 = vmatpush1.msra.mxu0 0.0
      %1081 = vmatprep.subr.mxu0 0.0
      %1082 = vmatpush1.msra.mxu0 0.0
      %1083 = vmatprep.subr.mxu0 0.0
      %1084 = vmatpush1.msra.mxu0 0.0
      %1085 = vmatprep.subr.mxu0 0.0
      %1086 = vmatpush1.msra.mxu0 0.0
      %1087 = vmatprep.subr.mxu0 0.0
      %1088 = vmatpush1.msra.mxu0 0.0
      %1089 = vmatprep.subr.mxu0 0.0
      %1090 = vmatpush1.msra.mxu0 0.0
      %1091 = vmatprep.subr.mxu0 0.0
      %1092 = vmatpush1.msra.mxu0 0.0
      %1093 = vmatprep.subr.mxu0 0.0
      %1094 = vmatpush1.msra.mxu0 0.0
      %1095 = vmatprep.subr.mxu0 0.0
      %1096 = vmatpush1.msra.mxu0 0.0
      %1097 = vmatprep.subr.mxu0 0.0
      %1098 = vmatpush1.msra.mxu0 0.0
      %1099 = vmatprep.subr.mxu0 0.0
      %1100 = vmatpush1.msra.mxu0 0.0
      %1101 = vmatprep.subr.mxu0 0.0
      %1102 = vmatpush1.msra.mxu0 0.0
      %1103 = vmatprep.subr.mxu0 0.0
      %1104 = vmatpush1.msra.mxu0 0.0
      %1105 = vmatprep.subr.mxu0 0.0
      %1106 = vmatpush1.msra.mxu0 0.0
      %1107 = vmatprep.subr.mxu0 0.0
      %1108 = vmatpush1.msra.mxu0 0.0
      %1109 = vmatprep.subr.mxu0 0.0
      %1110 = vmatpush1.msra.mxu0 0.0
      %1111 = vmatprep.subr.mxu0 0.0
      %1112 = vmatpush1.msra.mxu0 0.0
      %1113 = vmatprep.subr.mxu0 0.0
      %1114 = vmatpush1.msra.mxu0 0.0
      %1115 = vmatprep.subr.mxu0 0.0
      %1116 = vmatpush1.msra.mxu0 0.0
      %1117 = vmatprep.subr.mxu0 0.0
      %1118 = vmatpush1.msra.mxu0 0.0
      %1119 = vmatprep.subr.mxu0 0.0
      %1120 = vmatpush1.msra.mxu0 0.0
      %1121 = vmatprep.subr.mxu0 0.0
      %1122 = vmatpush1.msra.mxu0 0.0
      %1123 = vmatprep.subr.mxu0 0.0
      %1124 = vmatpush1.msra.mxu0 0.0
      %1125 = vmatprep.subr.mxu0 0.0
      %1126 = vmatpush1.msra.mxu0 0.0
      %1127 = vmatprep.subr.mxu0 0.0
      %1128 = vmatpush1.msra.mxu0 0.0
      %1129 = vmatprep.subr.mxu0 0.0
      %1130 = vmatpush1.msra.mxu0 0.0
      %1131 = vmatprep.subr.mxu0 0.0
      %1132 = vmatpush1.msra.mxu0 0.0
      %1133 = vmatprep.mubr.f32.mxu0 0.0
      %1134 = vmatmul.mubr.f32.gmra.mrb[0].mxu0 %v971
      %v1135 = vpop.f32.mrb[0].mxu0
      %v1136 = vadd.f32 0.0, %v1135
      %v1137 = vpop.f32.mrb[0].mxu0
      %1138 = vmatprep.mubr.f32.mxu0 0.0
      %1139 = vmatmul.mubr.f32.gmra.mrb[0].mxu0 %v974
      %v1140 = vpop.f32.mrb[0].mxu0
      %v1141 = vadd.f32 0.0, %v1140
      %v1142 = vpop.f32.mrb[0].mxu0
      %1143 = vmatprep.mubr.f32.mxu0 0.0
      %1144 = vmatmul.mubr.f32.gmra.mrb[0].mxu0 %v977
      %v1145 = vpop.f32.mrb[0].mxu0
      %v1146 = vadd.f32 0.0, %v1145
      %v1147 = vpop.f32.mrb[0].mxu0
      %1148 = vmatprep.mubr.f32.mxu0 0.0
      %1149 = vmatmul.mubr.f32.gmra.mrb[0].mxu0 %v980
      %v1150 = vpop.f32.mrb[0].mxu0
      %v1151 = vadd.f32 0.0, %v1150
      %v1152 = vpop.f32.mrb[0].mxu0
      %1153 = vmatprep.mubr.f32.mxu0 0.0
      %1154 = vmatmul.mubr.f32.gmra.mrb[0].mxu0 %v983
      %v1155 = vpop.f32.mrb[0].mxu0
      %v1156 = vadd.f32 0.0, %v1155
      %v1157 = vpop.f32.mrb[0].mxu0
      %1158 = vmatprep.mubr.f32.mxu0 0.0
      %1159 = vmatmul.mubr.f32.gmra.mrb[0].mxu0 %v986
      %v1160 = vpop.f32.mrb[0].mxu0
      %v1161 = vadd.f32 0.0, %v1160
      %v1162 = vpop.f32.mrb[0].mxu0
      %1163 = vmatprep.mubr.f32.mxu0 0.0
      %1164 = vmatmul.mubr.f32.gmra.mrb[0].mxu0 %v989
      %v1165 = vpop.f32.mrb[0].mxu0
      %v1166 = vadd.f32 0.0, %v1165
      %v1167 = vpop.f32.mrb[0].mxu0
      %1168 = vmatprep.mubr.f32.mxu0 0.0
      %1169 = vmatmul.mubr.f32.gmra.mrb[0].mxu0 %v992
      %v1170 = vpop.f32.mrb[0].mxu0
      %v1171 = vadd.f32 0.0, %v1170
      %v1172 = vpop.f32.mrb[0].mxu0
      %1173 = vmatprep.mubr.f32.mxu0 0.0
      %1174 = vmatmul.mubr.f32.gmra.mrb[0].mxu0 %v995
      %v1175 = vpop.f32.mrb[0].mxu0
      %v1176 = vadd.f32 0.0, %v1175
      %v1177 = vpop.f32.mrb[0].mxu0
      %1178 = vmatprep.mubr.f32.mxu0 0.0
      %1179 = vmatmul.mubr.f32.gmra.mrb[0].mxu0 %v998
      %v1180 = vpop.f32.mrb[0].mxu0
      %v1181 = vadd.f32 0.0, %v1180
      %v1182 = vpop.f32.mrb[0].mxu0
      %1183 = vmatprep.mubr.f32.mxu0 0.0
      %1184 = vmatmul.mubr.f32.gmra.mrb[0].mxu0 %v1001
      %v1185 = vpop.f32.mrb[0].mxu0
      %v1186 = vadd.f32 0.0, %v1185
      %v1187 = vpop.f32.mrb[0].mxu0
      %1188 = vmatprep.mubr.f32.mxu0 0.0
      %1189 = vmatmul.mubr.f32.gmra.mrb[0].mxu0 %v1004
      %v1190 = vpop.f32.mrb[0].mxu0
      %v1191 = vadd.f32 0.0, %v1190
      %v1192 = vpop.f32.mrb[0].mxu0
      %1193 = vmatprep.mubr.f32.mxu0 0.0
      %1194 = vmatmul.mubr.f32.gmra.mrb[0].mxu0 %v1007
      %v1195 = vpop.f32.mrb[0].mxu0
      %v1196 = vadd.f32 0.0, %v1195
      %v1197 = vpop.f32.mrb[0].mxu0
      %1198 = vmatprep.mubr.f32.mxu0 0.0
      %1199 = vmatmul.mubr.f32.gmra.mrb[0].mxu0 %v1010
      %v1200 = vpop.f32.mrb[0].mxu0
      %v1201 = vadd.f32 0.0, %v1200
      %v1202 = vpop.f32.mrb[0].mxu0
      %1203 = vmatprep.mubr.f32.mxu0 0.0
      %1204 = vmatmul.mubr.f32.gmra.mrb[0].mxu0 %v1013
      %v1205 = vpop.f32.mrb[0].mxu0
      %v1206 = vadd.f32 0.0, %v1205
      %v1207 = vpop.f32.mrb[0].mxu0
      %1208 = vmatprep.mubr.f32.mxu0 0.0
      %1209 = vmatmul.mubr.f32.gmra.mrb[0].mxu0 %v1016
      %v1210 = vpop.f32.mrb[0].mxu0
      %v1211 = vadd.f32 0.0, %v1210
      %v1212 = vpop.f32.mrb[0].mxu0
      %1213 = vmatprep.mubr.f32.mxu0 0.0
      %1214 = vmatmul.mubr.f32.gmra.mrb[0].mxu0 %v1019
      %v1215 = vpop.f32.mrb[0].mxu0
      %v1216 = vadd.f32 0.0, %v1215
      %v1217 = vpop.f32.mrb[0].mxu0
      %1218 = vmatprep.mubr.f32.mxu0 0.0
      %1219 = vmatmul.mubr.f32.gmra.mrb[0].mxu0 %v1022
      %v1220 = vpop.f32.mrb[0].mxu0
      %v1221 = vadd.f32 0.0, %v1220
      %v1222 = vpop.f32.mrb[0].mxu0
      %1223 = vmatprep.mubr.f32.mxu0 0.0
      %1224 = vmatmul.mubr.f32.gmra.mrb[0].mxu0 %v1025
      %v1225 = vpop.f32.mrb[0].mxu0
      %v1226 = vadd.f32 0.0, %v1225
      %v1227 = vpop.f32.mrb[0].mxu0
      %1228 = vmatprep.mubr.f32.mxu0 0.0
      %1229 = vmatmul.mubr.f32.gmra.mrb[0].mxu0 %v1028
      %v1230 = vpop.f32.mrb[0].mxu0
      %v1231 = vadd.f32 0.0, %v1230
      %v1232 = vpop.f32.mrb[0].mxu0
      %1233 = vmatprep.mubr.f32.mxu0 0.0
      %1234 = vmatmul.mubr.f32.gmra.mrb[0].mxu0 %v1031
      %v1235 = vpop.f32.mrb[0].mxu0
      %v1236 = vadd.f32 0.0, %v1235
      %v1237 = vpop.f32.mrb[0].mxu0
      %1238 = vmatprep.mubr.f32.mxu0 0.0
      %1239 = vmatmul.mubr.f32.gmra.mrb[0].mxu0 %v1034
      %v1240 = vpop.f32.mrb[0].mxu0
      %v1241 = vadd.f32 0.0, %v1240
      %v1242 = vpop.f32.mrb[0].mxu0
      %1243 = vmatprep.mubr.f32.mxu0 0.0
      %1244 = vmatmul.mubr.f32.gmra.mrb[0].mxu0 %v1037
      %v1245 = vpop.f32.mrb[0].mxu0
      %v1246 = vadd.f32 0.0, %v1245
      %v1247 = vpop.f32.mrb[0].mxu0
      %1248 = vmatprep.mubr.f32.mxu0 0.0
      %1249 = vmatmul.mubr.f32.gmra.mrb[0].mxu0 %v1040
      %v1250 = vpop.f32.mrb[0].mxu0
      %v1251 = vadd.f32 0.0, %v1250
      %v1252 = vpop.f32.mrb[0].mxu0
      %1253 = vmatprep.mubr.f32.mxu0 0.0
      %1254 = vmatmul.mubr.f32.gmra.mrb[0].mxu0 %v1043
      %v1255 = vpop.f32.mrb[0].mxu0
      %v1256 = vadd.f32 0.0, %v1255
      %v1257 = vpop.f32.mrb[0].mxu0
      %1258 = vmatprep.mubr.f32.mxu0 0.0
      %1259 = vmatmul.mubr.f32.gmra.mrb[0].mxu0 %v1046
      %v1260 = vpop.f32.mrb[0].mxu0
      %v1261 = vadd.f32 0.0, %v1260
      %v1262 = vpop.f32.mrb[0].mxu0
      %1263 = vmatprep.mubr.f32.mxu0 0.0
      %1264 = vmatmul.mubr.f32.gmra.mrb[0].mxu0 %v1049
      %v1265 = vpop.f32.mrb[0].mxu0
      %v1266 = vadd.f32 0.0, %v1265
      %v1267 = vpop.f32.mrb[0].mxu0
      %1268 = vmatprep.mubr.f32.mxu0 0.0
      %1269 = vmatmul.mubr.f32.gmra.mrb[0].mxu0 %v1052
      %v1270 = vpop.f32.mrb[0].mxu0
      %v1271 = vadd.f32 0.0, %v1270
      %v1272 = vpop.f32.mrb[0].mxu0
      %1273 = vmatprep.mubr.f32.mxu0 0.0
      %1274 = vmatmul.mubr.f32.gmra.mrb[0].mxu0 %v1055
      %v1275 = vpop.f32.mrb[0].mxu0
      %v1276 = vadd.f32 0.0, %v1275
      %v1277 = vpop.f32.mrb[0].mxu0
      %1278 = vmatprep.mubr.f32.mxu0 0.0
      %1279 = vmatmul.mubr.f32.gmra.mrb[0].mxu0 %v1058
      %v1280 = vpop.f32.mrb[0].mxu0
      %v1281 = vadd.f32 0.0, %v1280
      %v1282 = vpop.f32.mrb[0].mxu0
      %1283 = vmatprep.mubr.f32.mxu0 0.0
      %1284 = vmatmul.mubr.f32.gmra.mrb[0].mxu0 %v1061
      %v1285 = vpop.f32.mrb[0].mxu0
      %v1286 = vadd.f32 0.0, %v1285
      %v1287 = vpop.f32.mrb[0].mxu0
      %1288 = vmatprep.mubr.f32.mxu0 0.0
      %1289 = vmatmul.mubr.f32.gmra.mrb[0].mxu0 %v1064
      %v1290 = vpop.f32.mrb[0].mxu0
      %v1291 = vadd.f32 0.0, %v1290
      %v1292 = vpop.f32.mrb[0].mxu0
      %1293 = vmatprep.mubr.f32.mxu0 0.0
      %1294 = vmatmul.mubr.f32.gmra.mrb[0].mxu0 %v1067
      %v1295 = vpop.f32.mrb[0].mxu0
      %v1296 = vadd.f32 0.0, %v1295
      %v1297 = vpop.f32.mrb[0].mxu0
      %1298 = vdwg.mxu0
      %v1299 = vmax.f32 %v903, %v1136
      %v1300 = vmax.f32 %v904, %v1141
      %v1301 = vmax.f32 %v905, %v1146
      %v1302 = vmax.f32 %v906, %v1151
      %v1303 = vmax.f32 %v907, %v1156
      %v1304 = vmax.f32 %v908, %v1161
      %v1305 = vmax.f32 %v909, %v1166
      %v1306 = vmax.f32 %v910, %v1171
      %v1307 = vmax.f32 %v911, %v1176
      %v1308 = vmax.f32 %v912, %v1181
      %v1309 = vmax.f32 %v913, %v1186
      %v1310 = vmax.f32 %v914, %v1191
      %v1311 = vmax.f32 %v915, %v1196
      %v1312 = vmax.f32 %v916, %v1201
      %v1313 = vmax.f32 %v917, %v1206
      %v1314 = vmax.f32 %v918, %v1211
      %v1315 = vmax.f32 %v919, %v1216
      %v1316 = vmax.f32 %v920, %v1221
      %v1317 = vmax.f32 %v921, %v1226
      %v1318 = vmax.f32 %v922, %v1231
      %v1319 = vmax.f32 %v923, %v1236
      %v1320 = vmax.f32 %v924, %v1241
      %v1321 = vmax.f32 %v925, %v1246
      %v1322 = vmax.f32 %v926, %v1251
      %v1323 = vmax.f32 %v927, %v1256
      %v1324 = vmax.f32 %v928, %v1261
      %v1325 = vmax.f32 %v929, %v1266
      %v1326 = vmax.f32 %v930, %v1271
      %v1327 = vmax.f32 %v931, %v1276
      %v1328 = vmax.f32 %v932, %v1281
      %v1329 = vmax.f32 %v933, %v1286
      %v1330 = vmax.f32 %v934, %v1291
      %v1331 = vmax.f32 %v935, %v1296
      %s1332 = scalar_lea.vmem %s165, 792
      %v1333 = vld [vmem:[%s1332] sm:$0xff]
      %v1334 = vld [vmem:[%s1332 + $0x8] sm:$0xff]
      %v1335 = vld [vmem:[%s1332 + $0x10] sm:$0xff]
      %v1336 = vld [vmem:[%s1332 + $0x18] sm:$0xff]
      %v1337 = vld [vmem:[%s1332 + $0x20] sm:$0xff]
      %v1338 = vld [vmem:[%s1332 + $0x28] sm:$0xff]
      %v1339 = vld [vmem:[%s1332 + $0x30] sm:$0xff]
      %v1340 = vld [vmem:[%s1332 + $0x38] sm:$0xff]
      %v1341 = vld [vmem:[%s1332 + $0x40] sm:$0xff]
      %v1342 = vld [vmem:[%s1332 + $0x48] sm:$0xff]
      %v1343 = vld [vmem:[%s1332 + $0x50] sm:$0xff]
      %v1344 = vld [vmem:[%s1332 + $0x58] sm:$0xff]
      %v1345 = vld [vmem:[%s1332 + $0x60] sm:$0xff]
      %v1346 = vld [vmem:[%s1332 + $0x68] sm:$0xff]
      %v1347 = vld [vmem:[%s1332 + $0x70] sm:$0xff]
      %v1348 = vld [vmem:[%s1332 + $0x78] sm:$0xff]
      %v1349 = vld [vmem:[%s1332 + $0x80] sm:$0xff]
      %v1350 = vld [vmem:[%s1332 + $0x88] sm:$0xff]
      %v1351 = vld [vmem:[%s1332 + $0x90] sm:$0xff]
      %v1352 = vld [vmem:[%s1332 + $0x98] sm:$0xff]
      %v1353 = vld [vmem:[%s1332 + $0xa0] sm:$0xff]
      %v1354 = vld [vmem:[%s1332 + $0xa8] sm:$0xff]
      %v1355 = vld [vmem:[%s1332 + $0xb0] sm:$0xff]
      %v1356 = vld [vmem:[%s1332 + $0xb8] sm:$0xff]
      %v1357 = vld [vmem:[%s1332 + $0xc0] sm:$0xff]
      %v1358 = vld [vmem:[%s1332 + $0xc8] sm:$0xff]
      %v1359 = vld [vmem:[%s1332 + $0xd0] sm:$0xff]
      %v1360 = vld [vmem:[%s1332 + $0xd8] sm:$0xff]
      %v1361 = vld [vmem:[%s1332 + $0xe0] sm:$0xff]
      %v1362 = vld [vmem:[%s1332 + $0xe8] sm:$0xff]
      %v1363 = vld [vmem:[%s1332 + $0xf0] sm:$0xff]
      %v1364 = vld [vmem:[%s1332 + $0xf8] sm:$0xff]
      %v1365 = vld [vmem:[%s1332 + $0x100] sm:$0xf]
      %v1367 = vsel %vm206, %v1333, 0
      %v1370 = vsel %vm206, %v1334, 0
      %v1373 = vsel %vm206, %v1335, 0
      %v1376 = vsel %vm206, %v1336, 0
      %v1379 = vsel %vm206, %v1337, 0
      %v1382 = vsel %vm206, %v1338, 0
      %v1385 = vsel %vm206, %v1339, 0
      %v1388 = vsel %vm206, %v1340, 0
      %v1391 = vsel %vm206, %v1341, 0
      %v1394 = vsel %vm206, %v1342, 0
      %v1397 = vsel %vm206, %v1343, 0
      %v1400 = vsel %vm206, %v1344, 0
      %v1403 = vsel %vm206, %v1345, 0
      %v1406 = vsel %vm206, %v1346, 0
      %v1409 = vsel %vm206, %v1347, 0
      %v1412 = vsel %vm206, %v1348, 0
      %v1415 = vsel %vm206, %v1349, 0
      %v1418 = vsel %vm206, %v1350, 0
      %v1421 = vsel %vm206, %v1351, 0
      %v1424 = vsel %vm206, %v1352, 0
      %v1427 = vsel %vm206, %v1353, 0
      %v1430 = vsel %vm206, %v1354, 0
      %v1433 = vsel %vm206, %v1355, 0
      %v1436 = vsel %vm206, %v1356, 0
      %v1439 = vsel %vm206, %v1357, 0
      %v1442 = vsel %vm206, %v1358, 0
      %v1445 = vsel %vm206, %v1359, 0
      %v1448 = vsel %vm206, %v1360, 0
      %v1451 = vsel %vm206, %v1361, 0
      %v1454 = vsel %vm206, %v1362, 0
      %v1457 = vsel %vm206, %v1363, 0
      %v1460 = vsel %vm206, %v1364, 0
      %v1463 = vsel %vm206, %v1365, 0
      %1465 = vmatprep.subr.mxu0 0.0
      %1466 = vmatpush1.msra.mxu0 %v171
      %1467 = vmatprep.subr.mxu0 0.0
      %1468 = vmatpush1.msra.mxu0 %v308
      %1469 = vmatprep.subr.mxu0 0.0
      %1470 = vmatpush1.msra.mxu0 0.0
      %1471 = vmatprep.subr.mxu0 0.0
      %1472 = vmatpush1.msra.mxu0 0.0
      %1473 = vmatprep.subr.mxu0 0.0
      %1474 = vmatpush1.msra.mxu0 0.0
      %1475 = vmatprep.subr.mxu0 0.0
      %1476 = vmatpush1.msra.mxu0 0.0
      %1477 = vmatprep.subr.mxu0 0.0
      %1478 = vmatpush1.msra.mxu0 0.0
      %1479 = vmatprep.subr.mxu0 0.0
      %1480 = vmatpush1.msra.mxu0 0.0
      %1481 = vmatprep.subr.mxu0 0.0
      %1482 = vmatpush1.msra.mxu0 0.0
      %1483 = vmatprep.subr.mxu0 0.0
      %1484 = vmatpush1.msra.mxu0 0.0
      %1485 = vmatprep.subr.mxu0 0.0
      %1486 = vmatpush1.msra.mxu0 0.0
      %1487 = vmatprep.subr.mxu0 0.0
      %1488 = vmatpush1.msra.mxu0 0.0
      %1489 = vmatprep.subr.mxu0 0.0
      %1490 = vmatpush1.msra.mxu0 0.0
      %1491 = vmatprep.subr.mxu0 0.0
      %1492 = vmatpush1.msra.mxu0 0.0
      %1493 = vmatprep.subr.mxu0 0.0
      %1494 = vmatpush1.msra.mxu0 0.0
      %1495 = vmatprep.subr.mxu0 0.0
      %1496 = vmatpush1.msra.mxu0 0.0
      %1497 = vmatprep.subr.mxu0 0.0
      %1498 = vmatpush1.msra.mxu0 0.0
      %1499 = vmatprep.subr.mxu0 0.0
      %1500 = vmatpush1.msra.mxu0 0.0
      %1501 = vmatprep.subr.mxu0 0.0
      %1502 = vmatpush1.msra.mxu0 0.0
      %1503 = vmatprep.subr.mxu0 0.0
      %1504 = vmatpush1.msra.mxu0 0.0
      %1505 = vmatprep.subr.mxu0 0.0
      %1506 = vmatpush1.msra.mxu0 0.0
      %1507 = vmatprep.subr.mxu0 0.0
      %1508 = vmatpush1.msra.mxu0 0.0
      %1509 = vmatprep.subr.mxu0 0.0
      %1510 = vmatpush1.msra.mxu0 0.0
      %1511 = vmatprep.subr.mxu0 0.0
      %1512 = vmatpush1.msra.mxu0 0.0
      %1513 = vmatprep.subr.mxu0 0.0
      %1514 = vmatpush1.msra.mxu0 0.0
      %1515 = vmatprep.subr.mxu0 0.0
      %1516 = vmatpush1.msra.mxu0 0.0
      %1517 = vmatprep.subr.mxu0 0.0
      %1518 = vmatpush1.msra.mxu0 0.0
      %1519 = vmatprep.subr.mxu0 0.0
      %1520 = vmatpush1.msra.mxu0 0.0
      %1521 = vmatprep.subr.mxu0 0.0
      %1522 = vmatpush1.msra.mxu0 0.0
      %1523 = vmatprep.subr.mxu0 0.0
      %1524 = vmatpush1.msra.mxu0 0.0
      %1525 = vmatprep.subr.mxu0 0.0
      %1526 = vmatpush1.msra.mxu0 0.0
      %1527 = vmatprep.subr.mxu0 0.0
      %1528 = vmatpush1.msra.mxu0 0.0
      %1529 = vmatprep.mubr.f32.mxu0 0.0
      %1530 = vmatmul.mubr.f32.gmra.mrb[0].mxu0 %v1367
      %v1531 = vpop.f32.mrb[0].mxu0
      %v1532 = vadd.f32 0.0, %v1531
      %v1533 = vpop.f32.mrb[0].mxu0
      %1534 = vmatprep.mubr.f32.mxu0 0.0
      %1535 = vmatmul.mubr.f32.gmra.mrb[0].mxu0 %v1370
      %v1536 = vpop.f32.mrb[0].mxu0
      %v1537 = vadd.f32 0.0, %v1536
      %v1538 = vpop.f32.mrb[0].mxu0
      %1539 = vmatprep.mubr.f32.mxu0 0.0
      %1540 = vmatmul.mubr.f32.gmra.mrb[0].mxu0 %v1373
      %v1541 = vpop.f32.mrb[0].mxu0
      %v1542 = vadd.f32 0.0, %v1541
      %v1543 = vpop.f32.mrb[0].mxu0
      %1544 = vmatprep.mubr.f32.mxu0 0.0
      %1545 = vmatmul.mubr.f32.gmra.mrb[0].mxu0 %v1376
      %v1546 = vpop.f32.mrb[0].mxu0
      %v1547 = vadd.f32 0.0, %v1546
      %v1548 = vpop.f32.mrb[0].mxu0
      %1549 = vmatprep.mubr.f32.mxu0 0.0
      %1550 = vmatmul.mubr.f32.gmra.mrb[0].mxu0 %v1379
      %v1551 = vpop.f32.mrb[0].mxu0
      %v1552 = vadd.f32 0.0, %v1551
      %v1553 = vpop.f32.mrb[0].mxu0
      %1554 = vmatprep.mubr.f32.mxu0 0.0
      %1555 = vmatmul.mubr.f32.gmra.mrb[0].mxu0 %v1382
      %v1556 = vpop.f32.mrb[0].mxu0
      %v1557 = vadd.f32 0.0, %v1556
      %v1558 = vpop.f32.mrb[0].mxu0
      %1559 = vmatprep.mubr.f32.mxu0 0.0
      %1560 = vmatmul.mubr.f32.gmra.mrb[0].mxu0 %v1385
      %v1561 = vpop.f32.mrb[0].mxu0
      %v1562 = vadd.f32 0.0, %v1561
      %v1563 = vpop.f32.mrb[0].mxu0
      %1564 = vmatprep.mubr.f32.mxu0 0.0
      %1565 = vmatmul.mubr.f32.gmra.mrb[0].mxu0 %v1388
      %v1566 = vpop.f32.mrb[0].mxu0
      %v1567 = vadd.f32 0.0, %v1566
      %v1568 = vpop.f32.mrb[0].mxu0
      %1569 = vmatprep.mubr.f32.mxu0 0.0
      %1570 = vmatmul.mubr.f32.gmra.mrb[0].mxu0 %v1391
      %v1571 = vpop.f32.mrb[0].mxu0
      %v1572 = vadd.f32 0.0, %v1571
      %v1573 = vpop.f32.mrb[0].mxu0
      %1574 = vmatprep.mubr.f32.mxu0 0.0
      %1575 = vmatmul.mubr.f32.gmra.mrb[0].mxu0 %v1394
      %v1576 = vpop.f32.mrb[0].mxu0
      %v1577 = vadd.f32 0.0, %v1576
      %v1578 = vpop.f32.mrb[0].mxu0
      %1579 = vmatprep.mubr.f32.mxu0 0.0
      %1580 = vmatmul.mubr.f32.gmra.mrb[0].mxu0 %v1397
      %v1581 = vpop.f32.mrb[0].mxu0
      %v1582 = vadd.f32 0.0, %v1581
      %v1583 = vpop.f32.mrb[0].mxu0
      %1584 = vmatprep.mubr.f32.mxu0 0.0
      %1585 = vmatmul.mubr.f32.gmra.mrb[0].mxu0 %v1400
      %v1586 = vpop.f32.mrb[0].mxu0
      %v1587 = vadd.f32 0.0, %v1586
      %v1588 = vpop.f32.mrb[0].mxu0
      %1589 = vmatprep.mubr.f32.mxu0 0.0
      %1590 = vmatmul.mubr.f32.gmra.mrb[0].mxu0 %v1403
      %v1591 = vpop.f32.mrb[0].mxu0
      %v1592 = vadd.f32 0.0, %v1591
      %v1593 = vpop.f32.mrb[0].mxu0
      %1594 = vmatprep.mubr.f32.mxu0 0.0
      %1595 = vmatmul.mubr.f32.gmra.mrb[0].mxu0 %v1406
      %v1596 = vpop.f32.mrb[0].mxu0
      %v1597 = vadd.f32 0.0, %v1596
      %v1598 = vpop.f32.mrb[0].mxu0
      %1599 = vmatprep.mubr.f32.mxu0 0.0
      %1600 = vmatmul.mubr.f32.gmra.mrb[0].mxu0 %v1409
      %v1601 = vpop.f32.mrb[0].mxu0
      %v1602 = vadd.f32 0.0, %v1601
      %v1603 = vpop.f32.mrb[0].mxu0
      %1604 = vmatprep.mubr.f32.mxu0 0.0
      %1605 = vmatmul.mubr.f32.gmra.mrb[0].mxu0 %v1412
      %v1606 = vpop.f32.mrb[0].mxu0
      %v1607 = vadd.f32 0.0, %v1606
      %v1608 = vpop.f32.mrb[0].mxu0
      %1609 = vmatprep.mubr.f32.mxu0 0.0
      %1610 = vmatmul.mubr.f32.gmra.mrb[0].mxu0 %v1415
      %v1611 = vpop.f32.mrb[0].mxu0
      %v1612 = vadd.f32 0.0, %v1611
      %v1613 = vpop.f32.mrb[0].mxu0
      %1614 = vmatprep.mubr.f32.mxu0 0.0
      %1615 = vmatmul.mubr.f32.gmra.mrb[0].mxu0 %v1418
      %v1616 = vpop.f32.mrb[0].mxu0
      %v1617 = vadd.f32 0.0, %v1616
      %v1618 = vpop.f32.mrb[0].mxu0
      %1619 = vmatprep.mubr.f32.mxu0 0.0
      %1620 = vmatmul.mubr.f32.gmra.mrb[0].mxu0 %v1421
      %v1621 = vpop.f32.mrb[0].mxu0
      %v1622 = vadd.f32 0.0, %v1621
      %v1623 = vpop.f32.mrb[0].mxu0
      %1624 = vmatprep.mubr.f32.mxu0 0.0
      %1625 = vmatmul.mubr.f32.gmra.mrb[0].mxu0 %v1424
      %v1626 = vpop.f32.mrb[0].mxu0
      %v1627 = vadd.f32 0.0, %v1626
      %v1628 = vpop.f32.mrb[0].mxu0
      %1629 = vmatprep.mubr.f32.mxu0 0.0
      %1630 = vmatmul.mubr.f32.gmra.mrb[0].mxu0 %v1427
      %v1631 = vpop.f32.mrb[0].mxu0
      %v1632 = vadd.f32 0.0, %v1631
      %v1633 = vpop.f32.mrb[0].mxu0
      %1634 = vmatprep.mubr.f32.mxu0 0.0
      %1635 = vmatmul.mubr.f32.gmra.mrb[0].mxu0 %v1430
      %v1636 = vpop.f32.mrb[0].mxu0
      %v1637 = vadd.f32 0.0, %v1636
      %v1638 = vpop.f32.mrb[0].mxu0
      %1639 = vmatprep.mubr.f32.mxu0 0.0
      %1640 = vmatmul.mubr.f32.gmra.mrb[0].mxu0 %v1433
      %v1641 = vpop.f32.mrb[0].mxu0
      %v1642 = vadd.f32 0.0, %v1641
      %v1643 = vpop.f32.mrb[0].mxu0
      %1644 = vmatprep.mubr.f32.mxu0 0.0
      %1645 = vmatmul.mubr.f32.gmra.mrb[0].mxu0 %v1436
      %v1646 = vpop.f32.mrb[0].mxu0
      %v1647 = vadd.f32 0.0, %v1646
      %v1648 = vpop.f32.mrb[0].mxu0
      %1649 = vmatprep.mubr.f32.mxu0 0.0
      %1650 = vmatmul.mubr.f32.gmra.mrb[0].mxu0 %v1439
      %v1651 = vpop.f32.mrb[0].mxu0
      %v1652 = vadd.f32 0.0, %v1651
      %v1653 = vpop.f32.mrb[0].mxu0
      %1654 = vmatprep.mubr.f32.mxu0 0.0
      %1655 = vmatmul.mubr.f32.gmra.mrb[0].mxu0 %v1442
      %v1656 = vpop.f32.mrb[0].mxu0
      %v1657 = vadd.f32 0.0, %v1656
      %v1658 = vpop.f32.mrb[0].mxu0
      %1659 = vmatprep.mubr.f32.mxu0 0.0
      %1660 = vmatmul.mubr.f32.gmra.mrb[0].mxu0 %v1445
      %v1661 = vpop.f32.mrb[0].mxu0
      %v1662 = vadd.f32 0.0, %v1661
      %v1663 = vpop.f32.mrb[0].mxu0
      %1664 = vmatprep.mubr.f32.mxu0 0.0
      %1665 = vmatmul.mubr.f32.gmra.mrb[0].mxu0 %v1448
      %v1666 = vpop.f32.mrb[0].mxu0
      %v1667 = vadd.f32 0.0, %v1666
      %v1668 = vpop.f32.mrb[0].mxu0
      %1669 = vmatprep.mubr.f32.mxu0 0.0
      %1670 = vmatmul.mubr.f32.gmra.mrb[0].mxu0 %v1451
      %v1671 = vpop.f32.mrb[0].mxu0
      %v1672 = vadd.f32 0.0, %v1671
      %v1673 = vpop.f32.mrb[0].mxu0
      %1674 = vmatprep.mubr.f32.mxu0 0.0
      %1675 = vmatmul.mubr.f32.gmra.mrb[0].mxu0 %v1454
      %v1676 = vpop.f32.mrb[0].mxu0
      %v1677 = vadd.f32 0.0, %v1676
      %v1678 = vpop.f32.mrb[0].mxu0
      %1679 = vmatprep.mubr.f32.mxu0 0.0
      %1680 = vmatmul.mubr.f32.gmra.mrb[0].mxu0 %v1457
      %v1681 = vpop.f32.mrb[0].mxu0
      %v1682 = vadd.f32 0.0, %v1681
      %v1683 = vpop.f32.mrb[0].mxu0
      %1684 = vmatprep.mubr.f32.mxu0 0.0
      %1685 = vmatmul.mubr.f32.gmra.mrb[0].mxu0 %v1460
      %v1686 = vpop.f32.mrb[0].mxu0
      %v1687 = vadd.f32 0.0, %v1686
      %v1688 = vpop.f32.mrb[0].mxu0
      %1689 = vmatprep.mubr.f32.mxu0 0.0
      %1690 = vmatmul.mubr.f32.gmra.mrb[0].mxu0 %v1463
      %v1691 = vpop.f32.mrb[0].mxu0
      %v1692 = vadd.f32 0.0, %v1691
      %v1693 = vpop.f32.mrb[0].mxu0
      %1694 = vdwg.mxu0
      %v1695 = vmax.f32 %v1299, %v1532
      %v1696 = vmax.f32 %v1300, %v1537
      %v1697 = vmax.f32 %v1301, %v1542
      %v1698 = vmax.f32 %v1302, %v1547
      %v1699 = vmax.f32 %v1303, %v1552
      %v1700 = vmax.f32 %v1304, %v1557
      %v1701 = vmax.f32 %v1305, %v1562
      %v1702 = vmax.f32 %v1306, %v1567
      %v1703 = vmax.f32 %v1307, %v1572
      %v1704 = vmax.f32 %v1308, %v1577
      %v1705 = vmax.f32 %v1309, %v1582
      %v1706 = vmax.f32 %v1310, %v1587
      %v1707 = vmax.f32 %v1311, %v1592
      %v1708 = vmax.f32 %v1312, %v1597
      %v1709 = vmax.f32 %v1313, %v1602
      %v1710 = vmax.f32 %v1314, %v1607
      %v1711 = vmax.f32 %v1315, %v1612
      %v1712 = vmax.f32 %v1316, %v1617
      %v1713 = vmax.f32 %v1317, %v1622
      %v1714 = vmax.f32 %v1318, %v1627
      %v1715 = vmax.f32 %v1319, %v1632
      %v1716 = vmax.f32 %v1320, %v1637
      %v1717 = vmax.f32 %v1321, %v1642
      %v1718 = vmax.f32 %v1322, %v1647
      %v1719 = vmax.f32 %v1323, %v1652
      %v1720 = vmax.f32 %v1324, %v1657
      %v1721 = vmax.f32 %v1325, %v1662
      %v1722 = vmax.f32 %v1326, %v1667
      %v1723 = vmax.f32 %v1327, %v1672
      %v1724 = vmax.f32 %v1328, %v1677
      %v1725 = vmax.f32 %v1329, %v1682
      %v1726 = vmax.f32 %v1330, %v1687
      %v1727 = vmax.f32 %v1331, %v1692
      %v1728 = vld [vmem:[%s2] sm:$0x1]
      %v1730 = vlaneseq
      %v1731 = vshrl.u32 %v1730, 7
      %v1732 = vsub.s32 0, %v1731
      %v1733 = vrot.slane %v1728, %v1732
      %v1735 = vadd.f32 %v1695, %v1733
      %v1736 = vadd.f32 %v1696, %v1733
      %v1737 = vadd.f32 %v1697, %v1733
      %v1738 = vadd.f32 %v1698, %v1733
      %v1739 = vadd.f32 %v1699, %v1733
      %v1740 = vadd.f32 %v1700, %v1733
      %v1741 = vadd.f32 %v1701, %v1733
      %v1742 = vadd.f32 %v1702, %v1733
      %v1743 = vadd.f32 %v1703, %v1733
      %v1744 = vadd.f32 %v1704, %v1733
      %v1745 = vadd.f32 %v1705, %v1733
      %v1746 = vadd.f32 %v1706, %v1733
      %v1747 = vadd.f32 %v1707, %v1733
      %v1748 = vadd.f32 %v1708, %v1733
      %v1749 = vadd.f32 %v1709, %v1733
      %v1750 = vadd.f32 %v1710, %v1733
      %v1751 = vadd.f32 %v1711, %v1733
      %v1752 = vadd.f32 %v1712, %v1733
      %v1753 = vadd.f32 %v1713, %v1733
      %v1754 = vadd.f32 %v1714, %v1733
      %v1755 = vadd.f32 %v1715, %v1733
      %v1756 = vadd.f32 %v1716, %v1733
      %v1757 = vadd.f32 %v1717, %v1733
      %v1758 = vadd.f32 %v1718, %v1733
      %v1759 = vadd.f32 %v1719, %v1733
      %v1760 = vadd.f32 %v1720, %v1733
      %v1761 = vadd.f32 %v1721, %v1733
      %v1762 = vadd.f32 %v1722, %v1733
      %v1763 = vadd.f32 %v1723, %v1733
      %v1764 = vadd.f32 %v1724, %v1733
      %v1765 = vadd.f32 %v1725, %v1733
      %v1766 = vadd.f32 %v1726, %v1733
      %v1767 = vadd.f32 %v1727, %v1733
      %vm1768 = vcmp.ge.f32.partialorder %v1735, 0.0
      %vm1769 = vcmp.ge.f32.partialorder %v1736, 0.0
      %vm1770 = vcmp.ge.f32.partialorder %v1737, 0.0
      %vm1771 = vcmp.ge.f32.partialorder %v1738, 0.0
      %vm1772 = vcmp.ge.f32.partialorder %v1739, 0.0
      %vm1773 = vcmp.ge.f32.partialorder %v1740, 0.0
      %vm1774 = vcmp.ge.f32.partialorder %v1741, 0.0
      %vm1775 = vcmp.ge.f32.partialorder %v1742, 0.0
      %vm1776 = vcmp.ge.f32.partialorder %v1743, 0.0
      %vm1777 = vcmp.ge.f32.partialorder %v1744, 0.0
      %vm1778 = vcmp.ge.f32.partialorder %v1745, 0.0
      %vm1779 = vcmp.ge.f32.partialorder %v1746, 0.0
      %vm1780 = vcmp.ge.f32.partialorder %v1747, 0.0
      %vm1781 = vcmp.ge.f32.partialorder %v1748, 0.0
      %vm1782 = vcmp.ge.f32.partialorder %v1749, 0.0
      %vm1783 = vcmp.ge.f32.partialorder %v1750, 0.0
      %vm1784 = vcmp.ge.f32.partialorder %v1751, 0.0
      %vm1785 = vcmp.ge.f32.partialorder %v1752, 0.0
      %vm1786 = vcmp.ge.f32.partialorder %v1753, 0.0
      %vm1787 = vcmp.ge.f32.partialorder %v1754, 0.0
      %vm1788 = vcmp.ge.f32.partialorder %v1755, 0.0
      %vm1789 = vcmp.ge.f32.partialorder %v1756, 0.0
      %vm1790 = vcmp.ge.f32.partialorder %v1757, 0.0
      %vm1791 = vcmp.ge.f32.partialorder %v1758, 0.0
      %vm1792 = vcmp.ge.f32.partialorder %v1759, 0.0
      %vm1793 = vcmp.ge.f32.partialorder %v1760, 0.0
      %vm1794 = vcmp.ge.f32.partialorder %v1761, 0.0
      %vm1795 = vcmp.ge.f32.partialorder %v1762, 0.0
      %vm1796 = vcmp.ge.f32.partialorder %v1763, 0.0
      %vm1797 = vcmp.ge.f32.partialorder %v1764, 0.0
      %vm1798 = vcmp.ge.f32.partialorder %v1765, 0.0
      %vm1799 = vcmp.ge.f32.partialorder %v1766, 0.0
      %vm1800 = vcmp.ge.f32.partialorder %v1767, 0.0
      %v1801 = vmul.f32 %v1735, 0.01
      %v1802 = vmul.f32 %v1736, 0.01
      %v1803 = vmul.f32 %v1737, 0.01
      %v1804 = vmul.f32 %v1738, 0.01
      %v1805 = vmul.f32 %v1739, 0.01
      %v1806 = vmul.f32 %v1740, 0.01
      %v1807 = vmul.f32 %v1741, 0.01
      %v1808 = vmul.f32 %v1742, 0.01
      %v1809 = vmul.f32 %v1743, 0.01
      %v1810 = vmul.f32 %v1744, 0.01
      %v1811 = vmul.f32 %v1745, 0.01
      %v1812 = vmul.f32 %v1746, 0.01
      %v1813 = vmul.f32 %v1747, 0.01
      %v1814 = vmul.f32 %v1748, 0.01
      %v1815 = vmul.f32 %v1749, 0.01
      %v1816 = vmul.f32 %v1750, 0.01
      %v1817 = vmul.f32 %v1751, 0.01
      %v1818 = vmul.f32 %v1752, 0.01
      %v1819 = vmul.f32 %v1753, 0.01
      %v1820 = vmul.f32 %v1754, 0.01
      %v1821 = vmul.f32 %v1755, 0.01
      %v1822 = vmul.f32 %v1756, 0.01
      %v1823 = vmul.f32 %v1757, 0.01
      %v1824 = vmul.f32 %v1758, 0.01
      %v1825 = vmul.f32 %v1759, 0.01
      %v1826 = vmul.f32 %v1760, 0.01
      %v1827 = vmul.f32 %v1761, 0.01
      %v1828 = vmul.f32 %v1762, 0.01
      %v1829 = vmul.f32 %v1763, 0.01
      %v1830 = vmul.f32 %v1764, 0.01
      %v1831 = vmul.f32 %v1765, 0.01
      %v1832 = vmul.f32 %v1766, 0.01
      %v1833 = vmul.f32 %v1767, 0.01
      %v1834 = vsel %vm1768, %v1735, %v1801
      %v1835 = vsel %vm1769, %v1736, %v1802
      %v1836 = vsel %vm1770, %v1737, %v1803
      %v1837 = vsel %vm1771, %v1738, %v1804
      %v1838 = vsel %vm1772, %v1739, %v1805
      %v1839 = vsel %vm1773, %v1740, %v1806
      %v1840 = vsel %vm1774, %v1741, %v1807
      %v1841 = vsel %vm1775, %v1742, %v1808
      %v1842 = vsel %vm1776, %v1743, %v1809
      %v1843 = vsel %vm1777, %v1744, %v1810
      %v1844 = vsel %vm1778, %v1745, %v1811
      %v1845 = vsel %vm1779, %v1746, %v1812
      %v1846 = vsel %vm1780, %v1747, %v1813
      %v1847 = vsel %vm1781, %v1748, %v1814
      %v1848 = vsel %vm1782, %v1749, %v1815
      %v1849 = vsel %vm1783, %v1750, %v1816
      %v1850 = vsel %vm1784, %v1751, %v1817
      %v1851 = vsel %vm1785, %v1752, %v1818
      %v1852 = vsel %vm1786, %v1753, %v1819
      %v1853 = vsel %vm1787, %v1754, %v1820
      %v1854 = vsel %vm1788, %v1755, %v1821
      %v1855 = vsel %vm1789, %v1756, %v1822
      %v1856 = vsel %vm1790, %v1757, %v1823
      %v1857 = vsel %vm1791, %v1758, %v1824
      %v1858 = vsel %vm1792, %v1759, %v1825
      %v1859 = vsel %vm1793, %v1760, %v1826
      %v1860 = vsel %vm1794, %v1761, %v1827
      %v1861 = vsel %vm1795, %v1762, %v1828
      %v1862 = vsel %vm1796, %v1763, %v1829
      %v1863 = vsel %vm1797, %v1764, %v1830
      %v1864 = vsel %vm1798, %v1765, %v1831
      %v1865 = vsel %vm1799, %v1766, %v1832
      %v1866 = vsel %vm1800, %v1767, %v1833
      %vm1867 = vcmask 523264
      %1868 = vst.msk [vmem:[%s170] sm:$0xff] %vm1867, %v1834
      %1869 = vst.msk [vmem:[%s170 + $0x8] sm:$0xff] %vm1867, %v1835
      %1870 = vst.msk [vmem:[%s170 + $0x10] sm:$0xff] %vm1867, %v1836
      %1871 = vst.msk [vmem:[%s170 + $0x18] sm:$0xff] %vm1867, %v1837
      %1872 = vst.msk [vmem:[%s170 + $0x20] sm:$0xff] %vm1867, %v1838
      %1873 = vst.msk [vmem:[%s170 + $0x28] sm:$0xff] %vm1867, %v1839
      %1874 = vst.msk [vmem:[%s170 + $0x30] sm:$0xff] %vm1867, %v1840
      %1875 = vst.msk [vmem:[%s170 + $0x38] sm:$0xff] %vm1867, %v1841
      %1876 = vst.msk [vmem:[%s170 + $0x40] sm:$0xff] %vm1867, %v1842
      %1877 = vst.msk [vmem:[%s170 + $0x48] sm:$0xff] %vm1867, %v1843
      %1878 = vst.msk [vmem:[%s170 + $0x50] sm:$0xff] %vm1867, %v1844
      %1879 = vst.msk [vmem:[%s170 + $0x58] sm:$0xff] %vm1867, %v1845
      %1880 = vst.msk [vmem:[%s170 + $0x60] sm:$0xff] %vm1867, %v1846
      %1881 = vst.msk [vmem:[%s170 + $0x68] sm:$0xff] %vm1867, %v1847
      %1882 = vst.msk [vmem:[%s170 + $0x70] sm:$0xff] %vm1867, %v1848
      %1883 = vst.msk [vmem:[%s170 + $0x78] sm:$0xff] %vm1867, %v1849
      %1884 = vst.msk [vmem:[%s170 + $0x80] sm:$0xff] %vm1867, %v1850
      %1885 = vst.msk [vmem:[%s170 + $0x88] sm:$0xff] %vm1867, %v1851
      %1886 = vst.msk [vmem:[%s170 + $0x90] sm:$0xff] %vm1867, %v1852
      %1887 = vst.msk [vmem:[%s170 + $0x98] sm:$0xff] %vm1867, %v1853
      %1888 = vst.msk [vmem:[%s170 + $0xa0] sm:$0xff] %vm1867, %v1854
      %1889 = vst.msk [vmem:[%s170 + $0xa8] sm:$0xff] %vm1867, %v1855
      %1890 = vst.msk [vmem:[%s170 + $0xb0] sm:$0xff] %vm1867, %v1856
      %1891 = vst.msk [vmem:[%s170 + $0xb8] sm:$0xff] %vm1867, %v1857
      %1892 = vst.msk [vmem:[%s170 + $0xc0] sm:$0xff] %vm1867, %v1858
      %1893 = vst.msk [vmem:[%s170 + $0xc8] sm:$0xff] %vm1867, %v1859
      %1894 = vst.msk [vmem:[%s170 + $0xd0] sm:$0xff] %vm1867, %v1860
      %1895 = vst.msk [vmem:[%s170 + $0xd8] sm:$0xff] %vm1867, %v1861
      %1896 = vst.msk [vmem:[%s170 + $0xe0] sm:$0xff] %vm1867, %v1862
      %1897 = vst.msk [vmem:[%s170 + $0xe8] sm:$0xff] %vm1867, %v1863
      %1898 = vst.msk [vmem:[%s170 + $0xf0] sm:$0xff] %vm1867, %v1864
      %1899 = vst.msk [vmem:[%s170 + $0xf8] sm:$0xff] %vm1867, %v1865
      %vm1900 = vcmask 519168
      %1901 = vst.msk [vmem:[%s170 + $0x100] sm:$0xf] %vm1900, %v1866
      %p1902 = scmp.lt.s32.totalorder %s14, 1
      %s1903 = scalar_select %p1902, %s14, 1
      %s1904 = smul.addr %s1903, 33
      %s1905 = smul.addr %s1904, 8
      %s1906 = scalar_lea.vmem %s3, %s1905
      // Predicated region
      $region33: #{cnn_forward.3} parent=31 // pred_check
        %p1907 = pneg %p100
      $region34: #{cnn_forward.3} parent=31 // pred_check_branch
        %1909 = sbr.rel (%p1907) target = $region36
      $region35: #{cnn_forward.3} parent=31 // pred_region
        _
      $region36: #{cnn_forward.3} parent=31 // pred_fallthru
        _
    $region32: #{cnn_forward.3} parent=5 // pred_fallthru
      _
    %p1910 = scmp.le.s32.totalorder 2, %s9
    // Predicated region
    $region37: #{cnn_forward.3} parent=5 // pred_check
      %p1911 = pneg %p1910
    $region38: #{cnn_forward.3} parent=5 // pred_check_branch
      %1913 = sbr.rel (%p1911) target = $region40
    $region39: #{cnn_forward.3} parent=5 // pred_region
      %s1914 = ssub.s32 %s9, 2
      // Predicated region
      $region41: #{cnn_forward.3} parent=39 // pred_check
        %p1915 = pneg %p106
      $region42: #{cnn_forward.3} parent=39 // pred_check_branch
        %1917 = sbr.rel (%p1915) target = $region44
      $region43: #{cnn_forward.3} parent=39 // pred_region
        %p1918 = scmp.lt.s32.totalorder %s15, 1
        %s1919 = scalar_select %p1918, %s15, 1
        %s1920 = smul.addr %s1919, 33
        %s1921 = smul.addr %s1920, 8
        %s1922 = scalar_lea.vmem %s3, %s1921
      $region44: #{cnn_forward.3} parent=39 // pred_fallthru
        _
    $region40: #{cnn_forward.3} parent=5 // pred_fallthru
      _
  $region6: #{cnn_forward.3} parent=0 // loop_footer
    %s13 = sadd.s32 1, %s9
  $region7: #{cnn_forward.3} parent=0 // loop_footer_branch
    %8 = sbr.rel target = $region3
  $region8: #{cnn_forward.3} parent=0 // loop_exit
    _

// kernel: cnn_forward.4
$region0: #{cnn_forward.4}
  #allocation0 [shape = 'u32[]', space=smem, size = 0x4, offset = 0x4, fixed_abs, tag = 'smem constant byte address 0x4 - core index']
  #allocation1 [shape = 'u32[144,128]{1,0:T(1,128)}', space=vmem, size = 0x12000, scoped, tag = 'internal scratch']
  %s0 = inlined_call_operand.vmem [shape: f32[2,2,4,45,288], index: 0, kind: input, shape index: {}]
  %s1 = inlined_call_operand.vmem [shape: f32[2,288,64], index: 1, kind: input, shape index: {}]
  %s2 = inlined_call_operand.vmem [shape: f32[2,1,64], index: 2, kind: input, shape index: {}]
  %s3 = inlined_call_operand.vmem [shape: f32[2,2,45,64], index: 3, kind: output, shape index: {}]
  %s4 = sld [smem:[#allocation0]]
  $region45: #{cnn_forward.4} parent=0
    _
  %s6 = ssub.s32 1, %s4
  %s7 = scalar_select 0, %s6, %s4
  loop: start=0, step=1, limit=6
  $region2: #{cnn_forward.4} parent=0 // loop_pre_header
    _
  $region3: #{cnn_forward.4} parent=0 // loop_header
    %s9 = sphi 0, %s13
    %p10 = scmp.ge.s32.totalorder %s9, 6
    %s16 = sphi 0, %s28
    %s17 = sphi 0, %s24
    %s18 = sphi 0, %s16
    %s19 = sphi 0, %s17
    %s20 = sphi 0, %s18
    %s21 = sphi 0, %s19
    %s33 = sphi 0, %s35
    %s36 = sphi 0, %s33
    %s37 = sphi 0, %s36
    %s53 = sphi 0, %s37
    %s59 = sphi 0, %s61
    %s62 = sphi 0, %s59
    %s63 = sphi 0, %s62
    %s79 = sphi 0, %s63
    %s85 = sphi 0, %s87
    %s88 = sphi 0, %s85
    %s89 = sphi 0, %s88
    %s105 = sphi 0, %s89
    %s113 = sphi 0, %s115
    %s116 = sphi 0, %s113
    %s117 = sphi 0, %s116
    %s133 = sphi 0, %s117
  $region4: #{cnn_forward.4} parent=0 // loop_header_branch
    %12 = sbr.rel (%p10) target = $region8
  $region5: #{cnn_forward.4} parent=0 // loop_body
    %s14 = ssub.s32 %s9, 1
    %s15 = ssub.s32 %s9, 2
    %s22 = sadd.s32 1, %s17
    %p23 = scmp.ge.s32.totalorder %s22, 2
    %s24 = scalar_select %p23, 0, %s22
    %s25 = sadd.s32 1, %s16
    %s26 = scalar_select %p23, %s25, %s16
    %p27 = scmp.ge.s32.totalorder %s26, 2
    %s28 = scalar_select %p27, 0, %s26
    %s29 = ssub.s32 %s16, %s28
    %s30 = ssub.s32 %s17, %s24
    %s31 = sor.u32 %s29, %s30
    %p32 = scmp.eq.s32.totalorder %s31, 0
    %s34 = sadd.s32 %s33, 1
    %s35 = scalar_select %p32, %s33, %s34
    %p38 = pneg %p32
    %p39 = scmp.eq.s32.totalorder %s9, 3
    %p40 = por %p38, %p39
    %p41 = scmp.ne.s32.totalorder %s33, %s36
    %p42 = scmp.eq.s32.totalorder %s9, 0
    %p43 = por %p41, %p42
    %p44 = scmp.ne.s32.totalorder %s33, %s36
    %p45 = scmp.eq.s32.totalorder %s14, 3
    %p46 = por %p44, %p45
    %p47 = scmp.ne.s32.totalorder %s36, %s37
    %p48 = scmp.eq.s32.totalorder %s14, 0
    %p49 = por %p47, %p48
    %p50 = scmp.ne.s32.totalorder %s36, %s37
    %p51 = scmp.eq.s32.totalorder %s15, 3
    %p52 = por %p50, %p51
    %p54 = scmp.ne.s32.totalorder %s37, %s53
    %p55 = scmp.eq.s32.totalorder %s15, 0
    %p56 = por %p54, %p55
    %s57 = ssub.s32 %s16, %s28
    %p58 = scmp.eq.s32.totalorder %s57, 0
    %s60 = sadd.s32 %s59, 1
    %s61 = scalar_select %p58, %s59, %s60
    %p64 = pneg %p58
    %p65 = scmp.eq.s32.totalorder %s9, 3
    %p66 = por %p64, %p65
    %p67 = scmp.ne.s32.totalorder %s59, %s62
    %p68 = scmp.eq.s32.totalorder %s9, 0
    %p69 = por %p67, %p68
    %p70 = scmp.ne.s32.totalorder %s59, %s62
    %p71 = scmp.eq.s32.totalorder %s14, 3
    %p72 = por %p70, %p71
    %p73 = scmp.ne.s32.totalorder %s62, %s63
    %p74 = scmp.eq.s32.totalorder %s14, 0
    %p75 = por %p73, %p74
    %p76 = scmp.ne.s32.totalorder %s62, %s63
    %p77 = scmp.eq.s32.totalorder %s15, 3
    %p78 = por %p76, %p77
    %p80 = scmp.ne.s32.totalorder %s63, %s79
    %p81 = scmp.eq.s32.totalorder %s15, 0
    %p82 = por %p80, %p81
    %s83 = ssub.s32 %s16, %s28
    %p84 = scmp.eq.s32.totalorder %s83, 0
    %s86 = sadd.s32 %s85, 1
    %s87 = scalar_select %p84, %s85, %s86
    %p90 = pneg %p84
    %p91 = scmp.eq.s32.totalorder %s9, 3
    %p92 = por %p90, %p91
    %p93 = scmp.ne.s32.totalorder %s85, %s88
    %p94 = scmp.eq.s32.totalorder %s9, 0
    %p95 = por %p93, %p94
    %p96 = scmp.ne.s32.totalorder %s85, %s88
    %p97 = scmp.eq.s32.totalorder %s14, 3
    %p98 = por %p96, %p97
    %p99 = scmp.ne.s32.totalorder %s88, %s89
    %p100 = scmp.eq.s32.totalorder %s14, 0
    %p101 = por %p99, %p100
    %p102 = scmp.ne.s32.totalorder %s88, %s89
    %p103 = scmp.eq.s32.totalorder %s15, 3
    %p104 = por %p102, %p103
    %p106 = scmp.ne.s32.totalorder %s89, %s105
    %p107 = scmp.eq.s32.totalorder %s15, 0
    %p108 = por %p106, %p107
    %s109 = ssub.s32 %s16, %s28
    %s110 = ssub.s32 %s17, %s24
    %s111 = sor.u32 %s109, %s110
    %p112 = scmp.eq.s32.totalorder %s111, 0
    %s114 = sadd.s32 %s113, 1
    %s115 = scalar_select %p112, %s113, %s114
    %p118 = pneg %p112
    %p119 = scmp.eq.s32.totalorder %s9, 3
    %p120 = por %p118, %p119
    %p121 = scmp.ne.s32.totalorder %s113, %s116
    %p122 = scmp.eq.s32.totalorder %s9, 0
    %p123 = por %p121, %p122
    %p124 = scmp.ne.s32.totalorder %s113, %s116
    %p125 = scmp.eq.s32.totalorder %s14, 3
    %p126 = por %p124, %p125
    %p127 = scmp.ne.s32.totalorder %s116, %s117
    %p128 = scmp.eq.s32.totalorder %s14, 0
    %p129 = por %p127, %p128
    %p130 = scmp.ne.s32.totalorder %s116, %s117
    %p131 = scmp.eq.s32.totalorder %s15, 3
    %p132 = por %p130, %p131
    %p134 = scmp.ne.s32.totalorder %s117, %s133
    %p135 = scmp.eq.s32.totalorder %s15, 0
    %p136 = por %p134, %p135
    %p137 = scmp.le.s32.totalorder 1, %s9
    %p138 = scmp.lt.s32.totalorder %s9, 5
    %p139 = pnand %p137, %p138
    %p140 = pneg %p139
    // Predicated region
    $region9: #{cnn_forward.4} parent=5 // pred_check
      _
    $region10: #{cnn_forward.4} parent=5 // pred_check_branch
      %142 = sbr.rel (%p139) target = $region12
    $region11: #{cnn_forward.4} parent=5 // pred_region
      %s143 = ssub.s32 %s9, 1
    $region12: #{cnn_forward.4} parent=5 // pred_fallthru
      _
    %p144 = scmp.lt.s32.totalorder %s9, 4
    // Predicated region
    $region13: #{cnn_forward.4} parent=5 // pred_check
      %p145 = pneg %p144
    $region14: #{cnn_forward.4} parent=5 // pred_check_branch
      %147 = sbr.rel (%p145) target = $region16
    $region15: #{cnn_forward.4} parent=5 // pred_region
      // Predicated region
      $region17: #{cnn_forward.4} parent=15 // pred_check
        %p148 = pneg %p43
      $region18: #{cnn_forward.4} parent=15 // pred_check_branch
        %150 = sbr.rel (%p148) target = $region20
      $region19: #{cnn_forward.4} parent=15 // pred_region
        %p151 = scmp.lt.s32.totalorder %s16, 1
        %s152 = scalar_select %p151, %s16, 1
        %p153 = scmp.lt.s32.totalorder %s17, 1
        %s154 = scalar_select %p153, %s17, 1
        %s155 = smul.addr %s154, 72
        %s156 = smul.addr %s152, 144
        %s157 = sadd.s32 %s155, %s156
        %s158 = smul.addr %s157, 8
        %s159 = scalar_lea.vmem %s0, %s158
      $region20: #{cnn_forward.4} parent=15 // pred_fallthru
        _
      // Predicated region
      $region21: #{cnn_forward.4} parent=15 // pred_check
        %p160 = pneg %p69
      $region22: #{cnn_forward.4} parent=15 // pred_check_branch
        %162 = sbr.rel (%p160) target = $region24
      $region23: #{cnn_forward.4} parent=15 // pred_region
        %p163 = scmp.lt.s32.totalorder %s16, 1
        %s164 = scalar_select %p163, %s16, 1
        %s165 = smul.addr %s164, 36
        %s166 = smul.addr %s165, 8
        %s167 = scalar_lea.vmem %s1, %s166
      $region24: #{cnn_forward.4} parent=15 // pred_fallthru
        _
      // Predicated region
      $region25: #{cnn_forward.4} parent=15 // pred_check
        %p168 = pneg %p95
      $region26: #{cnn_forward.4} parent=15 // pred_check_branch
        %170 = sbr.rel (%p168) target = $region28
      $region27: #{cnn_forward.4} parent=15 // pred_region
        %p171 = scmp.lt.s32.totalorder %s16, 1
        %s172 = scalar_select %p171, %s16, 1
        %s173 = scalar_lea.vmem %s2, %s172
      $region28: #{cnn_forward.4} parent=15 // pred_fallthru
        _
    $region16: #{cnn_forward.4} parent=5 // pred_fallthru
      _
    %p174 = scmp.le.s32.totalorder 1, %s9
    %p175 = scmp.lt.s32.totalorder %s9, 5
    %p176 = pnand %p174, %p175
    %p177 = pneg %p176
    // Predicated region
    $region29: #{cnn_forward.4} parent=5 // pred_check
      _
    $region30: #{cnn_forward.4} parent=5 // pred_check_branch
      %179 = sbr.rel (%p176) target = $region32
    $region31: #{cnn_forward.4} parent=5 // pred_region
      %s180 = ssub.s32 %s9, 1
      %p181 = scmp.lt.s32.totalorder %s18, 1
      %s182 = scalar_select %p181, %s18, 1
      %p183 = scmp.lt.s32.totalorder %s19, 1
      %s184 = scalar_select %p183, %s19, 1
      %s185 = smul.addr %s184, 72
      %s186 = smul.addr %s182, 144
      %s187 = sadd.s32 %s185, %s186
      %s188 = smul.addr %s187, 8
      %s189 = scalar_lea.vmem %s0, %s188
      %p190 = pneg %p49
      %p191 = pneg %p46
      %p192 = scmp.lt.s32.totalorder %s18, 1
      %s193 = scalar_select %p192, %s18, 1
      %s194 = smul.addr %s193, 36
      %s195 = smul.addr %s194, 8
      %s196 = scalar_lea.vmem %s1, %s195
      %p197 = pneg %p75
      %p198 = pneg %p72
      %p199 = scmp.lt.s32.totalorder %s18, 1
      %s200 = scalar_select %p199, %s18, 1
      %s201 = scalar_lea.vmem %s2, %s200
      %p202 = pneg %p101
      %p203 = pneg %p98
      %p204 = pneg %p129
      %p205 = pneg %p126
      %p206 = scmp.lt.s32.totalorder %s18, 1
      %s207 = scalar_select %p206, %s18, 1
      %p208 = scmp.lt.s32.totalorder %s19, 1
      %s209 = scalar_select %p208, %s19, 1
      %s210 = smul.addr %s209, 6
      %s211 = smul.addr %s207, 12
      %s212 = sadd.s32 %s210, %s211
      %s213 = smul.addr %s212, 8
      %s214 = scalar_lea.vmem %s3, %s213
      %p215 = scmp.lt.s32.totalorder %s18, 1
      %s216 = scalar_select %p215, %s18, 1
      %p217 = scmp.lt.s32.totalorder %s19, 1
      %s218 = scalar_select %p217, %s19, 1
      %s219 = smul.addr %s218, 72
      %s220 = smul.addr %s216, 144
      %s221 = sadd.s32 %s219, %s220
      %s222 = smul.addr %s221, 8
      %s223 = scalar_lea.vmem %s0, %s222
      %p224 = scmp.lt.s32.totalorder %s18, 1
      %s225 = scalar_select %p224, %s18, 1
      %s226 = smul.addr %s225, 36
      %s227 = smul.addr %s226, 8
      %s228 = scalar_lea.vmem %s1, %s227
      %p229 = scmp.lt.s32.totalorder %s18, 1
      %s230 = scalar_select %p229, %s18, 1
      %s231 = scalar_lea.vmem %s2, %s230
      %p232 = scmp.lt.s32.totalorder %s18, 1
      %s233 = scalar_select %p232, %s18, 1
      %p234 = scmp.lt.s32.totalorder %s19, 1
      %s235 = scalar_select %p234, %s19, 1
      %s236 = smul.addr %s235, 6
      %s237 = smul.addr %s233, 12
      %s238 = sadd.s32 %s236, %s237
      %s239 = smul.addr %s238, 8
      %s240 = scalar_lea.vmem %s3, %s239
      %v241 = vld [vmem:[%s228] sm:$0xff]
      %v242 = vld [vmem:[%s228 + $0x8] sm:$0xff]
      %v243 = vld [vmem:[%s228 + $0x10] sm:$0xff]
      %v244 = vld [vmem:[%s228 + $0x18] sm:$0xff]
      %v245 = vld [vmem:[%s228 + $0x20] sm:$0xff]
      %v246 = vld [vmem:[%s228 + $0x28] sm:$0xff]
      %v247 = vld [vmem:[%s228 + $0x30] sm:$0xff]
      %v248 = vld [vmem:[%s228 + $0x38] sm:$0xff]
      %v249 = vld [vmem:[%s228 + $0x40] sm:$0xff]
      %v250 = vld [vmem:[%s228 + $0x48] sm:$0xff]
      %v251 = vld [vmem:[%s228 + $0x50] sm:$0xff]
      %v252 = vld [vmem:[%s228 + $0x58] sm:$0xff]
      %v253 = vld [vmem:[%s228 + $0x60] sm:$0xff]
      %v254 = vld [vmem:[%s228 + $0x68] sm:$0xff]
      %v255 = vld [vmem:[%s228 + $0x70] sm:$0xff]
      %v256 = vld [vmem:[%s228 + $0x78] sm:$0xff]
      %v257 = vld [vmem:[%s228 + $0x80] sm:$0xff]
      %v258 = vld [vmem:[%s228 + $0x88] sm:$0xff]
      %v259 = vld [vmem:[%s228 + $0x90] sm:$0xff]
      %v260 = vld [vmem:[%s228 + $0x98] sm:$0xff]
      %v261 = vld [vmem:[%s228 + $0xa0] sm:$0xff]
      %v262 = vld [vmem:[%s228 + $0xa8] sm:$0xff]
      %v263 = vld [vmem:[%s228 + $0xb0] sm:$0xff]
      %v264 = vld [vmem:[%s228 + $0xb8] sm:$0xff]
      %v265 = vld [vmem:[%s228 + $0xc0] sm:$0xff]
      %v266 = vld [vmem:[%s228 + $0xc8] sm:$0xff]
      %v267 = vld [vmem:[%s228 + $0xd0] sm:$0xff]
      %v268 = vld [vmem:[%s228 + $0xd8] sm:$0xff]
      %v269 = vld [vmem:[%s228 + $0xe0] sm:$0xff]
      %v270 = vld [vmem:[%s228 + $0xe8] sm:$0xff]
      %v271 = vld [vmem:[%s228 + $0xf0] sm:$0xff]
      %v272 = vld [vmem:[%s228 + $0xf8] sm:$0xff]
      %v273 = vld [vmem:[%s228 + $0x100] sm:$0xff]
      %v274 = vld [vmem:[%s228 + $0x108] sm:$0xff]
      %v275 = vld [vmem:[%s228 + $0x110] sm:$0xff]
      %v276 = vld [vmem:[%s228 + $0x118] sm:$0xff]
      %v277 = vld [vmem:[%s223] sm:$0xff]
      %v278 = vld [vmem:[%s223 + $0x8] sm:$0xff]
      %v279 = vld [vmem:[%s223 + $0x10] sm:$0xff]
      %v280 = vld [vmem:[%s223 + $0x18] sm:$0xff]
      %v281 = vld [vmem:[%s223 + $0x20] sm:$0xff]
      %v282 = vld [vmem:[%s223 + $0x28] sm:$0xff]
      %v283 = vld [vmem:[%s223 + $0x30] sm:$0xff]
      %v284 = vld [vmem:[%s223 + $0x38] sm:$0xff]
      %v285 = vld [vmem:[%s223 + $0x40] sm:$0xff]
      %v286 = vld [vmem:[%s223 + $0x48] sm:$0xff]
      %v287 = vld [vmem:[%s223 + $0x50] sm:$0xff]
      %v288 = vld [vmem:[%s223 + $0x58] sm:$0xff]
      %v289 = vld [vmem:[%s223 + $0x60] sm:$0xff]
      %v290 = vld [vmem:[%s223 + $0x68] sm:$0xff]
      %v291 = vld [vmem:[%s223 + $0x70] sm:$0xff]
      %v292 = vld [vmem:[%s223 + $0x78] sm:$0x1f]
      %v293 = vld [vmem:[%s223 + $0x80] sm:$0x1f]
      %v294 = vld [vmem:[%s223 + $0x88] sm:$0x1f]
      %vm295 = vcmask 261120
      %v297 = vsel %vm295, %v279, 0
      %v300 = vsel %vm295, %v282, 0
      %v303 = vsel %vm295, %v285, 0
      %v306 = vsel %vm295, %v288, 0
      %v309 = vsel %vm295, %v291, 0
      %v312 = vsel %vm295, %v294, 0
      %314 = vmatprep.subr.mxu0 0.0
      %315 = vmatpush1.msra.mxu0 %v241
      %316 = vmatprep.subr.mxu0 0.0
      %317 = vmatpush1.msra.mxu0 %v242
      %318 = vmatprep.subr.mxu0 0.0
      %319 = vmatpush1.msra.mxu0 %v243
      %320 = vmatprep.subr.mxu0 0.0
      %321 = vmatpush1.msra.mxu0 %v244
      %322 = vmatprep.subr.mxu0 0.0
      %323 = vmatpush1.msra.mxu0 %v245
      %324 = vmatprep.subr.mxu0 0.0
      %325 = vmatpush1.msra.mxu0 %v246
      %326 = vmatprep.subr.mxu0 0.0
      %327 = vmatpush1.msra.mxu0 %v247
      %328 = vmatprep.subr.mxu0 0.0
      %329 = vmatpush1.msra.mxu0 %v248
      %330 = vmatprep.subr.mxu0 0.0
      %331 = vmatpush1.msra.mxu0 %v249
      %332 = vmatprep.subr.mxu0 0.0
      %333 = vmatpush1.msra.mxu0 %v250
      %334 = vmatprep.subr.mxu0 0.0
      %335 = vmatpush1.msra.mxu0 %v251
      %336 = vmatprep.subr.mxu0 0.0
      %337 = vmatpush1.msra.mxu0 %v252
      %338 = vmatprep.subr.mxu0 0.0
      %339 = vmatpush1.msra.mxu0 %v253
      %340 = vmatprep.subr.mxu0 0.0
      %341 = vmatpush1.msra.mxu0 %v254
      %342 = vmatprep.subr.mxu0 0.0
      %343 = vmatpush1.msra.mxu0 %v255
      %344 = vmatprep.subr.mxu0 0.0
      %345 = vmatpush1.msra.mxu0 %v256
      %346 = vmatprep.subr.mxu0 0.0
      %347 = vmatpush1.msra.mxu0 %v257
      %348 = vmatprep.subr.mxu0 0.0
      %349 = vmatpush1.msra.mxu0 %v258
      %350 = vmatprep.subr.mxu0 0.0
      %351 = vmatpush1.msra.mxu0 %v259
      %352 = vmatprep.subr.mxu0 0.0
      %353 = vmatpush1.msra.mxu0 %v260
      %354 = vmatprep.subr.mxu0 0.0
      %355 = vmatpush1.msra.mxu0 %v261
      %356 = vmatprep.subr.mxu0 0.0
      %357 = vmatpush1.msra.mxu0 %v262
      %358 = vmatprep.subr.mxu0 0.0
      %359 = vmatpush1.msra.mxu0 %v263
      %360 = vmatprep.subr.mxu0 0.0
      %361 = vmatpush1.msra.mxu0 %v264
      %362 = vmatprep.subr.mxu0 0.0
      %363 = vmatpush1.msra.mxu0 %v265
      %364 = vmatprep.subr.mxu0 0.0
      %365 = vmatpush1.msra.mxu0 %v266
      %366 = vmatprep.subr.mxu0 0.0
      %367 = vmatpush1.msra.mxu0 %v267
      %368 = vmatprep.subr.mxu0 0.0
      %369 = vmatpush1.msra.mxu0 %v268
      %370 = vmatprep.subr.mxu0 0.0
      %371 = vmatpush1.msra.mxu0 %v269
      %372 = vmatprep.subr.mxu0 0.0
      %373 = vmatpush1.msra.mxu0 %v270
      %374 = vmatprep.subr.mxu0 0.0
      %375 = vmatpush1.msra.mxu0 %v271
      %376 = vmatprep.subr.mxu0 0.0
      %377 = vmatpush1.msra.mxu0 %v272
      %378 = vmatprep.mubr.f32.mxu0 %v278
      %379 = vmatmul.mubr.f32.gmra.mrb[0].mxu0 %v277
      %v380 = vpop.f32.mrb[0].mxu0
      %v381 = vadd.f32 0.0, %v380
      %v382 = vpop.f32.mrb[0].mxu0
      %383 = vmatprep.mubr.f32.mxu0 %v281
      %384 = vmatmul.mubr.f32.gmra.mrb[0].mxu0 %v280
      %v385 = vpop.f32.mrb[0].mxu0
      %v386 = vadd.f32 0.0, %v385
      %v387 = vpop.f32.mrb[0].mxu0
      %388 = vmatprep.mubr.f32.mxu0 %v284
      %389 = vmatmul.mubr.f32.gmra.mrb[0].mxu0 %v283
      %v390 = vpop.f32.mrb[0].mxu0
      %v391 = vadd.f32 0.0, %v390
      %v392 = vpop.f32.mrb[0].mxu0
      %393 = vmatprep.mubr.f32.mxu0 %v287
      %394 = vmatmul.mubr.f32.gmra.mrb[0].mxu0 %v286
      %v395 = vpop.f32.mrb[0].mxu0
      %v396 = vadd.f32 0.0, %v395
      %v397 = vpop.f32.mrb[0].mxu0
      %398 = vmatprep.mubr.f32.mxu0 %v290
      %399 = vmatmul.mubr.f32.gmra.mrb[0].mxu0 %v289
      %v400 = vpop.f32.mrb[0].mxu0
      %v401 = vadd.f32 0.0, %v400
      %v402 = vpop.f32.mrb[0].mxu0
      %403 = vmatprep.mubr.f32.mxu0 %v293
      %404 = vmatmul.mubr.f32.gmra.mrb[0].mxu0 %v292
      %v405 = vpop.f32.mrb[0].mxu0
      %v406 = vadd.f32 0.0, %v405
      %v407 = vpop.f32.mrb[0].mxu0
      %408 = vdwg.mxu0
      %409 = vmatprep.subr.mxu0 0.0
      %410 = vmatpush1.msra.mxu0 %v273
      %411 = vmatprep.subr.mxu0 0.0
      %412 = vmatpush1.msra.mxu0 %v274
      %413 = vmatprep.subr.mxu0 0.0
      %414 = vmatpush1.msra.mxu0 %v275
      %415 = vmatprep.subr.mxu0 0.0
      %416 = vmatpush1.msra.mxu0 %v276
      %417 = vmatprep.subr.mxu0 0.0
      %418 = vmatpush1.msra.mxu0 0.0
      %419 = vmatprep.subr.mxu0 0.0
      %420 = vmatpush1.msra.mxu0 0.0
      %421 = vmatprep.subr.mxu0 0.0
      %422 = vmatpush1.msra.mxu0 0.0
      %423 = vmatprep.subr.mxu0 0.0
      %424 = vmatpush1.msra.mxu0 0.0
      %425 = vmatprep.subr.mxu0 0.0
      %426 = vmatpush1.msra.mxu0 0.0
      %427 = vmatprep.subr.mxu0 0.0
      %428 = vmatpush1.msra.mxu0 0.0
      %429 = vmatprep.subr.mxu0 0.0
      %430 = vmatpush1.msra.mxu0 0.0
      %431 = vmatprep.subr.mxu0 0.0
      %432 = vmatpush1.msra.mxu0 0.0
      %433 = vmatprep.subr.mxu0 0.0
      %434 = vmatpush1.msra.mxu0 0.0
      %435 = vmatprep.subr.mxu0 0.0
      %436 = vmatpush1.msra.mxu0 0.0
      %437 = vmatprep.subr.mxu0 0.0
      %438 = vmatpush1.msra.mxu0 0.0
      %439 = vmatprep.subr.mxu0 0.0
      %440 = vmatpush1.msra.mxu0 0.0
      %441 = vmatprep.subr.mxu0 0.0
      %442 = vmatpush1.msra.mxu0 0.0
      %443 = vmatprep.subr.mxu0 0.0
      %444 = vmatpush1.msra.mxu0 0.0
      %445 = vmatprep.subr.mxu0 0.0
      %446 = vmatpush1.msra.mxu0 0.0
      %447 = vmatprep.subr.mxu0 0.0
      %448 = vmatpush1.msra.mxu0 0.0
      %449 = vmatprep.subr.mxu0 0.0
      %450 = vmatpush1.msra.mxu0 0.0
      %451 = vmatprep.subr.mxu0 0.0
      %452 = vmatpush1.msra.mxu0 0.0
      %453 = vmatprep.subr.mxu0 0.0
      %454 = vmatpush1.msra.mxu0 0.0
      %455 = vmatprep.subr.mxu0 0.0
      %456 = vmatpush1.msra.mxu0 0.0
      %457 = vmatprep.subr.mxu0 0.0
      %458 = vmatpush1.msra.mxu0 0.0
      %459 = vmatprep.subr.mxu0 0.0
      %460 = vmatpush1.msra.mxu0 0.0
      %461 = vmatprep.subr.mxu0 0.0
      %462 = vmatpush1.msra.mxu0 0.0
      %463 = vmatprep.subr.mxu0 0.0
      %464 = vmatpush1.msra.mxu0 0.0
      %465 = vmatprep.subr.mxu0 0.0
      %466 = vmatpush1.msra.mxu0 0.0
      %467 = vmatprep.subr.mxu0 0.0
      %468 = vmatpush1.msra.mxu0 0.0
      %469 = vmatprep.subr.mxu0 0.0
      %470 = vmatpush1.msra.mxu0 0.0
      %471 = vmatprep.subr.mxu0 0.0
      %472 = vmatpush1.msra.mxu0 0.0
      %473 = vmatprep.mubr.f32.mxu0 0.0
      %474 = vmatmul.mubr.f32.gmra.mrb[0].mxu0 %v297
      %v475 = vpop.f32.mrb[0].mxu0
      %v476 = vadd.f32 %v381, %v475
      %v477 = vpop.f32.mrb[0].mxu0
      %478 = vmatprep.mubr.f32.mxu0 0.0
      %479 = vmatmul.mubr.f32.gmra.mrb[0].mxu0 %v300
      %v480 = vpop.f32.mrb[0].mxu0
      %v481 = vadd.f32 %v386, %v480
      %v482 = vpop.f32.mrb[0].mxu0
      %483 = vmatprep.mubr.f32.mxu0 0.0
      %484 = vmatmul.mubr.f32.gmra.mrb[0].mxu0 %v303
      %v485 = vpop.f32.mrb[0].mxu0
      %v486 = vadd.f32 %v391, %v485
      %v487 = vpop.f32.mrb[0].mxu0
      %488 = vmatprep.mubr.f32.mxu0 0.0
      %489 = vmatmul.mubr.f32.gmra.mrb[0].mxu0 %v306
      %v490 = vpop.f32.mrb[0].mxu0
      %v491 = vadd.f32 %v396, %v490
      %v492 = vpop.f32.mrb[0].mxu0
      %493 = vmatprep.mubr.f32.mxu0 0.0
      %494 = vmatmul.mubr.f32.gmra.mrb[0].mxu0 %v309
      %v495 = vpop.f32.mrb[0].mxu0
      %v496 = vadd.f32 %v401, %v495
      %v497 = vpop.f32.mrb[0].mxu0
      %498 = vmatprep.mubr.f32.mxu0 0.0
      %499 = vmatmul.mubr.f32.gmra.mrb[0].mxu0 %v312
      %v500 = vpop.f32.mrb[0].mxu0
      %v501 = vadd.f32 %v406, %v500
      %v502 = vpop.f32.mrb[0].mxu0
      %503 = vdwg.mxu0
      %s504 = scalar_lea.vmem %s223, 144
      %v505 = vld [vmem:[%s504] sm:$0xff]
      %v506 = vld [vmem:[%s504 + $0x8] sm:$0xff]
      %v507 = vld [vmem:[%s504 + $0x10] sm:$0xff]
      %v508 = vld [vmem:[%s504 + $0x18] sm:$0xff]
      %v509 = vld [vmem:[%s504 + $0x20] sm:$0xff]
      %v510 = vld [vmem:[%s504 + $0x28] sm:$0xff]
      %v511 = vld [vmem:[%s504 + $0x30] sm:$0xff]
      %v512 = vld [vmem:[%s504 + $0x38] sm:$0xff]
      %v513 = vld [vmem:[%s504 + $0x40] sm:$0xff]
      %v514 = vld [vmem:[%s504 + $0x48] sm:$0xff]
      %v515 = vld [vmem:[%s504 + $0x50] sm:$0xff]
      %v516 = vld [vmem:[%s504 + $0x58] sm:$0xff]
      %v517 = vld [vmem:[%s504 + $0x60] sm:$0xff]
      %v518 = vld [vmem:[%s504 + $0x68] sm:$0xff]
      %v519 = vld [vmem:[%s504 + $0x70] sm:$0xff]
      %v520 = vld [vmem:[%s504 + $0x78] sm:$0x1f]
      %v521 = vld [vmem:[%s504 + $0x80] sm:$0x1f]
      %v522 = vld [vmem:[%s504 + $0x88] sm:$0x1f]
      %v524 = vsel %vm295, %v507, 0
      %v527 = vsel %vm295, %v510, 0
      %v530 = vsel %vm295, %v513, 0
      %v533 = vsel %vm295, %v516, 0
      %v536 = vsel %vm295, %v519, 0
      %v539 = vsel %vm295, %v522, 0
      %541 = vmatprep.subr.mxu0 0.0
      %542 = vmatpush1.msra.mxu0 %v241
      %543 = vmatprep.subr.mxu0 0.0
      %544 = vmatpush1.msra.mxu0 %v242
      %545 = vmatprep.subr.mxu0 0.0
      %546 = vmatpush1.msra.mxu0 %v243
      %547 = vmatprep.subr.mxu0 0.0
      %548 = vmatpush1.msra.mxu0 %v244
      %549 = vmatprep.subr.mxu0 0.0
      %550 = vmatpush1.msra.mxu0 %v245
      %551 = vmatprep.subr.mxu0 0.0
      %552 = vmatpush1.msra.mxu0 %v246
      %553 = vmatprep.subr.mxu0 0.0
      %554 = vmatpush1.msra.mxu0 %v247
      %555 = vmatprep.subr.mxu0 0.0
      %556 = vmatpush1.msra.mxu0 %v248
      %557 = vmatprep.subr.mxu0 0.0
      %558 = vmatpush1.msra.mxu0 %v249
      %559 = vmatprep.subr.mxu0 0.0
      %560 = vmatpush1.msra.mxu0 %v250
      %561 = vmatprep.subr.mxu0 0.0
      %562 = vmatpush1.msra.mxu0 %v251
      %563 = vmatprep.subr.mxu0 0.0
      %564 = vmatpush1.msra.mxu0 %v252
      %565 = vmatprep.subr.mxu0 0.0
      %566 = vmatpush1.msra.mxu0 %v253
      %567 = vmatprep.subr.mxu0 0.0
      %568 = vmatpush1.msra.mxu0 %v254
      %569 = vmatprep.subr.mxu0 0.0
      %570 = vmatpush1.msra.mxu0 %v255
      %571 = vmatprep.subr.mxu0 0.0
      %572 = vmatpush1.msra.mxu0 %v256
      %573 = vmatprep.subr.mxu0 0.0
      %574 = vmatpush1.msra.mxu0 %v257
      %575 = vmatprep.subr.mxu0 0.0
      %576 = vmatpush1.msra.mxu0 %v258
      %577 = vmatprep.subr.mxu0 0.0
      %578 = vmatpush1.msra.mxu0 %v259
      %579 = vmatprep.subr.mxu0 0.0
      %580 = vmatpush1.msra.mxu0 %v260
      %581 = vmatprep.subr.mxu0 0.0
      %582 = vmatpush1.msra.mxu0 %v261
      %583 = vmatprep.subr.mxu0 0.0
      %584 = vmatpush1.msra.mxu0 %v262
      %585 = vmatprep.subr.mxu0 0.0
      %586 = vmatpush1.msra.mxu0 %v263
      %587 = vmatprep.subr.mxu0 0.0
      %588 = vmatpush1.msra.mxu0 %v264
      %589 = vmatprep.subr.mxu0 0.0
      %590 = vmatpush1.msra.mxu0 %v265
      %591 = vmatprep.subr.mxu0 0.0
      %592 = vmatpush1.msra.mxu0 %v266
      %593 = vmatprep.subr.mxu0 0.0
      %594 = vmatpush1.msra.mxu0 %v267
      %595 = vmatprep.subr.mxu0 0.0
      %596 = vmatpush1.msra.mxu0 %v268
      %597 = vmatprep.subr.mxu0 0.0
      %598 = vmatpush1.msra.mxu0 %v269
      %599 = vmatprep.subr.mxu0 0.0
      %600 = vmatpush1.msra.mxu0 %v270
      %601 = vmatprep.subr.mxu0 0.0
      %602 = vmatpush1.msra.mxu0 %v271
      %603 = vmatprep.subr.mxu0 0.0
      %604 = vmatpush1.msra.mxu0 %v272
      %605 = vmatprep.mubr.f32.mxu0 %v506
      %606 = vmatmul.mubr.f32.gmra.mrb[0].mxu0 %v505
      %v607 = vpop.f32.mrb[0].mxu0
      %v608 = vadd.f32 0.0, %v607
      %v609 = vpop.f32.mrb[0].mxu0
      %610 = vmatprep.mubr.f32.mxu0 %v509
      %611 = vmatmul.mubr.f32.gmra.mrb[0].mxu0 %v508
      %v612 = vpop.f32.mrb[0].mxu0
      %v613 = vadd.f32 0.0, %v612
      %v614 = vpop.f32.mrb[0].mxu0
      %615 = vmatprep.mubr.f32.mxu0 %v512
      %616 = vmatmul.mubr.f32.gmra.mrb[0].mxu0 %v511
      %v617 = vpop.f32.mrb[0].mxu0
      %v618 = vadd.f32 0.0, %v617
      %v619 = vpop.f32.mrb[0].mxu0
      %620 = vmatprep.mubr.f32.mxu0 %v515
      %621 = vmatmul.mubr.f32.gmra.mrb[0].mxu0 %v514
      %v622 = vpop.f32.mrb[0].mxu0
      %v623 = vadd.f32 0.0, %v622
      %v624 = vpop.f32.mrb[0].mxu0
      %625 = vmatprep.mubr.f32.mxu0 %v518
      %626 = vmatmul.mubr.f32.gmra.mrb[0].mxu0 %v517
      %v627 = vpop.f32.mrb[0].mxu0
      %v628 = vadd.f32 0.0, %v627
      %v629 = vpop.f32.mrb[0].mxu0
      %630 = vmatprep.mubr.f32.mxu0 %v521
      %631 = vmatmul.mubr.f32.gmra.mrb[0].mxu0 %v520
      %v632 = vpop.f32.mrb[0].mxu0
      %v633 = vadd.f32 0.0, %v632
      %v634 = vpop.f32.mrb[0].mxu0
      %635 = vdwg.mxu0
      %636 = vmatprep.subr.mxu0 0.0
      %637 = vmatpush1.msra.mxu0 %v273
      %638 = vmatprep.subr.mxu0 0.0
      %639 = vmatpush1.msra.mxu0 %v274
      %640 = vmatprep.subr.mxu0 0.0
      %641 = vmatpush1.msra.mxu0 %v275
      %642 = vmatprep.subr.mxu0 0.0
      %643 = vmatpush1.msra.mxu0 %v276
      %644 = vmatprep.subr.mxu0 0.0
      %645 = vmatpush1.msra.mxu0 0.0
      %646 = vmatprep.subr.mxu0 0.0
      %647 = vmatpush1.msra.mxu0 0.0
      %648 = vmatprep.subr.mxu0 0.0
      %649 = vmatpush1.msra.mxu0 0.0
      %650 = vmatprep.subr.mxu0 0.0
      %651 = vmatpush1.msra.mxu0 0.0
      %652 = vmatprep.subr.mxu0 0.0
      %653 = vmatpush1.msra.mxu0 0.0
      %654 = vmatprep.subr.mxu0 0.0
      %655 = vmatpush1.msra.mxu0 0.0
      %656 = vmatprep.subr.mxu0 0.0
      %657 = vmatpush1.msra.mxu0 0.0
      %658 = vmatprep.subr.mxu0 0.0
      %659 = vmatpush1.msra.mxu0 0.0
      %660 = vmatprep.subr.mxu0 0.0
      %661 = vmatpush1.msra.mxu0 0.0
      %662 = vmatprep.subr.mxu0 0.0
      %663 = vmatpush1.msra.mxu0 0.0
      %664 = vmatprep.subr.mxu0 0.0
      %665 = vmatpush1.msra.mxu0 0.0
      %666 = vmatprep.subr.mxu0 0.0
      %667 = vmatpush1.msra.mxu0 0.0
      %668 = vmatprep.subr.mxu0 0.0
      %669 = vmatpush1.msra.mxu0 0.0
      %670 = vmatprep.subr.mxu0 0.0
      %671 = vmatpush1.msra.mxu0 0.0
      %672 = vmatprep.subr.mxu0 0.0
      %673 = vmatpush1.msra.mxu0 0.0
      %674 = vmatprep.subr.mxu0 0.0
      %675 = vmatpush1.msra.mxu0 0.0
      %676 = vmatprep.subr.mxu0 0.0
      %677 = vmatpush1.msra.mxu0 0.0
      %678 = vmatprep.subr.mxu0 0.0
      %679 = vmatpush1.msra.mxu0 0.0
      %680 = vmatprep.subr.mxu0 0.0
      %681 = vmatpush1.msra.mxu0 0.0
      %682 = vmatprep.subr.mxu0 0.0
      %683 = vmatpush1.msra.mxu0 0.0
      %684 = vmatprep.subr.mxu0 0.0
      %685 = vmatpush1.msra.mxu0 0.0
      %686 = vmatprep.subr.mxu0 0.0
      %687 = vmatpush1.msra.mxu0 0.0
      %688 = vmatprep.subr.mxu0 0.0
      %689 = vmatpush1.msra.mxu0 0.0
      %690 = vmatprep.subr.mxu0 0.0
      %691 = vmatpush1.msra.mxu0 0.0
      %692 = vmatprep.subr.mxu0 0.0
      %693 = vmatpush1.msra.mxu0 0.0
      %694 = vmatprep.subr.mxu0 0.0
      %695 = vmatpush1.msra.mxu0 0.0
      %696 = vmatprep.subr.mxu0 0.0
      %697 = vmatpush1.msra.mxu0 0.0
      %698 = vmatprep.subr.mxu0 0.0
      %699 = vmatpush1.msra.mxu0 0.0
      %700 = vmatprep.mubr.f32.mxu0 0.0
      %701 = vmatmul.mubr.f32.gmra.mrb[0].mxu0 %v524
      %v702 = vpop.f32.mrb[0].mxu0
      %v703 = vadd.f32 %v608, %v702
      %v704 = vpop.f32.mrb[0].mxu0
      %705 = vmatprep.mubr.f32.mxu0 0.0
      %706 = vmatmul.mubr.f32.gmra.mrb[0].mxu0 %v527
      %v707 = vpop.f32.mrb[0].mxu0
      %v708 = vadd.f32 %v613, %v707
      %v709 = vpop.f32.mrb[0].mxu0
      %710 = vmatprep.mubr.f32.mxu0 0.0
      %711 = vmatmul.mubr.f32.gmra.mrb[0].mxu0 %v530
      %v712 = vpop.f32.mrb[0].mxu0
      %v713 = vadd.f32 %v618, %v712
      %v714 = vpop.f32.mrb[0].mxu0
      %715 = vmatprep.mubr.f32.mxu0 0.0
      %716 = vmatmul.mubr.f32.gmra.mrb[0].mxu0 %v533
      %v717 = vpop.f32.mrb[0].mxu0
      %v718 = vadd.f32 %v623, %v717
      %v719 = vpop.f32.mrb[0].mxu0
      %720 = vmatprep.mubr.f32.mxu0 0.0
      %721 = vmatmul.mubr.f32.gmra.mrb[0].mxu0 %v536
      %v722 = vpop.f32.mrb[0].mxu0
      %v723 = vadd.f32 %v628, %v722
      %v724 = vpop.f32.mrb[0].mxu0
      %725 = vmatprep.mubr.f32.mxu0 0.0
      %726 = vmatmul.mubr.f32.gmra.mrb[0].mxu0 %v539
      %v727 = vpop.f32.mrb[0].mxu0
      %v728 = vadd.f32 %v633, %v727
      %v729 = vpop.f32.mrb[0].mxu0
      %730 = vdwg.mxu0
      %v731 = vmax.f32 %v476, %v703
      %v732 = vmax.f32 %v481, %v708
      %v733 = vmax.f32 %v486, %v713
      %v734 = vmax.f32 %v491, %v718
      %v735 = vmax.f32 %v496, %v723
      %v736 = vmax.f32 %v501, %v728
      %s737 = scalar_lea.vmem %s223, 288
      %v738 = vld [vmem:[%s737] sm:$0xff]
      %v739 = vld [vmem:[%s737 + $0x8] sm:$0xff]
      %v740 = vld [vmem:[%s737 + $0x10] sm:$0xff]
      %v741 = vld [vmem:[%s737 + $0x18] sm:$0xff]
      %v742 = vld [vmem:[%s737 + $0x20] sm:$0xff]
      %v743 = vld [vmem:[%s737 + $0x28] sm:$0xff]
      %v744 = vld [vmem:[%s737 + $0x30] sm:$0xff]
      %v745 = vld [vmem:[%s737 + $0x38] sm:$0xff]
      %v746 = vld [vmem:[%s737 + $0x40] sm:$0xff]
      %v747 = vld [vmem:[%s737 + $0x48] sm:$0xff]
      %v748 = vld [vmem:[%s737 + $0x50] sm:$0xff]
      %v749 = vld [vmem:[%s737 + $0x58] sm:$0xff]
      %v750 = vld [vmem:[%s737 + $0x60] sm:$0xff]
      %v751 = vld [vmem:[%s737 + $0x68] sm:$0xff]
      %v752 = vld [vmem:[%s737 + $0x70] sm:$0xff]
      %v753 = vld [vmem:[%s737 + $0x78] sm:$0x1f]
      %v754 = vld [vmem:[%s737 + $0x80] sm:$0x1f]
      %v755 = vld [vmem:[%s737 + $0x88] sm:$0x1f]
      %v757 = vsel %vm295, %v740, 0
      %v760 = vsel %vm295, %v743, 0
      %v763 = vsel %vm295, %v746, 0
      %v766 = vsel %vm295, %v749, 0
      %v769 = vsel %vm295, %v752, 0
      %v772 = vsel %vm295, %v755, 0
      %774 = vmatprep.subr.mxu0 0.0
      %775 = vmatpush1.msra.mxu0 %v241
      %776 = vmatprep.subr.mxu0 0.0
      %777 = vmatpush1.msra.mxu0 %v242
      %778 = vmatprep.subr.mxu0 0.0
      %779 = vmatpush1.msra.mxu0 %v243
      %780 = vmatprep.subr.mxu0 0.0
      %781 = vmatpush1.msra.mxu0 %v244
      %782 = vmatprep.subr.mxu0 0.0
      %783 = vmatpush1.msra.mxu0 %v245
      %784 = vmatprep.subr.mxu0 0.0
      %785 = vmatpush1.msra.mxu0 %v246
      %786 = vmatprep.subr.mxu0 0.0
      %787 = vmatpush1.msra.mxu0 %v247
      %788 = vmatprep.subr.mxu0 0.0
      %789 = vmatpush1.msra.mxu0 %v248
      %790 = vmatprep.subr.mxu0 0.0
      %791 = vmatpush1.msra.mxu0 %v249
      %792 = vmatprep.subr.mxu0 0.0
      %793 = vmatpush1.msra.mxu0 %v250
      %794 = vmatprep.subr.mxu0 0.0
      %795 = vmatpush1.msra.mxu0 %v251
      %796 = vmatprep.subr.mxu0 0.0
      %797 = vmatpush1.msra.mxu0 %v252
      %798 = vmatprep.subr.mxu0 0.0
      %799 = vmatpush1.msra.mxu0 %v253
      %800 = vmatprep.subr.mxu0 0.0
      %801 = vmatpush1.msra.mxu0 %v254
      %802 = vmatprep.subr.mxu0 0.0
      %803 = vmatpush1.msra.mxu0 %v255
      %804 = vmatprep.subr.mxu0 0.0
      %805 = vmatpush1.msra.mxu0 %v256
      %806 = vmatprep.subr.mxu0 0.0
      %807 = vmatpush1.msra.mxu0 %v257
      %808 = vmatprep.subr.mxu0 0.0
      %809 = vmatpush1.msra.mxu0 %v258
      %810 = vmatprep.subr.mxu0 0.0
      %811 = vmatpush1.msra.mxu0 %v259
      %812 = vmatprep.subr.mxu0 0.0
      %813 = vmatpush1.msra.mxu0 %v260
      %814 = vmatprep.subr.mxu0 0.0
      %815 = vmatpush1.msra.mxu0 %v261
      %816 = vmatprep.subr.mxu0 0.0
      %817 = vmatpush1.msra.mxu0 %v262
      %818 = vmatprep.subr.mxu0 0.0
      %819 = vmatpush1.msra.mxu0 %v263
      %820 = vmatprep.subr.mxu0 0.0
      %821 = vmatpush1.msra.mxu0 %v264
      %822 = vmatprep.subr.mxu0 0.0
      %823 = vmatpush1.msra.mxu0 %v265
      %824 = vmatprep.subr.mxu0 0.0
      %825 = vmatpush1.msra.mxu0 %v266
      %826 = vmatprep.subr.mxu0 0.0
      %827 = vmatpush1.msra.mxu0 %v267
      %828 = vmatprep.subr.mxu0 0.0
      %829 = vmatpush1.msra.mxu0 %v268
      %830 = vmatprep.subr.mxu0 0.0
      %831 = vmatpush1.msra.mxu0 %v269
      %832 = vmatprep.subr.mxu0 0.0
      %833 = vmatpush1.msra.mxu0 %v270
      %834 = vmatprep.subr.mxu0 0.0
      %835 = vmatpush1.msra.mxu0 %v271
      %836 = vmatprep.subr.mxu0 0.0
      %837 = vmatpush1.msra.mxu0 %v272
      %838 = vmatprep.mubr.f32.mxu0 %v739
      %839 = vmatmul.mubr.f32.gmra.mrb[0].mxu0 %v738
      %v840 = vpop.f32.mrb[0].mxu0
      %v841 = vadd.f32 0.0, %v840
      %v842 = vpop.f32.mrb[0].mxu0
      %843 = vmatprep.mubr.f32.mxu0 %v742
      %844 = vmatmul.mubr.f32.gmra.mrb[0].mxu0 %v741
      %v845 = vpop.f32.mrb[0].mxu0
      %v846 = vadd.f32 0.0, %v845
      %v847 = vpop.f32.mrb[0].mxu0
      %848 = vmatprep.mubr.f32.mxu0 %v745
      %849 = vmatmul.mubr.f32.gmra.mrb[0].mxu0 %v744
      %v850 = vpop.f32.mrb[0].mxu0
      %v851 = vadd.f32 0.0, %v850
      %v852 = vpop.f32.mrb[0].mxu0
      %853 = vmatprep.mubr.f32.mxu0 %v748
      %854 = vmatmul.mubr.f32.gmra.mrb[0].mxu0 %v747
      %v855 = vpop.f32.mrb[0].mxu0
      %v856 = vadd.f32 0.0, %v855
      %v857 = vpop.f32.mrb[0].mxu0
      %858 = vmatprep.mubr.f32.mxu0 %v751
      %859 = vmatmul.mubr.f32.gmra.mrb[0].mxu0 %v750
      %v860 = vpop.f32.mrb[0].mxu0
      %v861 = vadd.f32 0.0, %v860
      %v862 = vpop.f32.mrb[0].mxu0
      %863 = vmatprep.mubr.f32.mxu0 %v754
      %864 = vmatmul.mubr.f32.gmra.mrb[0].mxu0 %v753
      %v865 = vpop.f32.mrb[0].mxu0
      %v866 = vadd.f32 0.0, %v865
      %v867 = vpop.f32.mrb[0].mxu0
      %868 = vdwg.mxu0
      %869 = vmatprep.subr.mxu0 0.0
      %870 = vmatpush1.msra.mxu0 %v273
      %871 = vmatprep.subr.mxu0 0.0
      %872 = vmatpush1.msra.mxu0 %v274
      %873 = vmatprep.subr.mxu0 0.0
      %874 = vmatpush1.msra.mxu0 %v275
      %875 = vmatprep.subr.mxu0 0.0
      %876 = vmatpush1.msra.mxu0 %v276
      %877 = vmatprep.subr.mxu0 0.0
      %878 = vmatpush1.msra.mxu0 0.0
      %879 = vmatprep.subr.mxu0 0.0
      %880 = vmatpush1.msra.mxu0 0.0
      %881 = vmatprep.subr.mxu0 0.0
      %882 = vmatpush1.msra.mxu0 0.0
      %883 = vmatprep.subr.mxu0 0.0
      %884 = vmatpush1.msra.mxu0 0.0
      %885 = vmatprep.subr.mxu0 0.0
      %886 = vmatpush1.msra.mxu0 0.0
      %887 = vmatprep.subr.mxu0 0.0
      %888 = vmatpush1.msra.mxu0 0.0
      %889 = vmatprep.subr.mxu0 0.0
      %890 = vmatpush1.msra.mxu0 0.0
      %891 = vmatprep.subr.mxu0 0.0
      %892 = vmatpush1.msra.mxu0 0.0
      %893 = vmatprep.subr.mxu0 0.0
      %894 = vmatpush1.msra.mxu0 0.0
      %895 = vmatprep.subr.mxu0 0.0
      %896 = vmatpush1.msra.mxu0 0.0
      %897 = vmatprep.subr.mxu0 0.0
      %898 = vmatpush1.msra.mxu0 0.0
      %899 = vmatprep.subr.mxu0 0.0
      %900 = vmatpush1.msra.mxu0 0.0
      %901 = vmatprep.subr.mxu0 0.0
      %902 = vmatpush1.msra.mxu0 0.0
      %903 = vmatprep.subr.mxu0 0.0
      %904 = vmatpush1.msra.mxu0 0.0
      %905 = vmatprep.subr.mxu0 0.0
      %906 = vmatpush1.msra.mxu0 0.0
      %907 = vmatprep.subr.mxu0 0.0
      %908 = vmatpush1.msra.mxu0 0.0
      %909 = vmatprep.subr.mxu0 0.0
      %910 = vmatpush1.msra.mxu0 0.0
      %911 = vmatprep.subr.mxu0 0.0
      %912 = vmatpush1.msra.mxu0 0.0
      %913 = vmatprep.subr.mxu0 0.0
      %914 = vmatpush1.msra.mxu0 0.0
      %915 = vmatprep.subr.mxu0 0.0
      %916 = vmatpush1.msra.mxu0 0.0
      %917 = vmatprep.subr.mxu0 0.0
      %918 = vmatpush1.msra.mxu0 0.0
      %919 = vmatprep.subr.mxu0 0.0
      %920 = vmatpush1.msra.mxu0 0.0
      %921 = vmatprep.subr.mxu0 0.0
      %922 = vmatpush1.msra.mxu0 0.0
      %923 = vmatprep.subr.mxu0 0.0
      %924 = vmatpush1.msra.mxu0 0.0
      %925 = vmatprep.subr.mxu0 0.0
      %926 = vmatpush1.msra.mxu0 0.0
      %927 = vmatprep.subr.mxu0 0.0
      %928 = vmatpush1.msra.mxu0 0.0
      %929 = vmatprep.subr.mxu0 0.0
      %930 = vmatpush1.msra.mxu0 0.0
      %931 = vmatprep.subr.mxu0 0.0
      %932 = vmatpush1.msra.mxu0 0.0
      %933 = vmatprep.mubr.f32.mxu0 0.0
      %934 = vmatmul.mubr.f32.gmra.mrb[0].mxu0 %v757
      %v935 = vpop.f32.mrb[0].mxu0
      %v936 = vadd.f32 %v841, %v935
      %v937 = vpop.f32.mrb[0].mxu0
      %938 = vmatprep.mubr.f32.mxu0 0.0
      %939 = vmatmul.mubr.f32.gmra.mrb[0].mxu0 %v760
      %v940 = vpop.f32.mrb[0].mxu0
      %v941 = vadd.f32 %v846, %v940
      %v942 = vpop.f32.mrb[0].mxu0
      %943 = vmatprep.mubr.f32.mxu0 0.0
      %944 = vmatmul.mubr.f32.gmra.mrb[0].mxu0 %v763
      %v945 = vpop.f32.mrb[0].mxu0
      %v946 = vadd.f32 %v851, %v945
      %v947 = vpop.f32.mrb[0].mxu0
      %948 = vmatprep.mubr.f32.mxu0 0.0
      %949 = vmatmul.mubr.f32.gmra.mrb[0].mxu0 %v766
      %v950 = vpop.f32.mrb[0].mxu0
      %v951 = vadd.f32 %v856, %v950
      %v952 = vpop.f32.mrb[0].mxu0
      %953 = vmatprep.mubr.f32.mxu0 0.0
      %954 = vmatmul.mubr.f32.gmra.mrb[0].mxu0 %v769
      %v955 = vpop.f32.mrb[0].mxu0
      %v956 = vadd.f32 %v861, %v955
      %v957 = vpop.f32.mrb[0].mxu0
      %958 = vmatprep.mubr.f32.mxu0 0.0
      %959 = vmatmul.mubr.f32.gmra.mrb[0].mxu0 %v772
      %v960 = vpop.f32.mrb[0].mxu0
      %v961 = vadd.f32 %v866, %v960
      %v962 = vpop.f32.mrb[0].mxu0
      %963 = vdwg.mxu0
      %v964 = vmax.f32 %v731, %v936
      %v965 = vmax.f32 %v732, %v941
      %v966 = vmax.f32 %v733, %v946
      %v967 = vmax.f32 %v734, %v951
      %v968 = vmax.f32 %v735, %v956
      %v969 = vmax.f32 %v736, %v961
      %s970 = scalar_lea.vmem %s223, 432
      %v971 = vld [vmem:[%s970] sm:$0xff]
      %v972 = vld [vmem:[%s970 + $0x8] sm:$0xff]
      %v973 = vld [vmem:[%s970 + $0x10] sm:$0xff]
      %v974 = vld [vmem:[%s970 + $0x18] sm:$0xff]
      %v975 = vld [vmem:[%s970 + $0x20] sm:$0xff]
      %v976 = vld [vmem:[%s970 + $0x28] sm:$0xff]
      %v977 = vld [vmem:[%s970 + $0x30] sm:$0xff]
      %v978 = vld [vmem:[%s970 + $0x38] sm:$0xff]
      %v979 = vld [vmem:[%s970 + $0x40] sm:$0xff]
      %v980 = vld [vmem:[%s970 + $0x48] sm:$0xff]
      %v981 = vld [vmem:[%s970 + $0x50] sm:$0xff]
      %v982 = vld [vmem:[%s970 + $0x58] sm:$0xff]
      %v983 = vld [vmem:[%s970 + $0x60] sm:$0xff]
      %v984 = vld [vmem:[%s970 + $0x68] sm:$0xff]
      %v985 = vld [vmem:[%s970 + $0x70] sm:$0xff]
      %v986 = vld [vmem:[%s970 + $0x78] sm:$0x1f]
      %v987 = vld [vmem:[%s970 + $0x80] sm:$0x1f]
      %v988 = vld [vmem:[%s970 + $0x88] sm:$0x1f]
      %v990 = vsel %vm295, %v973, 0
      %v993 = vsel %vm295, %v976, 0
      %v996 = vsel %vm295, %v979, 0
      %v999 = vsel %vm295, %v982, 0
      %v1002 = vsel %vm295, %v985, 0
      %v1005 = vsel %vm295, %v988, 0
      %1007 = vmatprep.subr.mxu0 0.0
      %1008 = vmatpush1.msra.mxu0 %v241
      %1009 = vmatprep.subr.mxu0 0.0
      %1010 = vmatpush1.msra.mxu0 %v242
      %1011 = vmatprep.subr.mxu0 0.0
      %1012 = vmatpush1.msra.mxu0 %v243
      %1013 = vmatprep.subr.mxu0 0.0
      %1014 = vmatpush1.msra.mxu0 %v244
      %1015 = vmatprep.subr.mxu0 0.0
      %1016 = vmatpush1.msra.mxu0 %v245
      %1017 = vmatprep.subr.mxu0 0.0
      %1018 = vmatpush1.msra.mxu0 %v246
      %1019 = vmatprep.subr.mxu0 0.0
      %1020 = vmatpush1.msra.mxu0 %v247
      %1021 = vmatprep.subr.mxu0 0.0
      %1022 = vmatpush1.msra.mxu0 %v248
      %1023 = vmatprep.subr.mxu0 0.0
      %1024 = vmatpush1.msra.mxu0 %v249
      %1025 = vmatprep.subr.mxu0 0.0
      %1026 = vmatpush1.msra.mxu0 %v250
      %1027 = vmatprep.subr.mxu0 0.0
      %1028 = vmatpush1.msra.mxu0 %v251
      %1029 = vmatprep.subr.mxu0 0.0
      %1030 = vmatpush1.msra.mxu0 %v252
      %1031 = vmatprep.subr.mxu0 0.0
      %1032 = vmatpush1.msra.mxu0 %v253
      %1033 = vmatprep.subr.mxu0 0.0
      %1034 = vmatpush1.msra.mxu0 %v254
      %1035 = vmatprep.subr.mxu0 0.0
      %1036 = vmatpush1.msra.mxu0 %v255
      %1037 = vmatprep.subr.mxu0 0.0
      %1038 = vmatpush1.msra.mxu0 %v256
      %1039 = vmatprep.subr.mxu0 0.0
      %1040 = vmatpush1.msra.mxu0 %v257
      %1041 = vmatprep.subr.mxu0 0.0
      %1042 = vmatpush1.msra.mxu0 %v258
      %1043 = vmatprep.subr.mxu0 0.0
      %1044 = vmatpush1.msra.mxu0 %v259
      %1045 = vmatprep.subr.mxu0 0.0
      %1046 = vmatpush1.msra.mxu0 %v260
      %1047 = vmatprep.subr.mxu0 0.0
      %1048 = vmatpush1.msra.mxu0 %v261
      %1049 = vmatprep.subr.mxu0 0.0
      %1050 = vmatpush1.msra.mxu0 %v262
      %1051 = vmatprep.subr.mxu0 0.0
      %1052 = vmatpush1.msra.mxu0 %v263
      %1053 = vmatprep.subr.mxu0 0.0
      %1054 = vmatpush1.msra.mxu0 %v264
      %1055 = vmatprep.subr.mxu0 0.0
      %1056 = vmatpush1.msra.mxu0 %v265
      %1057 = vmatprep.subr.mxu0 0.0
      %1058 = vmatpush1.msra.mxu0 %v266
      %1059 = vmatprep.subr.mxu0 0.0
      %1060 = vmatpush1.msra.mxu0 %v267
      %1061 = vmatprep.subr.mxu0 0.0
      %1062 = vmatpush1.msra.mxu0 %v268
      %1063 = vmatprep.subr.mxu0 0.0
      %1064 = vmatpush1.msra.mxu0 %v269
      %1065 = vmatprep.subr.mxu0 0.0
      %1066 = vmatpush1.msra.mxu0 %v270
      %1067 = vmatprep.subr.mxu0 0.0
      %1068 = vmatpush1.msra.mxu0 %v271
      %1069 = vmatprep.subr.mxu0 0.0
      %1070 = vmatpush1.msra.mxu0 %v272
      %1071 = vmatprep.mubr.f32.mxu0 %v972
      %1072 = vmatmul.mubr.f32.gmra.mrb[0].mxu0 %v971
      %v1073 = vpop.f32.mrb[0].mxu0
      %v1074 = vadd.f32 0.0, %v1073
      %v1075 = vpop.f32.mrb[0].mxu0
      %1076 = vmatprep.mubr.f32.mxu0 %v975
      %1077 = vmatmul.mubr.f32.gmra.mrb[0].mxu0 %v974
      %v1078 = vpop.f32.mrb[0].mxu0
      %v1079 = vadd.f32 0.0, %v1078
      %v1080 = vpop.f32.mrb[0].mxu0
      %1081 = vmatprep.mubr.f32.mxu0 %v978
      %1082 = vmatmul.mubr.f32.gmra.mrb[0].mxu0 %v977
      %v1083 = vpop.f32.mrb[0].mxu0
      %v1084 = vadd.f32 0.0, %v1083
      %v1085 = vpop.f32.mrb[0].mxu0
      %1086 = vmatprep.mubr.f32.mxu0 %v981
      %1087 = vmatmul.mubr.f32.gmra.mrb[0].mxu0 %v980
      %v1088 = vpop.f32.mrb[0].mxu0
      %v1089 = vadd.f32 0.0, %v1088
      %v1090 = vpop.f32.mrb[0].mxu0
      %1091 = vmatprep.mubr.f32.mxu0 %v984
      %1092 = vmatmul.mubr.f32.gmra.mrb[0].mxu0 %v983
      %v1093 = vpop.f32.mrb[0].mxu0
      %v1094 = vadd.f32 0.0, %v1093
      %v1095 = vpop.f32.mrb[0].mxu0
      %1096 = vmatprep.mubr.f32.mxu0 %v987
      %1097 = vmatmul.mubr.f32.gmra.mrb[0].mxu0 %v986
      %v1098 = vpop.f32.mrb[0].mxu0
      %v1099 = vadd.f32 0.0, %v1098
      %v1100 = vpop.f32.mrb[0].mxu0
      %1101 = vdwg.mxu0
      %1102 = vmatprep.subr.mxu0 0.0
      %1103 = vmatpush1.msra.mxu0 %v273
      %1104 = vmatprep.subr.mxu0 0.0
      %1105 = vmatpush1.msra.mxu0 %v274
      %1106 = vmatprep.subr.mxu0 0.0
      %1107 = vmatpush1.msra.mxu0 %v275
      %1108 = vmatprep.subr.mxu0 0.0
      %1109 = vmatpush1.msra.mxu0 %v276
      %1110 = vmatprep.subr.mxu0 0.0
      %1111 = vmatpush1.msra.mxu0 0.0
      %1112 = vmatprep.subr.mxu0 0.0
      %1113 = vmatpush1.msra.mxu0 0.0
      %1114 = vmatprep.subr.mxu0 0.0
      %1115 = vmatpush1.msra.mxu0 0.0
      %1116 = vmatprep.subr.mxu0 0.0
      %1117 = vmatpush1.msra.mxu0 0.0
      %1118 = vmatprep.subr.mxu0 0.0
      %1119 = vmatpush1.msra.mxu0 0.0
      %1120 = vmatprep.subr.mxu0 0.0
      %1121 = vmatpush1.msra.mxu0 0.0
      %1122 = vmatprep.subr.mxu0 0.0
      %1123 = vmatpush1.msra.mxu0 0.0
      %1124 = vmatprep.subr.mxu0 0.0
      %1125 = vmatpush1.msra.mxu0 0.0
      %1126 = vmatprep.subr.mxu0 0.0
      %1127 = vmatpush1.msra.mxu0 0.0
      %1128 = vmatprep.subr.mxu0 0.0
      %1129 = vmatpush1.msra.mxu0 0.0
      %1130 = vmatprep.subr.mxu0 0.0
      %1131 = vmatpush1.msra.mxu0 0.0
      %1132 = vmatprep.subr.mxu0 0.0
      %1133 = vmatpush1.msra.mxu0 0.0
      %1134 = vmatprep.subr.mxu0 0.0
      %1135 = vmatpush1.msra.mxu0 0.0
      %1136 = vmatprep.subr.mxu0 0.0
      %1137 = vmatpush1.msra.mxu0 0.0
      %1138 = vmatprep.subr.mxu0 0.0
      %1139 = vmatpush1.msra.mxu0 0.0
      %1140 = vmatprep.subr.mxu0 0.0
      %1141 = vmatpush1.msra.mxu0 0.0
      %1142 = vmatprep.subr.mxu0 0.0
      %1143 = vmatpush1.msra.mxu0 0.0
      %1144 = vmatprep.subr.mxu0 0.0
      %1145 = vmatpush1.msra.mxu0 0.0
      %1146 = vmatprep.subr.mxu0 0.0
      %1147 = vmatpush1.msra.mxu0 0.0
      %1148 = vmatprep.subr.mxu0 0.0
      %1149 = vmatpush1.msra.mxu0 0.0
      %1150 = vmatprep.subr.mxu0 0.0
      %1151 = vmatpush1.msra.mxu0 0.0
      %1152 = vmatprep.subr.mxu0 0.0
      %1153 = vmatpush1.msra.mxu0 0.0
      %1154 = vmatprep.subr.mxu0 0.0
      %1155 = vmatpush1.msra.mxu0 0.0
      %1156 = vmatprep.subr.mxu0 0.0
      %1157 = vmatpush1.msra.mxu0 0.0
      %1158 = vmatprep.subr.mxu0 0.0
      %1159 = vmatpush1.msra.mxu0 0.0
      %1160 = vmatprep.subr.mxu0 0.0
      %1161 = vmatpush1.msra.mxu0 0.0
      %1162 = vmatprep.subr.mxu0 0.0
      %1163 = vmatpush1.msra.mxu0 0.0
      %1164 = vmatprep.subr.mxu0 0.0
      %1165 = vmatpush1.msra.mxu0 0.0
      %1166 = vmatprep.mubr.f32.mxu0 0.0
      %1167 = vmatmul.mubr.f32.gmra.mrb[0].mxu0 %v990
      %v1168 = vpop.f32.mrb[0].mxu0
      %v1169 = vadd.f32 %v1074, %v1168
      %v1170 = vpop.f32.mrb[0].mxu0
      %1171 = vmatprep.mubr.f32.mxu0 0.0
      %1172 = vmatmul.mubr.f32.gmra.mrb[0].mxu0 %v993
      %v1173 = vpop.f32.mrb[0].mxu0
      %v1174 = vadd.f32 %v1079, %v1173
      %v1175 = vpop.f32.mrb[0].mxu0
      %1176 = vmatprep.mubr.f32.mxu0 0.0
      %1177 = vmatmul.mubr.f32.gmra.mrb[0].mxu0 %v996
      %v1178 = vpop.f32.mrb[0].mxu0
      %v1179 = vadd.f32 %v1084, %v1178
      %v1180 = vpop.f32.mrb[0].mxu0
      %1181 = vmatprep.mubr.f32.mxu0 0.0
      %1182 = vmatmul.mubr.f32.gmra.mrb[0].mxu0 %v999
      %v1183 = vpop.f32.mrb[0].mxu0
      %v1184 = vadd.f32 %v1089, %v1183
      %v1185 = vpop.f32.mrb[0].mxu0
      %1186 = vmatprep.mubr.f32.mxu0 0.0
      %1187 = vmatmul.mubr.f32.gmra.mrb[0].mxu0 %v1002
      %v1188 = vpop.f32.mrb[0].mxu0
      %v1189 = vadd.f32 %v1094, %v1188
      %v1190 = vpop.f32.mrb[0].mxu0
      %1191 = vmatprep.mubr.f32.mxu0 0.0
      %1192 = vmatmul.mubr.f32.gmra.mrb[0].mxu0 %v1005
      %v1193 = vpop.f32.mrb[0].mxu0
      %v1194 = vadd.f32 %v1099, %v1193
      %v1195 = vpop.f32.mrb[0].mxu0
      %1196 = vdwg.mxu0
      %v1197 = vmax.f32 %v964, %v1169
      %v1198 = vmax.f32 %v965, %v1174
      %v1199 = vmax.f32 %v966, %v1179
      %v1200 = vmax.f32 %v967, %v1184
      %v1201 = vmax.f32 %v968, %v1189
      %v1202 = vmax.f32 %v969, %v1194
      %v1203 = vld [vmem:[%s231] sm:$0x1]
      %v1205 = vlaneseq
      %v1206 = vshrl.u32 %v1205, 7
      %v1207 = vsub.s32 0, %v1206
      %v1208 = vrot.slane %v1203, %v1207
      %v1210 = vadd.f32 %v1197, %v1208
      %v1211 = vadd.f32 %v1198, %v1208
      %v1212 = vadd.f32 %v1199, %v1208
      %v1213 = vadd.f32 %v1200, %v1208
      %v1214 = vadd.f32 %v1201, %v1208
      %v1215 = vadd.f32 %v1202, %v1208
      %vm1216 = vcmp.ge.f32.partialorder %v1210, 0.0
      %vm1217 = vcmp.ge.f32.partialorder %v1211, 0.0
      %vm1218 = vcmp.ge.f32.partialorder %v1212, 0.0
      %vm1219 = vcmp.ge.f32.partialorder %v1213, 0.0
      %vm1220 = vcmp.ge.f32.partialorder %v1214, 0.0
      %vm1221 = vcmp.ge.f32.partialorder %v1215, 0.0
      %v1222 = vmul.f32 %v1210, 0.01
      %v1223 = vmul.f32 %v1211, 0.01
      %v1224 = vmul.f32 %v1212, 0.01
      %v1225 = vmul.f32 %v1213, 0.01
      %v1226 = vmul.f32 %v1214, 0.01
      %v1227 = vmul.f32 %v1215, 0.01
      %v1228 = vsel %vm1216, %v1210, %v1222
      %v1229 = vsel %vm1217, %v1211, %v1223
      %v1230 = vsel %vm1218, %v1212, %v1224
      %v1231 = vsel %vm1219, %v1213, %v1225
      %v1232 = vsel %vm1220, %v1214, %v1226
      %v1233 = vsel %vm1221, %v1215, %v1227
      %vm1234 = vcmask 523264
      %1235 = vst.msk [vmem:[%s240] sm:$0xff] %vm1234, %v1228
      %1236 = vst.msk [vmem:[%s240 + $0x8] sm:$0xff] %vm1234, %v1229
      %1237 = vst.msk [vmem:[%s240 + $0x10] sm:$0xff] %vm1234, %v1230
      %1238 = vst.msk [vmem:[%s240 + $0x18] sm:$0xff] %vm1234, %v1231
      %1239 = vst.msk [vmem:[%s240 + $0x20] sm:$0xff] %vm1234, %v1232
      %vm1240 = vcmask 520192
      %1241 = vst.msk [vmem:[%s240 + $0x28] sm:$0x1f] %vm1240, %v1233
      %p1242 = scmp.lt.s32.totalorder %s18, 1
      %s1243 = scalar_select %p1242, %s18, 1
      %p1244 = scmp.lt.s32.totalorder %s19, 1
      %s1245 = scalar_select %p1244, %s19, 1
      %s1246 = smul.addr %s1245, 6
      %s1247 = smul.addr %s1243, 12
      %s1248 = sadd.s32 %s1246, %s1247
      %s1249 = smul.addr %s1248, 8
      %s1250 = scalar_lea.vmem %s3, %s1249
      // Predicated region
      $region33: #{cnn_forward.4} parent=31 // pred_check
        %p1251 = pneg %p126
      $region34: #{cnn_forward.4} parent=31 // pred_check_branch
        %1253 = sbr.rel (%p1251) target = $region36
      $region35: #{cnn_forward.4} parent=31 // pred_region
        _
      $region36: #{cnn_forward.4} parent=31 // pred_fallthru
        _
    $region32: #{cnn_forward.4} parent=5 // pred_fallthru
      _
    %p1254 = scmp.le.s32.totalorder 2, %s9
    // Predicated region
    $region37: #{cnn_forward.4} parent=5 // pred_check
      %p1255 = pneg %p1254
    $region38: #{cnn_forward.4} parent=5 // pred_check_branch
      %1257 = sbr.rel (%p1255) target = $region40
    $region39: #{cnn_forward.4} parent=5 // pred_region
      %s1258 = ssub.s32 %s9, 2
      // Predicated region
      $region41: #{cnn_forward.4} parent=39 // pred_check
        %p1259 = pneg %p132
      $region42: #{cnn_forward.4} parent=39 // pred_check_branch
        %1261 = sbr.rel (%p1259) target = $region44
      $region43: #{cnn_forward.4} parent=39 // pred_region
        %p1262 = scmp.lt.s32.totalorder %s20, 1
        %s1263 = scalar_select %p1262, %s20, 1
        %p1264 = scmp.lt.s32.totalorder %s21, 1
        %s1265 = scalar_select %p1264, %s21, 1
        %s1266 = smul.addr %s1265, 6
        %s1267 = smul.addr %s1263, 12
        %s1268 = sadd.s32 %s1266, %s1267
        %s1269 = smul.addr %s1268, 8
        %s1270 = scalar_lea.vmem %s3, %s1269
      $region44: #{cnn_forward.4} parent=39 // pred_fallthru
        _
    $region40: #{cnn_forward.4} parent=5 // pred_fallthru
      _
  $region6: #{cnn_forward.4} parent=0 // loop_footer
    %s13 = sadd.s32 1, %s9
  $region7: #{cnn_forward.4} parent=0 // loop_footer_branch
    %8 = sbr.rel target = $region3
  $region8: #{cnn_forward.4} parent=0 // loop_exit
    _

// kernel: cnn_forward.5
$region0: #{cnn_forward.5}
  #allocation0 [shape = 'u32[]', space=smem, size = 0x4, offset = 0x4, fixed_abs, tag = 'smem constant byte address 0x4 - core index']
  #allocation1 [shape = 'u32[144,128]{1,0:T(1,128)}', space=vmem, size = 0x12000, scoped, tag = 'internal scratch']
  %s0 = inlined_call_operand.vmem [shape: f32[2,2,2880], index: 0, kind: input, shape index: {}]
  %s1 = inlined_call_operand.vmem [shape: f32[2,2880,128], index: 1, kind: input, shape index: {}]
  %s2 = inlined_call_operand.vmem [shape: f32[2,1,128], index: 2, kind: input, shape index: {}]
  %s3 = inlined_call_operand.vmem [shape: f32[2,128,10], index: 3, kind: input, shape index: {}]
  %s4 = inlined_call_operand.vmem [shape: f32[2,1,10], index: 4, kind: input, shape index: {}]
  %s5 = inlined_call_operand.vmem [shape: f32[2,2,10], index: 5, kind: output, shape index: {}]
  %s6 = sld [smem:[#allocation0]]
  $region53: #{cnn_forward.5} parent=0
    _
  %s8 = ssub.s32 1, %s6
  %s9 = scalar_select 0, %s8, %s6
  loop: start=0, step=1, limit=4
  $region2: #{cnn_forward.5} parent=0 // loop_pre_header
    _
  $region3: #{cnn_forward.5} parent=0 // loop_header
    %s11 = sphi 0, %s15
    %p12 = scmp.ge.s32.totalorder %s11, 4
    %s21 = sphi 0, %s23
    %s24 = sphi 0, %s21
    %s25 = sphi 0, %s24
    %s41 = sphi 0, %s25
    %s47 = sphi 0, %s49
    %s50 = sphi 0, %s47
    %s51 = sphi 0, %s50
    %s67 = sphi 0, %s51
    %s73 = sphi 0, %s75
    %s76 = sphi 0, %s73
    %s77 = sphi 0, %s76
    %s93 = sphi 0, %s77
    %s99 = sphi 0, %s101
    %s102 = sphi 0, %s99
    %s103 = sphi 0, %s102
    %s119 = sphi 0, %s103
    %s125 = sphi 0, %s127
    %s128 = sphi 0, %s125
    %s129 = sphi 0, %s128
    %s145 = sphi 0, %s129
    %s151 = sphi 0, %s153
    %s154 = sphi 0, %s151
    %s155 = sphi 0, %s154
    %s171 = sphi 0, %s155
  $region4: #{cnn_forward.5} parent=0 // loop_header_branch
    %14 = sbr.rel (%p12) target = $region8
  $region5: #{cnn_forward.5} parent=0 // loop_body
    %s16 = ssub.s32 %s11, 1
    %s17 = ssub.s32 %s11, 2
    %s18 = sadd.s32 %s11, 1
    %s19 = ssub.s32 %s11, %s18
    %p20 = scmp.eq.s32.totalorder %s19, 0
    %s22 = sadd.s32 %s21, 1
    %s23 = scalar_select %p20, %s21, %s22
    %p26 = pneg %p20
    %p27 = scmp.eq.s32.totalorder %s11, 1
    %p28 = por %p26, %p27
    %p29 = scmp.ne.s32.totalorder %s21, %s24
    %p30 = scmp.eq.s32.totalorder %s11, 0
    %p31 = por %p29, %p30
    %p32 = scmp.ne.s32.totalorder %s21, %s24
    %p33 = scmp.eq.s32.totalorder %s16, 1
    %p34 = por %p32, %p33
    %p35 = scmp.ne.s32.totalorder %s24, %s25
    %p36 = scmp.eq.s32.totalorder %s16, 0
    %p37 = por %p35, %p36
    %p38 = scmp.ne.s32.totalorder %s24, %s25
    %p39 = scmp.eq.s32.totalorder %s17, 1
    %p40 = por %p38, %p39
    %p42 = scmp.ne.s32.totalorder %s25, %s41
    %p43 = scmp.eq.s32.totalorder %s17, 0
    %p44 = por %p42, %p43
    %s45 = ssub.s32 %s11, %s18
    %p46 = scmp.eq.s32.totalorder %s45, 0
    %s48 = sadd.s32 %s47, 1
    %s49 = scalar_select %p46, %s47, %s48
    %p52 = pneg %p46
    %p53 = scmp.eq.s32.totalorder %s11, 1
    %p54 = por %p52, %p53
    %p55 = scmp.ne.s32.totalorder %s47, %s50
    %p56 = scmp.eq.s32.totalorder %s11, 0
    %p57 = por %p55, %p56
    %p58 = scmp.ne.s32.totalorder %s47, %s50
    %p59 = scmp.eq.s32.totalorder %s16, 1
    %p60 = por %p58, %p59
    %p61 = scmp.ne.s32.totalorder %s50, %s51
    %p62 = scmp.eq.s32.totalorder %s16, 0
    %p63 = por %p61, %p62
    %p64 = scmp.ne.s32.totalorder %s50, %s51
    %p65 = scmp.eq.s32.totalorder %s17, 1
    %p66 = por %p64, %p65
    %p68 = scmp.ne.s32.totalorder %s51, %s67
    %p69 = scmp.eq.s32.totalorder %s17, 0
    %p70 = por %p68, %p69
    %s71 = ssub.s32 %s11, %s18
    %p72 = scmp.eq.s32.totalorder %s71, 0
    %s74 = sadd.s32 %s73, 1
    %s75 = scalar_select %p72, %s73, %s74
    %p78 = pneg %p72
    %p79 = scmp.eq.s32.totalorder %s11, 1
    %p80 = por %p78, %p79
    %p81 = scmp.ne.s32.totalorder %s73, %s76
    %p82 = scmp.eq.s32.totalorder %s11, 0
    %p83 = por %p81, %p82
    %p84 = scmp.ne.s32.totalorder %s73, %s76
    %p85 = scmp.eq.s32.totalorder %s16, 1
    %p86 = por %p84, %p85
    %p87 = scmp.ne.s32.totalorder %s76, %s77
    %p88 = scmp.eq.s32.totalorder %s16, 0
    %p89 = por %p87, %p88
    %p90 = scmp.ne.s32.totalorder %s76, %s77
    %p91 = scmp.eq.s32.totalorder %s17, 1
    %p92 = por %p90, %p91
    %p94 = scmp.ne.s32.totalorder %s77, %s93
    %p95 = scmp.eq.s32.totalorder %s17, 0
    %p96 = por %p94, %p95
    %s97 = ssub.s32 %s11, %s18
    %p98 = scmp.eq.s32.totalorder %s97, 0
    %s100 = sadd.s32 %s99, 1
    %s101 = scalar_select %p98, %s99, %s100
    %p104 = pneg %p98
    %p105 = scmp.eq.s32.totalorder %s11, 1
    %p106 = por %p104, %p105
    %p107 = scmp.ne.s32.totalorder %s99, %s102
    %p108 = scmp.eq.s32.totalorder %s11, 0
    %p109 = por %p107, %p108
    %p110 = scmp.ne.s32.totalorder %s99, %s102
    %p111 = scmp.eq.s32.totalorder %s16, 1
    %p112 = por %p110, %p111
    %p113 = scmp.ne.s32.totalorder %s102, %s103
    %p114 = scmp.eq.s32.totalorder %s16, 0
    %p115 = por %p113, %p114
    %p116 = scmp.ne.s32.totalorder %s102, %s103
    %p117 = scmp.eq.s32.totalorder %s17, 1
    %p118 = por %p116, %p117
    %p120 = scmp.ne.s32.totalorder %s103, %s119
    %p121 = scmp.eq.s32.totalorder %s17, 0
    %p122 = por %p120, %p121
    %s123 = ssub.s32 %s11, %s18
    %p124 = scmp.eq.s32.totalorder %s123, 0
    %s126 = sadd.s32 %s125, 1
    %s127 = scalar_select %p124, %s125, %s126
    %p130 = pneg %p124
    %p131 = scmp.eq.s32.totalorder %s11, 1
    %p132 = por %p130, %p131
    %p133 = scmp.ne.s32.totalorder %s125, %s128
    %p134 = scmp.eq.s32.totalorder %s11, 0
    %p135 = por %p133, %p134
    %p136 = scmp.ne.s32.totalorder %s125, %s128
    %p137 = scmp.eq.s32.totalorder %s16, 1
    %p138 = por %p136, %p137
    %p139 = scmp.ne.s32.totalorder %s128, %s129
    %p140 = scmp.eq.s32.totalorder %s16, 0
    %p141 = por %p139, %p140
    %p142 = scmp.ne.s32.totalorder %s128, %s129
    %p143 = scmp.eq.s32.totalorder %s17, 1
    %p144 = por %p142, %p143
    %p146 = scmp.ne.s32.totalorder %s129, %s145
    %p147 = scmp.eq.s32.totalorder %s17, 0
    %p148 = por %p146, %p147
    %s149 = ssub.s32 %s11, %s18
    %p150 = scmp.eq.s32.totalorder %s149, 0
    %s152 = sadd.s32 %s151, 1
    %s153 = scalar_select %p150, %s151, %s152
    %p156 = pneg %p150
    %p157 = scmp.eq.s32.totalorder %s11, 1
    %p158 = por %p156, %p157
    %p159 = scmp.ne.s32.totalorder %s151, %s154
    %p160 = scmp.eq.s32.totalorder %s11, 0
    %p161 = por %p159, %p160
    %p162 = scmp.ne.s32.totalorder %s151, %s154
    %p163 = scmp.eq.s32.totalorder %s16, 1
    %p164 = por %p162, %p163
    %p165 = scmp.ne.s32.totalorder %s154, %s155
    %p166 = scmp.eq.s32.totalorder %s16, 0
    %p167 = por %p165, %p166
    %p168 = scmp.ne.s32.totalorder %s154, %s155
    %p169 = scmp.eq.s32.totalorder %s17, 1
    %p170 = por %p168, %p169
    %p172 = scmp.ne.s32.totalorder %s155, %s171
    %p173 = scmp.eq.s32.totalorder %s17, 0
    %p174 = por %p172, %p173
    %p175 = scmp.le.s32.totalorder 1, %s11
    %p176 = scmp.lt.s32.totalorder %s11, 3
    %p177 = pnand %p175, %p176
    %p178 = pneg %p177
    // Predicated region
    $region9: #{cnn_forward.5} parent=5 // pred_check
      _
    $region10: #{cnn_forward.5} parent=5 // pred_check_branch
      %180 = sbr.rel (%p177) target = $region12
    $region11: #{cnn_forward.5} parent=5 // pred_region
      %s181 = ssub.s32 %s11, 1
    $region12: #{cnn_forward.5} parent=5 // pred_fallthru
      _
    %p182 = scmp.lt.s32.totalorder %s11, 2
    // Predicated region
    $region13: #{cnn_forward.5} parent=5 // pred_check
      %p183 = pneg %p182
    $region14: #{cnn_forward.5} parent=5 // pred_check_branch
      %185 = sbr.rel (%p183) target = $region16
    $region15: #{cnn_forward.5} parent=5 // pred_region
      // Predicated region
      $region17: #{cnn_forward.5} parent=15 // pred_check
        %p186 = pneg %p31
      $region18: #{cnn_forward.5} parent=15 // pred_check_branch
        %188 = sbr.rel (%p186) target = $region20
      $region19: #{cnn_forward.5} parent=15 // pred_region
        %p189 = scmp.lt.s32.totalorder %s11, 1
        %s190 = scalar_select %p189, %s11, 1
        %s191 = smul.addr %s190, 23
        %s192 = smul.addr %s191, 2
        %s193 = scalar_lea.vmem %s0, %s192
      $region20: #{cnn_forward.5} parent=15 // pred_fallthru
        _
      // Predicated region
      $region21: #{cnn_forward.5} parent=15 // pred_check
        %p194 = pneg %p57
      $region22: #{cnn_forward.5} parent=15 // pred_check_branch
        %196 = sbr.rel (%p194) target = $region24
      $region23: #{cnn_forward.5} parent=15 // pred_region
        %p197 = scmp.lt.s32.totalorder %s11, 1
        %s198 = scalar_select %p197, %s11, 1
        %s199 = smul.addr %s198, 360
        %s200 = smul.addr %s199, 8
        %s201 = scalar_lea.vmem %s1, %s200
      $region24: #{cnn_forward.5} parent=15 // pred_fallthru
        _
      // Predicated region
      $region25: #{cnn_forward.5} parent=15 // pred_check
        %p202 = pneg %p83
      $region26: #{cnn_forward.5} parent=15 // pred_check_branch
        %204 = sbr.rel (%p202) target = $region28
      $region27: #{cnn_forward.5} parent=15 // pred_region
        %p205 = scmp.lt.s32.totalorder %s11, 1
        %s206 = scalar_select %p205, %s11, 1
        %s207 = scalar_lea.vmem %s2, %s206
      $region28: #{cnn_forward.5} parent=15 // pred_fallthru
        _
      // Predicated region
      $region29: #{cnn_forward.5} parent=15 // pred_check
        %p208 = pneg %p109
      $region30: #{cnn_forward.5} parent=15 // pred_check_branch
        %210 = sbr.rel (%p208) target = $region32
      $region31: #{cnn_forward.5} parent=15 // pred_region
        %p211 = scmp.lt.s32.totalorder %s11, 1
        %s212 = scalar_select %p211, %s11, 1
        %s213 = smul.addr %s212, 16
        %s214 = smul.addr %s213, 8
        %s215 = scalar_lea.vmem %s3, %s214
      $region32: #{cnn_forward.5} parent=15 // pred_fallthru
        _
      // Predicated region
      $region33: #{cnn_forward.5} parent=15 // pred_check
        %p216 = pneg %p135
      $region34: #{cnn_forward.5} parent=15 // pred_check_branch
        %218 = sbr.rel (%p216) target = $region36
      $region35: #{cnn_forward.5} parent=15 // pred_region
        %p219 = scmp.lt.s32.totalorder %s11, 1
        %s220 = scalar_select %p219, %s11, 1
        %s221 = scalar_lea.vmem %s4, %s220
      $region36: #{cnn_forward.5} parent=15 // pred_fallthru
        _
    $region16: #{cnn_forward.5} parent=5 // pred_fallthru
      _
    %p222 = scmp.le.s32.totalorder 1, %s11
    %p223 = scmp.lt.s32.totalorder %s11, 3
    %p224 = pnand %p222, %p223
    %p225 = pneg %p224
    // Predicated region
    $region37: #{cnn_forward.5} parent=5 // pred_check
      _
    $region38: #{cnn_forward.5} parent=5 // pred_check_branch
      %227 = sbr.rel (%p224) target = $region40
    $region39: #{cnn_forward.5} parent=5 // pred_region
      %s228 = ssub.s32 %s11, 1
      %p229 = scmp.lt.s32.totalorder %s16, 1
      %s230 = scalar_select %p229, %s16, 1
      %s231 = smul.addr %s230, 23
      %s232 = smul.addr %s231, 2
      %s233 = scalar_lea.vmem %s0, %s232
      %p234 = pneg %p37
      %p235 = pneg %p34
      %p236 = scmp.lt.s32.totalorder %s16, 1
      %s237 = scalar_select %p236, %s16, 1
      %s238 = smul.addr %s237, 360
      %s239 = smul.addr %s238, 8
      %s240 = scalar_lea.vmem %s1, %s239
      %p241 = pneg %p63
      %p242 = pneg %p60
      %p243 = scmp.lt.s32.totalorder %s16, 1
      %s244 = scalar_select %p243, %s16, 1
      %s245 = scalar_lea.vmem %s2, %s244
      %p246 = pneg %p89
      %p247 = pneg %p86
      %p248 = scmp.lt.s32.totalorder %s16, 1
      %s249 = scalar_select %p248, %s16, 1
      %s250 = smul.addr %s249, 16
      %s251 = smul.addr %s250, 8
      %s252 = scalar_lea.vmem %s3, %s251
      %p253 = pneg %p115
      %p254 = pneg %p112
      %p255 = scmp.lt.s32.totalorder %s16, 1
      %s256 = scalar_select %p255, %s16, 1
      %s257 = scalar_lea.vmem %s4, %s256
      %p258 = pneg %p141
      %p259 = pneg %p138
      %p260 = pneg %p167
      %p261 = pneg %p164
      %p262 = scmp.lt.s32.totalorder %s16, 1
      %s263 = scalar_select %p262, %s16, 1
      %s264 = smul.addr %s263, 2
      %s265 = scalar_lea.vmem %s5, %s264
      %p266 = scmp.lt.s32.totalorder %s16, 1
      %s267 = scalar_select %p266, %s16, 1
      %s268 = smul.addr %s267, 23
      %s269 = smul.addr %s268, 2
      %s270 = scalar_lea.vmem %s0, %s269
      %p271 = scmp.lt.s32.totalorder %s16, 1
      %s272 = scalar_select %p271, %s16, 1
      %s273 = smul.addr %s272, 360
      %s274 = smul.addr %s273, 8
      %s275 = scalar_lea.vmem %s1, %s274
      %p276 = scmp.lt.s32.totalorder %s16, 1
      %s277 = scalar_select %p276, %s16, 1
      %s278 = scalar_lea.vmem %s2, %s277
      %p279 = scmp.lt.s32.totalorder %s16, 1
      %s280 = scalar_select %p279, %s16, 1
      %s281 = smul.addr %s280, 16
      %s282 = smul.addr %s281, 8
      %s283 = scalar_lea.vmem %s3, %s282
      %p284 = scmp.lt.s32.totalorder %s16, 1
      %s285 = scalar_select %p284, %s16, 1
      %s286 = scalar_lea.vmem %s4, %s285
      %p287 = scmp.lt.s32.totalorder %s16, 1
      %s288 = scalar_select %p287, %s16, 1
      %s289 = smul.addr %s288, 2
      %s290 = scalar_lea.vmem %s5, %s289
      %v291 = vld [vmem:[%s270] sm:$0xff]
      %v292 = vld [vmem:[%s270 + $0x8] sm:$0xff]
      %v293 = vld [vmem:[%s270 + $0x10] sm:$0xff]
      %v294 = vld [vmem:[%s270 + $0x18] sm:$0xff]
      %v295 = vld [vmem:[%s270 + $0x20] sm:$0xff]
      %v296 = vld [vmem:[%s270 + $0x28] sm:$0x3f]
      %v297 = vld [vmem:[%s275] sm:$0xff]
      %v298 = vld [vmem:[%s275 + $0x8] sm:$0xff]
      %v299 = vld [vmem:[%s275 + $0x10] sm:$0xff]
      %v300 = vld [vmem:[%s275 + $0x18] sm:$0xff]
      %v301 = vld [vmem:[%s275 + $0x20] sm:$0xff]
      %v302 = vld [vmem:[%s275 + $0x28] sm:$0xff]
      %v303 = vld [vmem:[%s275 + $0x30] sm:$0xff]
      %v304 = vld [vmem:[%s275 + $0x38] sm:$0xff]
      %v305 = vld [vmem:[%s275 + $0x40] sm:$0xff]
      %v306 = vld [vmem:[%s275 + $0x48] sm:$0xff]
      %v307 = vld [vmem:[%s275 + $0x50] sm:$0xff]
      %v308 = vld [vmem:[%s275 + $0x58] sm:$0xff]
      %v309 = vld [vmem:[%s275 + $0x60] sm:$0xff]
      %v310 = vld [vmem:[%s275 + $0x68] sm:$0xff]
      %v311 = vld [vmem:[%s275 + $0x70] sm:$0xff]
      %v312 = vld [vmem:[%s275 + $0x78] sm:$0xff]
      %v313 = vld [vmem:[%s275 + $0x80] sm:$0xff]
      %v314 = vld [vmem:[%s275 + $0x88] sm:$0xff]
      %v315 = vld [vmem:[%s275 + $0x90] sm:$0xff]
      %v316 = vld [vmem:[%s275 + $0x98] sm:$0xff]
      %v317 = vld [vmem:[%s275 + $0xa0] sm:$0xff]
      %v318 = vld [vmem:[%s275 + $0xa8] sm:$0xff]
      %v319 = vld [vmem:[%s275 + $0xb0] sm:$0xff]
      %v320 = vld [vmem:[%s275 + $0xb8] sm:$0xff]
      %v321 = vld [vmem:[%s275 + $0xc0] sm:$0xff]
      %v322 = vld [vmem:[%s275 + $0xc8] sm:$0xff]
      %v323 = vld [vmem:[%s275 + $0xd0] sm:$0xff]
      %v324 = vld [vmem:[%s275 + $0xd8] sm:$0xff]
      %v325 = vld [vmem:[%s275 + $0xe0] sm:$0xff]
      %v326 = vld [vmem:[%s275 + $0xe8] sm:$0xff]
      %v327 = vld [vmem:[%s275 + $0xf0] sm:$0xff]
      %v328 = vld [vmem:[%s275 + $0xf8] sm:$0xff]
      %v329 = vld [vmem:[%s275 + $0x100] sm:$0xff]
      %v330 = vld [vmem:[%s275 + $0x108] sm:$0xff]
      %v331 = vld [vmem:[%s275 + $0x110] sm:$0xff]
      %v332 = vld [vmem:[%s275 + $0x118] sm:$0xff]
      %v333 = vld [vmem:[%s275 + $0x120] sm:$0xff]
      %v334 = vld [vmem:[%s275 + $0x128] sm:$0xff]
      %v335 = vld [vmem:[%s275 + $0x130] sm:$0xff]
      %v336 = vld [vmem:[%s275 + $0x138] sm:$0xff]
      %v337 = vld [vmem:[%s275 + $0x140] sm:$0xff]
      %v338 = vld [vmem:[%s275 + $0x148] sm:$0xff]
      %v339 = vld [vmem:[%s275 + $0x150] sm:$0xff]
      %v340 = vld [vmem:[%s275 + $0x158] sm:$0xff]
      %v341 = vld [vmem:[%s275 + $0x160] sm:$0xff]
      %v342 = vld [vmem:[%s275 + $0x168] sm:$0xff]
      %v343 = vld [vmem:[%s275 + $0x170] sm:$0xff]
      %v344 = vld [vmem:[%s275 + $0x178] sm:$0xff]
      %v345 = vld [vmem:[%s275 + $0x180] sm:$0xff]
      %v346 = vld [vmem:[%s275 + $0x188] sm:$0xff]
      %v347 = vld [vmem:[%s275 + $0x190] sm:$0xff]
      %v348 = vld [vmem:[%s275 + $0x198] sm:$0xff]
      %v349 = vld [vmem:[%s275 + $0x1a0] sm:$0xff]
      %v350 = vld [vmem:[%s275 + $0x1a8] sm:$0xff]
      %v351 = vld [vmem:[%s275 + $0x1b0] sm:$0xff]
      %v352 = vld [vmem:[%s275 + $0x1b8] sm:$0xff]
      %v353 = vld [vmem:[%s275 + $0x1c0] sm:$0xff]
      %v354 = vld [vmem:[%s275 + $0x1c8] sm:$0xff]
      %v355 = vld [vmem:[%s275 + $0x1d0] sm:$0xff]
      %v356 = vld [vmem:[%s275 + $0x1d8] sm:$0xff]
      %v357 = vld [vmem:[%s275 + $0x1e0] sm:$0xff]
      %v358 = vld [vmem:[%s275 + $0x1e8] sm:$0xff]
      %v359 = vld [vmem:[%s275 + $0x1f0] sm:$0xff]
      %v360 = vld [vmem:[%s275 + $0x1f8] sm:$0xff]
      %v361 = vld [vmem:[%s275 + $0x200] sm:$0xff]
      %v362 = vld [vmem:[%s275 + $0x208] sm:$0xff]
      %v363 = vld [vmem:[%s275 + $0x210] sm:$0xff]
      %v364 = vld [vmem:[%s275 + $0x218] sm:$0xff]
      %v365 = vld [vmem:[%s275 + $0x220] sm:$0xff]
      %v366 = vld [vmem:[%s275 + $0x228] sm:$0xff]
      %v367 = vld [vmem:[%s275 + $0x230] sm:$0xff]
      %v368 = vld [vmem:[%s275 + $0x238] sm:$0xff]
      %v369 = vld [vmem:[%s275 + $0x240] sm:$0xff]
      %v370 = vld [vmem:[%s275 + $0x248] sm:$0xff]
      %v371 = vld [vmem:[%s275 + $0x250] sm:$0xff]
      %v372 = vld [vmem:[%s275 + $0x258] sm:$0xff]
      %v373 = vld [vmem:[%s275 + $0x260] sm:$0xff]
      %v374 = vld [vmem:[%s275 + $0x268] sm:$0xff]
      %v375 = vld [vmem:[%s275 + $0x270] sm:$0xff]
      %v376 = vld [vmem:[%s275 + $0x278] sm:$0xff]
      %v377 = vld [vmem:[%s275 + $0x280] sm:$0xff]
      %v378 = vld [vmem:[%s275 + $0x288] sm:$0xff]
      %v379 = vld [vmem:[%s275 + $0x290] sm:$0xff]
      %v380 = vld [vmem:[%s275 + $0x298] sm:$0xff]
      %v381 = vld [vmem:[%s275 + $0x2a0] sm:$0xff]
      %v382 = vld [vmem:[%s275 + $0x2a8] sm:$0xff]
      %v383 = vld [vmem:[%s275 + $0x2b0] sm:$0xff]
      %v384 = vld [vmem:[%s275 + $0x2b8] sm:$0xff]
      %v385 = vld [vmem:[%s275 + $0x2c0] sm:$0xff]
      %v386 = vld [vmem:[%s275 + $0x2c8] sm:$0xff]
      %v387 = vld [vmem:[%s275 + $0x2d0] sm:$0xff]
      %v388 = vld [vmem:[%s275 + $0x2d8] sm:$0xff]
      %v389 = vld [vmem:[%s275 + $0x2e0] sm:$0xff]
      %v390 = vld [vmem:[%s275 + $0x2e8] sm:$0xff]
      %v391 = vld [vmem:[%s275 + $0x2f0] sm:$0xff]
      %v392 = vld [vmem:[%s275 + $0x2f8] sm:$0xff]
      %v393 = vld [vmem:[%s275 + $0x300] sm:$0xff]
      %v394 = vld [vmem:[%s275 + $0x308] sm:$0xff]
      %v395 = vld [vmem:[%s275 + $0x310] sm:$0xff]
      %v396 = vld [vmem:[%s275 + $0x318] sm:$0xff]
      %v397 = vld [vmem:[%s275 + $0x320] sm:$0xff]
      %v398 = vld [vmem:[%s275 + $0x328] sm:$0xff]
      %v399 = vld [vmem:[%s275 + $0x330] sm:$0xff]
      %v400 = vld [vmem:[%s275 + $0x338] sm:$0xff]
      %v401 = vld [vmem:[%s275 + $0x340] sm:$0xff]
      %v402 = vld [vmem:[%s275 + $0x348] sm:$0xff]
      %v403 = vld [vmem:[%s275 + $0x350] sm:$0xff]
      %v404 = vld [vmem:[%s275 + $0x358] sm:$0xff]
      %v405 = vld [vmem:[%s275 + $0x360] sm:$0xff]
      %v406 = vld [vmem:[%s275 + $0x368] sm:$0xff]
      %v407 = vld [vmem:[%s275 + $0x370] sm:$0xff]
      %v408 = vld [vmem:[%s275 + $0x378] sm:$0xff]
      %v409 = vld [vmem:[%s275 + $0x380] sm:$0xff]
      %v410 = vld [vmem:[%s275 + $0x388] sm:$0xff]
      %v411 = vld [vmem:[%s275 + $0x390] sm:$0xff]
      %v412 = vld [vmem:[%s275 + $0x398] sm:$0xff]
      %v413 = vld [vmem:[%s275 + $0x3a0] sm:$0xff]
      %v414 = vld [vmem:[%s275 + $0x3a8] sm:$0xff]
      %v415 = vld [vmem:[%s275 + $0x3b0] sm:$0xff]
      %v416 = vld [vmem:[%s275 + $0x3b8] sm:$0xff]
      %v417 = vld [vmem:[%s275 + $0x3c0] sm:$0xff]
      %v418 = vld [vmem:[%s275 + $0x3c8] sm:$0xff]
      %v419 = vld [vmem:[%s275 + $0x3d0] sm:$0xff]
      %v420 = vld [vmem:[%s275 + $0x3d8] sm:$0xff]
      %v421 = vld [vmem:[%s275 + $0x3e0] sm:$0xff]
      %v422 = vld [vmem:[%s275 + $0x3e8] sm:$0xff]
      %v423 = vld [vmem:[%s275 + $0x3f0] sm:$0xff]
      %v424 = vld [vmem:[%s275 + $0x3f8] sm:$0xff]
      %v425 = vld [vmem:[%s275 + $0x400] sm:$0xff]
      %v426 = vld [vmem:[%s275 + $0x408] sm:$0xff]
      %v427 = vld [vmem:[%s275 + $0x410] sm:$0xff]
      %v428 = vld [vmem:[%s275 + $0x418] sm:$0xff]
      %v429 = vld [vmem:[%s275 + $0x420] sm:$0xff]
      %v430 = vld [vmem:[%s275 + $0x428] sm:$0xff]
      %v431 = vld [vmem:[%s275 + $0x430] sm:$0xff]
      %v432 = vld [vmem:[%s275 + $0x438] sm:$0xff]
      %v433 = vld [vmem:[%s275 + $0x440] sm:$0xff]
      %v434 = vld [vmem:[%s275 + $0x448] sm:$0xff]
      %v435 = vld [vmem:[%s275 + $0x450] sm:$0xff]
      %v436 = vld [vmem:[%s275 + $0x458] sm:$0xff]
      %v437 = vld [vmem:[%s275 + $0x460] sm:$0xff]
      %v438 = vld [vmem:[%s275 + $0x468] sm:$0xff]
      %v439 = vld [vmem:[%s275 + $0x470] sm:$0xff]
      %v440 = vld [vmem:[%s275 + $0x478] sm:$0xff]
      %v441 = vld [vmem:[%s275 + $0x480] sm:$0xff]
      %v442 = vld [vmem:[%s275 + $0x488] sm:$0xff]
      %v443 = vld [vmem:[%s275 + $0x490] sm:$0xff]
      %v444 = vld [vmem:[%s275 + $0x498] sm:$0xff]
      %v445 = vld [vmem:[%s275 + $0x4a0] sm:$0xff]
      %v446 = vld [vmem:[%s275 + $0x4a8] sm:$0xff]
      %v447 = vld [vmem:[%s275 + $0x4b0] sm:$0xff]
      %v448 = vld [vmem:[%s275 + $0x4b8] sm:$0xff]
      %v449 = vld [vmem:[%s275 + $0x4c0] sm:$0xff]
      %v450 = vld [vmem:[%s275 + $0x4c8] sm:$0xff]
      %v451 = vld [vmem:[%s275 + $0x4d0] sm:$0xff]
      %v452 = vld [vmem:[%s275 + $0x4d8] sm:$0xff]
      %v453 = vld [vmem:[%s275 + $0x4e0] sm:$0xff]
      %v454 = vld [vmem:[%s275 + $0x4e8] sm:$0xff]
      %v455 = vld [vmem:[%s275 + $0x4f0] sm:$0xff]
      %v456 = vld [vmem:[%s275 + $0x4f8] sm:$0xff]
      %v457 = vld [vmem:[%s275 + $0x500] sm:$0xff]
      %v458 = vld [vmem:[%s275 + $0x508] sm:$0xff]
      %v459 = vld [vmem:[%s275 + $0x510] sm:$0xff]
      %v460 = vld [vmem:[%s275 + $0x518] sm:$0xff]
      %v461 = vld [vmem:[%s275 + $0x520] sm:$0xff]
      %v462 = vld [vmem:[%s275 + $0x528] sm:$0xff]
      %v463 = vld [vmem:[%s275 + $0x530] sm:$0xff]
      %v464 = vld [vmem:[%s275 + $0x538] sm:$0xff]
      %v465 = vld [vmem:[%s275 + $0x540] sm:$0xff]
      %v466 = vld [vmem:[%s275 + $0x548] sm:$0xff]
      %v467 = vld [vmem:[%s275 + $0x550] sm:$0xff]
      %v468 = vld [vmem:[%s275 + $0x558] sm:$0xff]
      %v469 = vld [vmem:[%s275 + $0x560] sm:$0xff]
      %v470 = vld [vmem:[%s275 + $0x568] sm:$0xff]
      %v471 = vld [vmem:[%s275 + $0x570] sm:$0xff]
      %v472 = vld [vmem:[%s275 + $0x578] sm:$0xff]
      %v473 = vld [vmem:[%s275 + $0x580] sm:$0xff]
      %v474 = vld [vmem:[%s275 + $0x588] sm:$0xff]
      %v475 = vld [vmem:[%s275 + $0x590] sm:$0xff]
      %v476 = vld [vmem:[%s275 + $0x598] sm:$0xff]
      %v477 = vld [vmem:[%s275 + $0x5a0] sm:$0xff]
      %v478 = vld [vmem:[%s275 + $0x5a8] sm:$0xff]
      %v479 = vld [vmem:[%s275 + $0x5b0] sm:$0xff]
      %v480 = vld [vmem:[%s275 + $0x5b8] sm:$0xff]
      %v481 = vld [vmem:[%s275 + $0x5c0] sm:$0xff]
      %v482 = vld [vmem:[%s275 + $0x5c8] sm:$0xff]
      %v483 = vld [vmem:[%s275 + $0x5d0] sm:$0xff]
      %v484 = vld [vmem:[%s275 + $0x5d8] sm:$0xff]
      %v485 = vld [vmem:[%s275 + $0x5e0] sm:$0xff]
      %v486 = vld [vmem:[%s275 + $0x5e8] sm:$0xff]
      %v487 = vld [vmem:[%s275 + $0x5f0] sm:$0xff]
      %v488 = vld [vmem:[%s275 + $0x5f8] sm:$0xff]
      %v489 = vld [vmem:[%s275 + $0x600] sm:$0xff]
      %v490 = vld [vmem:[%s275 + $0x608] sm:$0xff]
      %v491 = vld [vmem:[%s275 + $0x610] sm:$0xff]
      %v492 = vld [vmem:[%s275 + $0x618] sm:$0xff]
      %v493 = vld [vmem:[%s275 + $0x620] sm:$0xff]
      %v494 = vld [vmem:[%s275 + $0x628] sm:$0xff]
      %v495 = vld [vmem:[%s275 + $0x630] sm:$0xff]
      %v496 = vld [vmem:[%s275 + $0x638] sm:$0xff]
      %v497 = vld [vmem:[%s275 + $0x640] sm:$0xff]
      %v498 = vld [vmem:[%s275 + $0x648] sm:$0xff]
      %v499 = vld [vmem:[%s275 + $0x650] sm:$0xff]
      %v500 = vld [vmem:[%s275 + $0x658] sm:$0xff]
      %v501 = vld [vmem:[%s275 + $0x660] sm:$0xff]
      %v502 = vld [vmem:[%s275 + $0x668] sm:$0xff]
      %v503 = vld [vmem:[%s275 + $0x670] sm:$0xff]
      %v504 = vld [vmem:[%s275 + $0x678] sm:$0xff]
      %v505 = vld [vmem:[%s275 + $0x680] sm:$0xff]
      %v506 = vld [vmem:[%s275 + $0x688] sm:$0xff]
      %v507 = vld [vmem:[%s275 + $0x690] sm:$0xff]
      %v508 = vld [vmem:[%s275 + $0x698] sm:$0xff]
      %v509 = vld [vmem:[%s275 + $0x6a0] sm:$0xff]
      %v510 = vld [vmem:[%s275 + $0x6a8] sm:$0xff]
      %v511 = vld [vmem:[%s275 + $0x6b0] sm:$0xff]
      %v512 = vld [vmem:[%s275 + $0x6b8] sm:$0xff]
      %v513 = vld [vmem:[%s275 + $0x6c0] sm:$0xff]
      %v514 = vld [vmem:[%s275 + $0x6c8] sm:$0xff]
      %v515 = vld [vmem:[%s275 + $0x6d0] sm:$0xff]
      %v516 = vld [vmem:[%s275 + $0x6d8] sm:$0xff]
      %v517 = vld [vmem:[%s275 + $0x6e0] sm:$0xff]
      %v518 = vld [vmem:[%s275 + $0x6e8] sm:$0xff]
      %v519 = vld [vmem:[%s275 + $0x6f0] sm:$0xff]
      %v520 = vld [vmem:[%s275 + $0x6f8] sm:$0xff]
      %v521 = vld [vmem:[%s275 + $0x700] sm:$0xff]
      %v522 = vld [vmem:[%s275 + $0x708] sm:$0xff]
      %v523 = vld [vmem:[%s275 + $0x710] sm:$0xff]
      %v524 = vld [vmem:[%s275 + $0x718] sm:$0xff]
      %v525 = vld [vmem:[%s275 + $0x720] sm:$0xff]
      %v526 = vld [vmem:[%s275 + $0x728] sm:$0xff]
      %v527 = vld [vmem:[%s275 + $0x730] sm:$0xff]
      %v528 = vld [vmem:[%s275 + $0x738] sm:$0xff]
      %v529 = vld [vmem:[%s275 + $0x740] sm:$0xff]
      %v530 = vld [vmem:[%s275 + $0x748] sm:$0xff]
      %v531 = vld [vmem:[%s275 + $0x750] sm:$0xff]
      %v532 = vld [vmem:[%s275 + $0x758] sm:$0xff]
      %v533 = vld [vmem:[%s275 + $0x760] sm:$0xff]
      %v534 = vld [vmem:[%s275 + $0x768] sm:$0xff]
      %v535 = vld [vmem:[%s275 + $0x770] sm:$0xff]
      %v536 = vld [vmem:[%s275 + $0x778] sm:$0xff]
      %v537 = vld [vmem:[%s275 + $0x780] sm:$0xff]
      %v538 = vld [vmem:[%s275 + $0x788] sm:$0xff]
      %v539 = vld [vmem:[%s275 + $0x790] sm:$0xff]
      %v540 = vld [vmem:[%s275 + $0x798] sm:$0xff]
      %v541 = vld [vmem:[%s275 + $0x7a0] sm:$0xff]
      %v542 = vld [vmem:[%s275 + $0x7a8] sm:$0xff]
      %v543 = vld [vmem:[%s275 + $0x7b0] sm:$0xff]
      %v544 = vld [vmem:[%s275 + $0x7b8] sm:$0xff]
      %v545 = vld [vmem:[%s275 + $0x7c0] sm:$0xff]
      %v546 = vld [vmem:[%s275 + $0x7c8] sm:$0xff]
      %v547 = vld [vmem:[%s275 + $0x7d0] sm:$0xff]
      %v548 = vld [vmem:[%s275 + $0x7d8] sm:$0xff]
      %v549 = vld [vmem:[%s275 + $0x7e0] sm:$0xff]
      %v550 = vld [vmem:[%s275 + $0x7e8] sm:$0xff]
      %v551 = vld [vmem:[%s275 + $0x7f0] sm:$0xff]
      %v552 = vld [vmem:[%s275 + $0x7f8] sm:$0xff]
      %v553 = vld [vmem:[%s275 + $0x800] sm:$0xff]
      %v554 = vld [vmem:[%s275 + $0x808] sm:$0xff]
      %v555 = vld [vmem:[%s275 + $0x810] sm:$0xff]
      %v556 = vld [vmem:[%s275 + $0x818] sm:$0xff]
      %v557 = vld [vmem:[%s275 + $0x820] sm:$0xff]
      %v558 = vld [vmem:[%s275 + $0x828] sm:$0xff]
      %v559 = vld [vmem:[%s275 + $0x830] sm:$0xff]
      %v560 = vld [vmem:[%s275 + $0x838] sm:$0xff]
      %v561 = vld [vmem:[%s275 + $0x840] sm:$0xff]
      %v562 = vld [vmem:[%s275 + $0x848] sm:$0xff]
      %v563 = vld [vmem:[%s275 + $0x850] sm:$0xff]
      %v564 = vld [vmem:[%s275 + $0x858] sm:$0xff]
      %v565 = vld [vmem:[%s275 + $0x860] sm:$0xff]
      %v566 = vld [vmem:[%s275 + $0x868] sm:$0xff]
      %v567 = vld [vmem:[%s275 + $0x870] sm:$0xff]
      %v568 = vld [vmem:[%s275 + $0x878] sm:$0xff]
      %v569 = vld [vmem:[%s275 + $0x880] sm:$0xff]
      %v570 = vld [vmem:[%s275 + $0x888] sm:$0xff]
      %v571 = vld [vmem:[%s275 + $0x890] sm:$0xff]
      %v572 = vld [vmem:[%s275 + $0x898] sm:$0xff]
      %v573 = vld [vmem:[%s275 + $0x8a0] sm:$0xff]
      %v574 = vld [vmem:[%s275 + $0x8a8] sm:$0xff]
      %v575 = vld [vmem:[%s275 + $0x8b0] sm:$0xff]
      %v576 = vld [vmem:[%s275 + $0x8b8] sm:$0xff]
      %v577 = vld [vmem:[%s275 + $0x8c0] sm:$0xff]
      %v578 = vld [vmem:[%s275 + $0x8c8] sm:$0xff]
      %v579 = vld [vmem:[%s275 + $0x8d0] sm:$0xff]
      %v580 = vld [vmem:[%s275 + $0x8d8] sm:$0xff]
      %v581 = vld [vmem:[%s275 + $0x8e0] sm:$0xff]
      %v582 = vld [vmem:[%s275 + $0x8e8] sm:$0xff]
      %v583 = vld [vmem:[%s275 + $0x8f0] sm:$0xff]
      %v584 = vld [vmem:[%s275 + $0x8f8] sm:$0xff]
      %v585 = vld [vmem:[%s275 + $0x900] sm:$0xff]
      %v586 = vld [vmem:[%s275 + $0x908] sm:$0xff]
      %v587 = vld [vmem:[%s275 + $0x910] sm:$0xff]
      %v588 = vld [vmem:[%s275 + $0x918] sm:$0xff]
      %v589 = vld [vmem:[%s275 + $0x920] sm:$0xff]
      %v590 = vld [vmem:[%s275 + $0x928] sm:$0xff]
      %v591 = vld [vmem:[%s275 + $0x930] sm:$0xff]
      %v592 = vld [vmem:[%s275 + $0x938] sm:$0xff]
      %v593 = vld [vmem:[%s275 + $0x940] sm:$0xff]
      %v594 = vld [vmem:[%s275 + $0x948] sm:$0xff]
      %v595 = vld [vmem:[%s275 + $0x950] sm:$0xff]
      %v596 = vld [vmem:[%s275 + $0x958] sm:$0xff]
      %v597 = vld [vmem:[%s275 + $0x960] sm:$0xff]
      %v598 = vld [vmem:[%s275 + $0x968] sm:$0xff]
      %v599 = vld [vmem:[%s275 + $0x970] sm:$0xff]
      %v600 = vld [vmem:[%s275 + $0x978] sm:$0xff]
      %v601 = vld [vmem:[%s275 + $0x980] sm:$0xff]
      %v602 = vld [vmem:[%s275 + $0x988] sm:$0xff]
      %v603 = vld [vmem:[%s275 + $0x990] sm:$0xff]
      %v604 = vld [vmem:[%s275 + $0x998] sm:$0xff]
      %v605 = vld [vmem:[%s275 + $0x9a0] sm:$0xff]
      %v606 = vld [vmem:[%s275 + $0x9a8] sm:$0xff]
      %v607 = vld [vmem:[%s275 + $0x9b0] sm:$0xff]
      %v608 = vld [vmem:[%s275 + $0x9b8] sm:$0xff]
      %v609 = vld [vmem:[%s275 + $0x9c0] sm:$0xff]
      %v610 = vld [vmem:[%s275 + $0x9c8] sm:$0xff]
      %v611 = vld [vmem:[%s275 + $0x9d0] sm:$0xff]
      %v612 = vld [vmem:[%s275 + $0x9d8] sm:$0xff]
      %v613 = vld [vmem:[%s275 + $0x9e0] sm:$0xff]
      %v614 = vld [vmem:[%s275 + $0x9e8] sm:$0xff]
      %v615 = vld [vmem:[%s275 + $0x9f0] sm:$0xff]
      %v616 = vld [vmem:[%s275 + $0x9f8] sm:$0xff]
      %v617 = vld [vmem:[%s275 + $0xa00] sm:$0xff]
      %v618 = vld [vmem:[%s275 + $0xa08] sm:$0xff]
      %v619 = vld [vmem:[%s275 + $0xa10] sm:$0xff]
      %v620 = vld [vmem:[%s275 + $0xa18] sm:$0xff]
      %v621 = vld [vmem:[%s275 + $0xa20] sm:$0xff]
      %v622 = vld [vmem:[%s275 + $0xa28] sm:$0xff]
      %v623 = vld [vmem:[%s275 + $0xa30] sm:$0xff]
      %v624 = vld [vmem:[%s275 + $0xa38] sm:$0xff]
      %v625 = vld [vmem:[%s275 + $0xa40] sm:$0xff]
      %v626 = vld [vmem:[%s275 + $0xa48] sm:$0xff]
      %v627 = vld [vmem:[%s275 + $0xa50] sm:$0xff]
      %v628 = vld [vmem:[%s275 + $0xa58] sm:$0xff]
      %v629 = vld [vmem:[%s275 + $0xa60] sm:$0xff]
      %v630 = vld [vmem:[%s275 + $0xa68] sm:$0xff]
      %v631 = vld [vmem:[%s275 + $0xa70] sm:$0xff]
      %v632 = vld [vmem:[%s275 + $0xa78] sm:$0xff]
      %v633 = vld [vmem:[%s275 + $0xa80] sm:$0xff]
      %v634 = vld [vmem:[%s275 + $0xa88] sm:$0xff]
      %v635 = vld [vmem:[%s275 + $0xa90] sm:$0xff]
      %v636 = vld [vmem:[%s275 + $0xa98] sm:$0xff]
      %v637 = vld [vmem:[%s275 + $0xaa0] sm:$0xff]
      %v638 = vld [vmem:[%s275 + $0xaa8] sm:$0xff]
      %v639 = vld [vmem:[%s275 + $0xab0] sm:$0xff]
      %v640 = vld [vmem:[%s275 + $0xab8] sm:$0xff]
      %v641 = vld [vmem:[%s275 + $0xac0] sm:$0xff]
      %v642 = vld [vmem:[%s275 + $0xac8] sm:$0xff]
      %v643 = vld [vmem:[%s275 + $0xad0] sm:$0xff]
      %v644 = vld [vmem:[%s275 + $0xad8] sm:$0xff]
      %v645 = vld [vmem:[%s275 + $0xae0] sm:$0xff]
      %v646 = vld [vmem:[%s275 + $0xae8] sm:$0xff]
      %v647 = vld [vmem:[%s275 + $0xaf0] sm:$0xff]
      %v648 = vld [vmem:[%s275 + $0xaf8] sm:$0xff]
      %v649 = vld [vmem:[%s275 + $0xb00] sm:$0xff]
      %v650 = vld [vmem:[%s275 + $0xb08] sm:$0xff]
      %v651 = vld [vmem:[%s275 + $0xb10] sm:$0xff]
      %v652 = vld [vmem:[%s275 + $0xb18] sm:$0xff]
      %v653 = vld [vmem:[%s275 + $0xb20] sm:$0xff]
      %v654 = vld [vmem:[%s275 + $0xb28] sm:$0xff]
      %v655 = vld [vmem:[%s275 + $0xb30] sm:$0xff]
      %v656 = vld [vmem:[%s275 + $0xb38] sm:$0xff]
      %v657 = vld [vmem:[%s278] sm:$0x1]
      %v659 = vlaneseq
      %v660 = vshrl.u32 %v659, 7
      %v661 = vsub.s32 0, %v660
      %v662 = vrot.slane %v657, %v661
      %v670 = vcombine.high %v291, %v291
      %v672 = vunpack.c.l.s4 1983009808
      %v673 = vunpack.c.0.s8 %v672
      %v674 = vlaneseq
      %v675 = vshrl.u32 %v674, 7
      %v676 = vsub.s32 %v673, %v675
      %v677 = vrot.slane %v291, %v676
      %v679 = vunpack.c.l.s4 1983009808
      %v680 = vunpack.c.0.s8 %v679
      %v681 = vlaneseq
      %v682 = vshrl.u32 %v681, 7
      %v683 = vsub.s32 %v680, %v682
      %v684 = vrot.slane %v670, %v683
      %v685 = vcombine.high %v677, %v677
      %v686 = vcombine.high %v684, %v684
      %v687 = vcombine.high %v292, %v292
      %v689 = vunpack.c.l.s4 1983009808
      %v690 = vunpack.c.0.s8 %v689
      %v691 = vlaneseq
      %v692 = vshrl.u32 %v691, 7
      %v693 = vsub.s32 %v690, %v692
      %v694 = vrot.slane %v292, %v693
      %v696 = vunpack.c.l.s4 1983009808
      %v697 = vunpack.c.0.s8 %v696
      %v698 = vlaneseq
      %v699 = vshrl.u32 %v698, 7
      %v700 = vsub.s32 %v697, %v699
      %v701 = vrot.slane %v687, %v700
      %v702 = vcombine.high %v694, %v694
      %v703 = vcombine.high %v701, %v701
      %v704 = vcombine.high %v293, %v293
      %v706 = vunpack.c.l.s4 1983009808
      %v707 = vunpack.c.0.s8 %v706
      %v708 = vlaneseq
      %v709 = vshrl.u32 %v708, 7
      %v710 = vsub.s32 %v707, %v709
      %v711 = vrot.slane %v293, %v710
      %v713 = vunpack.c.l.s4 1983009808
      %v714 = vunpack.c.0.s8 %v713
      %v715 = vlaneseq
      %v716 = vshrl.u32 %v715, 7
      %v717 = vsub.s32 %v714, %v716
      %v718 = vrot.slane %v704, %v717
      %v719 = vcombine.high %v711, %v711
      %v720 = vcombine.high %v718, %v718
      %v721 = vcombine.high %v294, %v294
      %v723 = vunpack.c.l.s4 1983009808
      %v724 = vunpack.c.0.s8 %v723
      %v725 = vlaneseq
      %v726 = vshrl.u32 %v725, 7
      %v727 = vsub.s32 %v724, %v726
      %v728 = vrot.slane %v294, %v727
      %v730 = vunpack.c.l.s4 1983009808
      %v731 = vunpack.c.0.s8 %v730
      %v732 = vlaneseq
      %v733 = vshrl.u32 %v732, 7
      %v734 = vsub.s32 %v731, %v733
      %v735 = vrot.slane %v721, %v734
      %v736 = vcombine.high %v728, %v728
      %v737 = vcombine.high %v735, %v735
      %v738 = vcombine.high %v295, %v295
      %v740 = vunpack.c.l.s4 1983009808
      %v741 = vunpack.c.0.s8 %v740
      %v742 = vlaneseq
      %v743 = vshrl.u32 %v742, 7
      %v744 = vsub.s32 %v741, %v743
      %v745 = vrot.slane %v295, %v744
      %v747 = vunpack.c.l.s4 1983009808
      %v748 = vunpack.c.0.s8 %v747
      %v749 = vlaneseq
      %v750 = vshrl.u32 %v749, 7
      %v751 = vsub.s32 %v748, %v750
      %v752 = vrot.slane %v738, %v751
      %v753 = vcombine.high %v745, %v745
      %v754 = vcombine.high %v752, %v752
      %v755 = vcombine.high %v296, %v296
      %v757 = vunpack.c.l.s4 1983009808
      %v758 = vunpack.c.0.s8 %v757
      %v759 = vlaneseq
      %v760 = vshrl.u32 %v759, 7
      %v761 = vsub.s32 %v758, %v760
      %v762 = vrot.slane %v296, %v761
      %v764 = vunpack.c.l.s4 1983009808
      %v765 = vunpack.c.0.s8 %v764
      %v766 = vlaneseq
      %v767 = vshrl.u32 %v766, 7
      %v768 = vsub.s32 %v765, %v767
      %v769 = vrot.slane %v755, %v768
      %v770 = vcombine.high %v762, %v762
      %vm793 = vcmask 523264
      %v794 = vsel %vm793, %v769, 0
      %796 = vmatprep.subr.mxu0 0.0
      %797 = vmatpush1.msra.mxu0 %v297
      %798 = vmatprep.subr.mxu0 0.0
      %799 = vmatpush1.msra.mxu0 %v298
      %800 = vmatprep.subr.mxu0 0.0
      %801 = vmatpush1.msra.mxu0 %v299
      %802 = vmatprep.subr.mxu0 0.0
      %803 = vmatpush1.msra.mxu0 %v300
      %804 = vmatprep.subr.mxu0 0.0
      %805 = vmatpush1.msra.mxu0 %v301
      %806 = vmatprep.subr.mxu0 0.0
      %807 = vmatpush1.msra.mxu0 %v302
      %808 = vmatprep.subr.mxu0 0.0
      %809 = vmatpush1.msra.mxu0 %v303
      %810 = vmatprep.subr.mxu0 0.0
      %811 = vmatpush1.msra.mxu0 %v304
      %812 = vmatprep.subr.mxu0 0.0
      %813 = vmatpush1.msra.mxu0 %v305
      %814 = vmatprep.subr.mxu0 0.0
      %815 = vmatpush1.msra.mxu0 %v306
      %816 = vmatprep.subr.mxu0 0.0
      %817 = vmatpush1.msra.mxu0 %v307
      %818 = vmatprep.subr.mxu0 0.0
      %819 = vmatpush1.msra.mxu0 %v308
      %820 = vmatprep.subr.mxu0 0.0
      %821 = vmatpush1.msra.mxu0 %v309
      %822 = vmatprep.subr.mxu0 0.0
      %823 = vmatpush1.msra.mxu0 %v310
      %824 = vmatprep.subr.mxu0 0.0
      %825 = vmatpush1.msra.mxu0 %v311
      %826 = vmatprep.subr.mxu0 0.0
      %827 = vmatpush1.msra.mxu0 %v312
      %828 = vmatprep.subr.mxu0 0.0
      %829 = vmatpush1.msra.mxu0 %v313
      %830 = vmatprep.subr.mxu0 0.0
      %831 = vmatpush1.msra.mxu0 %v314
      %832 = vmatprep.subr.mxu0 0.0
      %833 = vmatpush1.msra.mxu0 %v315
      %834 = vmatprep.subr.mxu0 0.0
      %835 = vmatpush1.msra.mxu0 %v316
      %836 = vmatprep.subr.mxu0 0.0
      %837 = vmatpush1.msra.mxu0 %v317
      %838 = vmatprep.subr.mxu0 0.0
      %839 = vmatpush1.msra.mxu0 %v318
      %840 = vmatprep.subr.mxu0 0.0
      %841 = vmatpush1.msra.mxu0 %v319
      %842 = vmatprep.subr.mxu0 0.0
      %843 = vmatpush1.msra.mxu0 %v320
      %844 = vmatprep.subr.mxu0 0.0
      %845 = vmatpush1.msra.mxu0 %v321
      %846 = vmatprep.subr.mxu0 0.0
      %847 = vmatpush1.msra.mxu0 %v322
      %848 = vmatprep.subr.mxu0 0.0
      %849 = vmatpush1.msra.mxu0 %v323
      %850 = vmatprep.subr.mxu0 0.0
      %851 = vmatpush1.msra.mxu0 %v324
      %852 = vmatprep.subr.mxu0 0.0
      %853 = vmatpush1.msra.mxu0 %v325
      %854 = vmatprep.subr.mxu0 0.0
      %855 = vmatpush1.msra.mxu0 %v326
      %856 = vmatprep.subr.mxu0 0.0
      %857 = vmatpush1.msra.mxu0 %v327
      %858 = vmatprep.subr.mxu0 0.0
      %859 = vmatpush1.msra.mxu0 %v328
      %860 = vmatprep.mubr.f32.mxu0 %v685
      %861 = vmatmul.mubr.f32.gmra.mrb[0].mxu0 %v677
      %v862 = vpop.f32.mrb[0].mxu0
      %v863 = vadd.f32 %v662, %v862
      %v864 = vpop.f32.mrb[0].mxu0
      %865 = vdwg.mxu0
      %866 = vmatprep.subr.mxu0 0.0
      %867 = vmatpush1.msra.mxu0 %v329
      %868 = vmatprep.subr.mxu0 0.0
      %869 = vmatpush1.msra.mxu0 %v330
      %870 = vmatprep.subr.mxu0 0.0
      %871 = vmatpush1.msra.mxu0 %v331
      %872 = vmatprep.subr.mxu0 0.0
      %873 = vmatpush1.msra.mxu0 %v332
      %874 = vmatprep.subr.mxu0 0.0
      %875 = vmatpush1.msra.mxu0 %v333
      %876 = vmatprep.subr.mxu0 0.0
      %877 = vmatpush1.msra.mxu0 %v334
      %878 = vmatprep.subr.mxu0 0.0
      %879 = vmatpush1.msra.mxu0 %v335
      %880 = vmatprep.subr.mxu0 0.0
      %881 = vmatpush1.msra.mxu0 %v336
      %882 = vmatprep.subr.mxu0 0.0
      %883 = vmatpush1.msra.mxu0 %v337
      %884 = vmatprep.subr.mxu0 0.0
      %885 = vmatpush1.msra.mxu0 %v338
      %886 = vmatprep.subr.mxu0 0.0
      %887 = vmatpush1.msra.mxu0 %v339
      %888 = vmatprep.subr.mxu0 0.0
      %889 = vmatpush1.msra.mxu0 %v340
      %890 = vmatprep.subr.mxu0 0.0
      %891 = vmatpush1.msra.mxu0 %v341
      %892 = vmatprep.subr.mxu0 0.0
      %893 = vmatpush1.msra.mxu0 %v342
      %894 = vmatprep.subr.mxu0 0.0
      %895 = vmatpush1.msra.mxu0 %v343
      %896 = vmatprep.subr.mxu0 0.0
      %897 = vmatpush1.msra.mxu0 %v344
      %898 = vmatprep.subr.mxu0 0.0
      %899 = vmatpush1.msra.mxu0 %v345
      %900 = vmatprep.subr.mxu0 0.0
      %901 = vmatpush1.msra.mxu0 %v346
      %902 = vmatprep.subr.mxu0 0.0
      %903 = vmatpush1.msra.mxu0 %v347
      %904 = vmatprep.subr.mxu0 0.0
      %905 = vmatpush1.msra.mxu0 %v348
      %906 = vmatprep.subr.mxu0 0.0
      %907 = vmatpush1.msra.mxu0 %v349
      %908 = vmatprep.subr.mxu0 0.0
      %909 = vmatpush1.msra.mxu0 %v350
      %910 = vmatprep.subr.mxu0 0.0
      %911 = vmatpush1.msra.mxu0 %v351
      %912 = vmatprep.subr.mxu0 0.0
      %913 = vmatpush1.msra.mxu0 %v352
      %914 = vmatprep.subr.mxu0 0.0
      %915 = vmatpush1.msra.mxu0 %v353
      %916 = vmatprep.subr.mxu0 0.0
      %917 = vmatpush1.msra.mxu0 %v354
      %918 = vmatprep.subr.mxu0 0.0
      %919 = vmatpush1.msra.mxu0 %v355
      %920 = vmatprep.subr.mxu0 0.0
      %921 = vmatpush1.msra.mxu0 %v356
      %922 = vmatprep.subr.mxu0 0.0
      %923 = vmatpush1.msra.mxu0 %v357
      %924 = vmatprep.subr.mxu0 0.0
      %925 = vmatpush1.msra.mxu0 %v358
      %926 = vmatprep.subr.mxu0 0.0
      %927 = vmatpush1.msra.mxu0 %v359
      %928 = vmatprep.subr.mxu0 0.0
      %929 = vmatpush1.msra.mxu0 %v360
      %930 = vmatprep.mubr.f32.mxu0 %v686
      %931 = vmatmul.mubr.f32.gmra.mrb[0].mxu0 %v684
      %v932 = vpop.f32.mrb[0].mxu0
      %v933 = vadd.f32 %v863, %v932
      %v934 = vpop.f32.mrb[0].mxu0
      %935 = vdwg.mxu0
      %936 = vmatprep.subr.mxu0 0.0
      %937 = vmatpush1.msra.mxu0 %v361
      %938 = vmatprep.subr.mxu0 0.0
      %939 = vmatpush1.msra.mxu0 %v362
      %940 = vmatprep.subr.mxu0 0.0
      %941 = vmatpush1.msra.mxu0 %v363
      %942 = vmatprep.subr.mxu0 0.0
      %943 = vmatpush1.msra.mxu0 %v364
      %944 = vmatprep.subr.mxu0 0.0
      %945 = vmatpush1.msra.mxu0 %v365
      %946 = vmatprep.subr.mxu0 0.0
      %947 = vmatpush1.msra.mxu0 %v366
      %948 = vmatprep.subr.mxu0 0.0
      %949 = vmatpush1.msra.mxu0 %v367
      %950 = vmatprep.subr.mxu0 0.0
      %951 = vmatpush1.msra.mxu0 %v368
      %952 = vmatprep.subr.mxu0 0.0
      %953 = vmatpush1.msra.mxu0 %v369
      %954 = vmatprep.subr.mxu0 0.0
      %955 = vmatpush1.msra.mxu0 %v370
      %956 = vmatprep.subr.mxu0 0.0
      %957 = vmatpush1.msra.mxu0 %v371
      %958 = vmatprep.subr.mxu0 0.0
      %959 = vmatpush1.msra.mxu0 %v372
      %960 = vmatprep.subr.mxu0 0.0
      %961 = vmatpush1.msra.mxu0 %v373
      %962 = vmatprep.subr.mxu0 0.0
      %963 = vmatpush1.msra.mxu0 %v374
      %964 = vmatprep.subr.mxu0 0.0
      %965 = vmatpush1.msra.mxu0 %v375
      %966 = vmatprep.subr.mxu0 0.0
      %967 = vmatpush1.msra.mxu0 %v376
      %968 = vmatprep.subr.mxu0 0.0
      %969 = vmatpush1.msra.mxu0 %v377
      %970 = vmatprep.subr.mxu0 0.0
      %971 = vmatpush1.msra.mxu0 %v378
      %972 = vmatprep.subr.mxu0 0.0
      %973 = vmatpush1.msra.mxu0 %v379
      %974 = vmatprep.subr.mxu0 0.0
      %975 = vmatpush1.msra.mxu0 %v380
      %976 = vmatprep.subr.mxu0 0.0
      %977 = vmatpush1.msra.mxu0 %v381
      %978 = vmatprep.subr.mxu0 0.0
      %979 = vmatpush1.msra.mxu0 %v382
      %980 = vmatprep.subr.mxu0 0.0
      %981 = vmatpush1.msra.mxu0 %v383
      %982 = vmatprep.subr.mxu0 0.0
      %983 = vmatpush1.msra.mxu0 %v384
      %984 = vmatprep.subr.mxu0 0.0
      %985 = vmatpush1.msra.mxu0 %v385
      %986 = vmatprep.subr.mxu0 0.0
      %987 = vmatpush1.msra.mxu0 %v386
      %988 = vmatprep.subr.mxu0 0.0
      %989 = vmatpush1.msra.mxu0 %v387
      %990 = vmatprep.subr.mxu0 0.0
      %991 = vmatpush1.msra.mxu0 %v388
      %992 = vmatprep.subr.mxu0 0.0
      %993 = vmatpush1.msra.mxu0 %v389
      %994 = vmatprep.subr.mxu0 0.0
      %995 = vmatpush1.msra.mxu0 %v390
      %996 = vmatprep.subr.mxu0 0.0
      %997 = vmatpush1.msra.mxu0 %v391
      %998 = vmatprep.subr.mxu0 0.0
      %999 = vmatpush1.msra.mxu0 %v392
      %1000 = vmatprep.mubr.f32.mxu0 %v702
      %1001 = vmatmul.mubr.f32.gmra.mrb[0].mxu0 %v694
      %v1002 = vpop.f32.mrb[0].mxu0
      %v1003 = vadd.f32 %v933, %v1002
      %v1004 = vpop.f32.mrb[0].mxu0
      %1005 = vdwg.mxu0
      %1006 = vmatprep.subr.mxu0 0.0
      %1007 = vmatpush1.msra.mxu0 %v393
      %1008 = vmatprep.subr.mxu0 0.0
      %1009 = vmatpush1.msra.mxu0 %v394
      %1010 = vmatprep.subr.mxu0 0.0
      %1011 = vmatpush1.msra.mxu0 %v395
      %1012 = vmatprep.subr.mxu0 0.0
      %1013 = vmatpush1.msra.mxu0 %v396
      %1014 = vmatprep.subr.mxu0 0.0
      %1015 = vmatpush1.msra.mxu0 %v397
      %1016 = vmatprep.subr.mxu0 0.0
      %1017 = vmatpush1.msra.mxu0 %v398
      %1018 = vmatprep.subr.mxu0 0.0
      %1019 = vmatpush1.msra.mxu0 %v399
      %1020 = vmatprep.subr.mxu0 0.0
      %1021 = vmatpush1.msra.mxu0 %v400
      %1022 = vmatprep.subr.mxu0 0.0
      %1023 = vmatpush1.msra.mxu0 %v401
      %1024 = vmatprep.subr.mxu0 0.0
      %1025 = vmatpush1.msra.mxu0 %v402
      %1026 = vmatprep.subr.mxu0 0.0
      %1027 = vmatpush1.msra.mxu0 %v403
      %1028 = vmatprep.subr.mxu0 0.0
      %1029 = vmatpush1.msra.mxu0 %v404
      %1030 = vmatprep.subr.mxu0 0.0
      %1031 = vmatpush1.msra.mxu0 %v405
      %1032 = vmatprep.subr.mxu0 0.0
      %1033 = vmatpush1.msra.mxu0 %v406
      %1034 = vmatprep.subr.mxu0 0.0
      %1035 = vmatpush1.msra.mxu0 %v407
      %1036 = vmatprep.subr.mxu0 0.0
      %1037 = vmatpush1.msra.mxu0 %v408
      %1038 = vmatprep.subr.mxu0 0.0
      %1039 = vmatpush1.msra.mxu0 %v409
      %1040 = vmatprep.subr.mxu0 0.0
      %1041 = vmatpush1.msra.mxu0 %v410
      %1042 = vmatprep.subr.mxu0 0.0
      %1043 = vmatpush1.msra.mxu0 %v411
      %1044 = vmatprep.subr.mxu0 0.0
      %1045 = vmatpush1.msra.mxu0 %v412
      %1046 = vmatprep.subr.mxu0 0.0
      %1047 = vmatpush1.msra.mxu0 %v413
      %1048 = vmatprep.subr.mxu0 0.0
      %1049 = vmatpush1.msra.mxu0 %v414
      %1050 = vmatprep.subr.mxu0 0.0
      %1051 = vmatpush1.msra.mxu0 %v415
      %1052 = vmatprep.subr.mxu0 0.0
      %1053 = vmatpush1.msra.mxu0 %v416
      %1054 = vmatprep.subr.mxu0 0.0
      %1055 = vmatpush1.msra.mxu0 %v417
      %1056 = vmatprep.subr.mxu0 0.0
      %1057 = vmatpush1.msra.mxu0 %v418
      %1058 = vmatprep.subr.mxu0 0.0
      %1059 = vmatpush1.msra.mxu0 %v419
      %1060 = vmatprep.subr.mxu0 0.0
      %1061 = vmatpush1.msra.mxu0 %v420
      %1062 = vmatprep.subr.mxu0 0.0
      %1063 = vmatpush1.msra.mxu0 %v421
      %1064 = vmatprep.subr.mxu0 0.0
      %1065 = vmatpush1.msra.mxu0 %v422
      %1066 = vmatprep.subr.mxu0 0.0
      %1067 = vmatpush1.msra.mxu0 %v423
      %1068 = vmatprep.subr.mxu0 0.0
      %1069 = vmatpush1.msra.mxu0 %v424
      %1070 = vmatprep.mubr.f32.mxu0 %v703
      %1071 = vmatmul.mubr.f32.gmra.mrb[0].mxu0 %v701
      %v1072 = vpop.f32.mrb[0].mxu0
      %v1073 = vadd.f32 %v1003, %v1072
      %v1074 = vpop.f32.mrb[0].mxu0
      %1075 = vdwg.mxu0
      %1076 = vmatprep.subr.mxu0 0.0
      %1077 = vmatpush1.msra.mxu0 %v425
      %1078 = vmatprep.subr.mxu0 0.0
      %1079 = vmatpush1.msra.mxu0 %v426
      %1080 = vmatprep.subr.mxu0 0.0
      %1081 = vmatpush1.msra.mxu0 %v427
      %1082 = vmatprep.subr.mxu0 0.0
      %1083 = vmatpush1.msra.mxu0 %v428
      %1084 = vmatprep.subr.mxu0 0.0
      %1085 = vmatpush1.msra.mxu0 %v429
      %1086 = vmatprep.subr.mxu0 0.0
      %1087 = vmatpush1.msra.mxu0 %v430
      %1088 = vmatprep.subr.mxu0 0.0
      %1089 = vmatpush1.msra.mxu0 %v431
      %1090 = vmatprep.subr.mxu0 0.0
      %1091 = vmatpush1.msra.mxu0 %v432
      %1092 = vmatprep.subr.mxu0 0.0
      %1093 = vmatpush1.msra.mxu0 %v433
      %1094 = vmatprep.subr.mxu0 0.0
      %1095 = vmatpush1.msra.mxu0 %v434
      %1096 = vmatprep.subr.mxu0 0.0
      %1097 = vmatpush1.msra.mxu0 %v435
      %1098 = vmatprep.subr.mxu0 0.0
      %1099 = vmatpush1.msra.mxu0 %v436
      %1100 = vmatprep.subr.mxu0 0.0
      %1101 = vmatpush1.msra.mxu0 %v437
      %1102 = vmatprep.subr.mxu0 0.0
      %1103 = vmatpush1.msra.mxu0 %v438
      %1104 = vmatprep.subr.mxu0 0.0
      %1105 = vmatpush1.msra.mxu0 %v439
      %1106 = vmatprep.subr.mxu0 0.0
      %1107 = vmatpush1.msra.mxu0 %v440
      %1108 = vmatprep.subr.mxu0 0.0
      %1109 = vmatpush1.msra.mxu0 %v441
      %1110 = vmatprep.subr.mxu0 0.0
      %1111 = vmatpush1.msra.mxu0 %v442
      %1112 = vmatprep.subr.mxu0 0.0
      %1113 = vmatpush1.msra.mxu0 %v443
      %1114 = vmatprep.subr.mxu0 0.0
      %1115 = vmatpush1.msra.mxu0 %v444
      %1116 = vmatprep.subr.mxu0 0.0
      %1117 = vmatpush1.msra.mxu0 %v445
      %1118 = vmatprep.subr.mxu0 0.0
      %1119 = vmatpush1.msra.mxu0 %v446
      %1120 = vmatprep.subr.mxu0 0.0
      %1121 = vmatpush1.msra.mxu0 %v447
      %1122 = vmatprep.subr.mxu0 0.0
      %1123 = vmatpush1.msra.mxu0 %v448
      %1124 = vmatprep.subr.mxu0 0.0
      %1125 = vmatpush1.msra.mxu0 %v449
      %1126 = vmatprep.subr.mxu0 0.0
      %1127 = vmatpush1.msra.mxu0 %v450
      %1128 = vmatprep.subr.mxu0 0.0
      %1129 = vmatpush1.msra.mxu0 %v451
      %1130 = vmatprep.subr.mxu0 0.0
      %1131 = vmatpush1.msra.mxu0 %v452
      %1132 = vmatprep.subr.mxu0 0.0
      %1133 = vmatpush1.msra.mxu0 %v453
      %1134 = vmatprep.subr.mxu0 0.0
      %1135 = vmatpush1.msra.mxu0 %v454
      %1136 = vmatprep.subr.mxu0 0.0
      %1137 = vmatpush1.msra.mxu0 %v455
      %1138 = vmatprep.subr.mxu0 0.0
      %1139 = vmatpush1.msra.mxu0 %v456
      %1140 = vmatprep.mubr.f32.mxu0 %v719
      %1141 = vmatmul.mubr.f32.gmra.mrb[0].mxu0 %v711
      %v1142 = vpop.f32.mrb[0].mxu0
      %v1143 = vadd.f32 %v1073, %v1142
      %v1144 = vpop.f32.mrb[0].mxu0
      %1145 = vdwg.mxu0
      %1146 = vmatprep.subr.mxu0 0.0
      %1147 = vmatpush1.msra.mxu0 %v457
      %1148 = vmatprep.subr.mxu0 0.0
      %1149 = vmatpush1.msra.mxu0 %v458
      %1150 = vmatprep.subr.mxu0 0.0
      %1151 = vmatpush1.msra.mxu0 %v459
      %1152 = vmatprep.subr.mxu0 0.0
      %1153 = vmatpush1.msra.mxu0 %v460
      %1154 = vmatprep.subr.mxu0 0.0
      %1155 = vmatpush1.msra.mxu0 %v461
      %1156 = vmatprep.subr.mxu0 0.0
      %1157 = vmatpush1.msra.mxu0 %v462
      %1158 = vmatprep.subr.mxu0 0.0
      %1159 = vmatpush1.msra.mxu0 %v463
      %1160 = vmatprep.subr.mxu0 0.0
      %1161 = vmatpush1.msra.mxu0 %v464
      %1162 = vmatprep.subr.mxu0 0.0
      %1163 = vmatpush1.msra.mxu0 %v465
      %1164 = vmatprep.subr.mxu0 0.0
      %1165 = vmatpush1.msra.mxu0 %v466
      %1166 = vmatprep.subr.mxu0 0.0
      %1167 = vmatpush1.msra.mxu0 %v467
      %1168 = vmatprep.subr.mxu0 0.0
      %1169 = vmatpush1.msra.mxu0 %v468
      %1170 = vmatprep.subr.mxu0 0.0
      %1171 = vmatpush1.msra.mxu0 %v469
      %1172 = vmatprep.subr.mxu0 0.0
      %1173 = vmatpush1.msra.mxu0 %v470
      %1174 = vmatprep.subr.mxu0 0.0
      %1175 = vmatpush1.msra.mxu0 %v471
      %1176 = vmatprep.subr.mxu0 0.0
      %1177 = vmatpush1.msra.mxu0 %v472
      %1178 = vmatprep.subr.mxu0 0.0
      %1179 = vmatpush1.msra.mxu0 %v473
      %1180 = vmatprep.subr.mxu0 0.0
      %1181 = vmatpush1.msra.mxu0 %v474
      %1182 = vmatprep.subr.mxu0 0.0
      %1183 = vmatpush1.msra.mxu0 %v475
      %1184 = vmatprep.subr.mxu0 0.0
      %1185 = vmatpush1.msra.mxu0 %v476
      %1186 = vmatprep.subr.mxu0 0.0
      %1187 = vmatpush1.msra.mxu0 %v477
      %1188 = vmatprep.subr.mxu0 0.0
      %1189 = vmatpush1.msra.mxu0 %v478
      %1190 = vmatprep.subr.mxu0 0.0
      %1191 = vmatpush1.msra.mxu0 %v479
      %1192 = vmatprep.subr.mxu0 0.0
      %1193 = vmatpush1.msra.mxu0 %v480
      %1194 = vmatprep.subr.mxu0 0.0
      %1195 = vmatpush1.msra.mxu0 %v481
      %1196 = vmatprep.subr.mxu0 0.0
      %1197 = vmatpush1.msra.mxu0 %v482
      %1198 = vmatprep.subr.mxu0 0.0
      %1199 = vmatpush1.msra.mxu0 %v483
      %1200 = vmatprep.subr.mxu0 0.0
      %1201 = vmatpush1.msra.mxu0 %v484
      %1202 = vmatprep.subr.mxu0 0.0
      %1203 = vmatpush1.msra.mxu0 %v485
      %1204 = vmatprep.subr.mxu0 0.0
      %1205 = vmatpush1.msra.mxu0 %v486
      %1206 = vmatprep.subr.mxu0 0.0
      %1207 = vmatpush1.msra.mxu0 %v487
      %1208 = vmatprep.subr.mxu0 0.0
      %1209 = vmatpush1.msra.mxu0 %v488
      %1210 = vmatprep.mubr.f32.mxu0 %v720
      %1211 = vmatmul.mubr.f32.gmra.mrb[0].mxu0 %v718
      %v1212 = vpop.f32.mrb[0].mxu0
      %v1213 = vadd.f32 %v1143, %v1212
      %v1214 = vpop.f32.mrb[0].mxu0
      %1215 = vdwg.mxu0
      %1216 = vmatprep.subr.mxu0 0.0
      %1217 = vmatpush1.msra.mxu0 %v489
      %1218 = vmatprep.subr.mxu0 0.0
      %1219 = vmatpush1.msra.mxu0 %v490
      %1220 = vmatprep.subr.mxu0 0.0
      %1221 = vmatpush1.msra.mxu0 %v491
      %1222 = vmatprep.subr.mxu0 0.0
      %1223 = vmatpush1.msra.mxu0 %v492
      %1224 = vmatprep.subr.mxu0 0.0
      %1225 = vmatpush1.msra.mxu0 %v493
      %1226 = vmatprep.subr.mxu0 0.0
      %1227 = vmatpush1.msra.mxu0 %v494
      %1228 = vmatprep.subr.mxu0 0.0
      %1229 = vmatpush1.msra.mxu0 %v495
      %1230 = vmatprep.subr.mxu0 0.0
      %1231 = vmatpush1.msra.mxu0 %v496
      %1232 = vmatprep.subr.mxu0 0.0
      %1233 = vmatpush1.msra.mxu0 %v497
      %1234 = vmatprep.subr.mxu0 0.0
      %1235 = vmatpush1.msra.mxu0 %v498
      %1236 = vmatprep.subr.mxu0 0.0
      %1237 = vmatpush1.msra.mxu0 %v499
      %1238 = vmatprep.subr.mxu0 0.0
      %1239 = vmatpush1.msra.mxu0 %v500
      %1240 = vmatprep.subr.mxu0 0.0
      %1241 = vmatpush1.msra.mxu0 %v501
      %1242 = vmatprep.subr.mxu0 0.0
      %1243 = vmatpush1.msra.mxu0 %v502
      %1244 = vmatprep.subr.mxu0 0.0
      %1245 = vmatpush1.msra.mxu0 %v503
      %1246 = vmatprep.subr.mxu0 0.0
      %1247 = vmatpush1.msra.mxu0 %v504
      %1248 = vmatprep.subr.mxu0 0.0
      %1249 = vmatpush1.msra.mxu0 %v505
      %1250 = vmatprep.subr.mxu0 0.0
      %1251 = vmatpush1.msra.mxu0 %v506
      %1252 = vmatprep.subr.mxu0 0.0
      %1253 = vmatpush1.msra.mxu0 %v507
      %1254 = vmatprep.subr.mxu0 0.0
      %1255 = vmatpush1.msra.mxu0 %v508
      %1256 = vmatprep.subr.mxu0 0.0
      %1257 = vmatpush1.msra.mxu0 %v509
      %1258 = vmatprep.subr.mxu0 0.0
      %1259 = vmatpush1.msra.mxu0 %v510
      %1260 = vmatprep.subr.mxu0 0.0
      %1261 = vmatpush1.msra.mxu0 %v511
      %1262 = vmatprep.subr.mxu0 0.0
      %1263 = vmatpush1.msra.mxu0 %v512
      %1264 = vmatprep.subr.mxu0 0.0
      %1265 = vmatpush1.msra.mxu0 %v513
      %1266 = vmatprep.subr.mxu0 0.0
      %1267 = vmatpush1.msra.mxu0 %v514
      %1268 = vmatprep.subr.mxu0 0.0
      %1269 = vmatpush1.msra.mxu0 %v515
      %1270 = vmatprep.subr.mxu0 0.0
      %1271 = vmatpush1.msra.mxu0 %v516
      %1272 = vmatprep.subr.mxu0 0.0
      %1273 = vmatpush1.msra.mxu0 %v517
      %1274 = vmatprep.subr.mxu0 0.0
      %1275 = vmatpush1.msra.mxu0 %v518
      %1276 = vmatprep.subr.mxu0 0.0
      %1277 = vmatpush1.msra.mxu0 %v519
      %1278 = vmatprep.subr.mxu0 0.0
      %1279 = vmatpush1.msra.mxu0 %v520
      %1280 = vmatprep.mubr.f32.mxu0 %v736
      %1281 = vmatmul.mubr.f32.gmra.mrb[0].mxu0 %v728
      %v1282 = vpop.f32.mrb[0].mxu0
      %v1283 = vadd.f32 %v1213, %v1282
      %v1284 = vpop.f32.mrb[0].mxu0
      %1285 = vdwg.mxu0
      %1286 = vmatprep.subr.mxu0 0.0
      %1287 = vmatpush1.msra.mxu0 %v521
      %1288 = vmatprep.subr.mxu0 0.0
      %1289 = vmatpush1.msra.mxu0 %v522
      %1290 = vmatprep.subr.mxu0 0.0
      %1291 = vmatpush1.msra.mxu0 %v523
      %1292 = vmatprep.subr.mxu0 0.0
      %1293 = vmatpush1.msra.mxu0 %v524
      %1294 = vmatprep.subr.mxu0 0.0
      %1295 = vmatpush1.msra.mxu0 %v525
      %1296 = vmatprep.subr.mxu0 0.0
      %1297 = vmatpush1.msra.mxu0 %v526
      %1298 = vmatprep.subr.mxu0 0.0
      %1299 = vmatpush1.msra.mxu0 %v527
      %1300 = vmatprep.subr.mxu0 0.0
      %1301 = vmatpush1.msra.mxu0 %v528
      %1302 = vmatprep.subr.mxu0 0.0
      %1303 = vmatpush1.msra.mxu0 %v529
      %1304 = vmatprep.subr.mxu0 0.0
      %1305 = vmatpush1.msra.mxu0 %v530
      %1306 = vmatprep.subr.mxu0 0.0
      %1307 = vmatpush1.msra.mxu0 %v531
      %1308 = vmatprep.subr.mxu0 0.0
      %1309 = vmatpush1.msra.mxu0 %v532
      %1310 = vmatprep.subr.mxu0 0.0
      %1311 = vmatpush1.msra.mxu0 %v533
      %1312 = vmatprep.subr.mxu0 0.0
      %1313 = vmatpush1.msra.mxu0 %v534
      %1314 = vmatprep.subr.mxu0 0.0
      %1315 = vmatpush1.msra.mxu0 %v535
      %1316 = vmatprep.subr.mxu0 0.0
      %1317 = vmatpush1.msra.mxu0 %v536
      %1318 = vmatprep.subr.mxu0 0.0
      %1319 = vmatpush1.msra.mxu0 %v537
      %1320 = vmatprep.subr.mxu0 0.0
      %1321 = vmatpush1.msra.mxu0 %v538
      %1322 = vmatprep.subr.mxu0 0.0
      %1323 = vmatpush1.msra.mxu0 %v539
      %1324 = vmatprep.subr.mxu0 0.0
      %1325 = vmatpush1.msra.mxu0 %v540
      %1326 = vmatprep.subr.mxu0 0.0
      %1327 = vmatpush1.msra.mxu0 %v541
      %1328 = vmatprep.subr.mxu0 0.0
      %1329 = vmatpush1.msra.mxu0 %v542
      %1330 = vmatprep.subr.mxu0 0.0
      %1331 = vmatpush1.msra.mxu0 %v543
      %1332 = vmatprep.subr.mxu0 0.0
      %1333 = vmatpush1.msra.mxu0 %v544
      %1334 = vmatprep.subr.mxu0 0.0
      %1335 = vmatpush1.msra.mxu0 %v545
      %1336 = vmatprep.subr.mxu0 0.0
      %1337 = vmatpush1.msra.mxu0 %v546
      %1338 = vmatprep.subr.mxu0 0.0
      %1339 = vmatpush1.msra.mxu0 %v547
      %1340 = vmatprep.subr.mxu0 0.0
      %1341 = vmatpush1.msra.mxu0 %v548
      %1342 = vmatprep.subr.mxu0 0.0
      %1343 = vmatpush1.msra.mxu0 %v549
      %1344 = vmatprep.subr.mxu0 0.0
      %1345 = vmatpush1.msra.mxu0 %v550
      %1346 = vmatprep.subr.mxu0 0.0
      %1347 = vmatpush1.msra.mxu0 %v551
      %1348 = vmatprep.subr.mxu0 0.0
      %1349 = vmatpush1.msra.mxu0 %v552
      %1350 = vmatprep.mubr.f32.mxu0 %v737
      %1351 = vmatmul.mubr.f32.gmra.mrb[0].mxu0 %v735
      %v1352 = vpop.f32.mrb[0].mxu0
      %v1353 = vadd.f32 %v1283, %v1352
      %v1354 = vpop.f32.mrb[0].mxu0
      %1355 = vdwg.mxu0
      %1356 = vmatprep.subr.mxu0 0.0
      %1357 = vmatpush1.msra.mxu0 %v553
      %1358 = vmatprep.subr.mxu0 0.0
      %1359 = vmatpush1.msra.mxu0 %v554
      %1360 = vmatprep.subr.mxu0 0.0
      %1361 = vmatpush1.msra.mxu0 %v555
      %1362 = vmatprep.subr.mxu0 0.0
      %1363 = vmatpush1.msra.mxu0 %v556
      %1364 = vmatprep.subr.mxu0 0.0
      %1365 = vmatpush1.msra.mxu0 %v557
      %1366 = vmatprep.subr.mxu0 0.0
      %1367 = vmatpush1.msra.mxu0 %v558
      %1368 = vmatprep.subr.mxu0 0.0
      %1369 = vmatpush1.msra.mxu0 %v559
      %1370 = vmatprep.subr.mxu0 0.0
      %1371 = vmatpush1.msra.mxu0 %v560
      %1372 = vmatprep.subr.mxu0 0.0
      %1373 = vmatpush1.msra.mxu0 %v561
      %1374 = vmatprep.subr.mxu0 0.0
      %1375 = vmatpush1.msra.mxu0 %v562
      %1376 = vmatprep.subr.mxu0 0.0
      %1377 = vmatpush1.msra.mxu0 %v563
      %1378 = vmatprep.subr.mxu0 0.0
      %1379 = vmatpush1.msra.mxu0 %v564
      %1380 = vmatprep.subr.mxu0 0.0
      %1381 = vmatpush1.msra.mxu0 %v565
      %1382 = vmatprep.subr.mxu0 0.0
      %1383 = vmatpush1.msra.mxu0 %v566
      %1384 = vmatprep.subr.mxu0 0.0
      %1385 = vmatpush1.msra.mxu0 %v567
      %1386 = vmatprep.subr.mxu0 0.0
      %1387 = vmatpush1.msra.mxu0 %v568
      %1388 = vmatprep.subr.mxu0 0.0
      %1389 = vmatpush1.msra.mxu0 %v569
      %1390 = vmatprep.subr.mxu0 0.0
      %1391 = vmatpush1.msra.mxu0 %v570
      %1392 = vmatprep.subr.mxu0 0.0
      %1393 = vmatpush1.msra.mxu0 %v571
      %1394 = vmatprep.subr.mxu0 0.0
      %1395 = vmatpush1.msra.mxu0 %v572
      %1396 = vmatprep.subr.mxu0 0.0
      %1397 = vmatpush1.msra.mxu0 %v573
      %1398 = vmatprep.subr.mxu0 0.0
      %1399 = vmatpush1.msra.mxu0 %v574
      %1400 = vmatprep.subr.mxu0 0.0
      %1401 = vmatpush1.msra.mxu0 %v575
      %1402 = vmatprep.subr.mxu0 0.0
      %1403 = vmatpush1.msra.mxu0 %v576
      %1404 = vmatprep.subr.mxu0 0.0
      %1405 = vmatpush1.msra.mxu0 %v577
      %1406 = vmatprep.subr.mxu0 0.0
      %1407 = vmatpush1.msra.mxu0 %v578
      %1408 = vmatprep.subr.mxu0 0.0
      %1409 = vmatpush1.msra.mxu0 %v579
      %1410 = vmatprep.subr.mxu0 0.0
      %1411 = vmatpush1.msra.mxu0 %v580
      %1412 = vmatprep.subr.mxu0 0.0
      %1413 = vmatpush1.msra.mxu0 %v581
      %1414 = vmatprep.subr.mxu0 0.0
      %1415 = vmatpush1.msra.mxu0 %v582
      %1416 = vmatprep.subr.mxu0 0.0
      %1417 = vmatpush1.msra.mxu0 %v583
      %1418 = vmatprep.subr.mxu0 0.0
      %1419 = vmatpush1.msra.mxu0 %v584
      %1420 = vmatprep.mubr.f32.mxu0 %v753
      %1421 = vmatmul.mubr.f32.gmra.mrb[0].mxu0 %v745
      %v1422 = vpop.f32.mrb[0].mxu0
      %v1423 = vadd.f32 %v1353, %v1422
      %v1424 = vpop.f32.mrb[0].mxu0
      %1425 = vdwg.mxu0
      %1426 = vmatprep.subr.mxu0 0.0
      %1427 = vmatpush1.msra.mxu0 %v585
      %1428 = vmatprep.subr.mxu0 0.0
      %1429 = vmatpush1.msra.mxu0 %v586
      %1430 = vmatprep.subr.mxu0 0.0
      %1431 = vmatpush1.msra.mxu0 %v587
      %1432 = vmatprep.subr.mxu0 0.0
      %1433 = vmatpush1.msra.mxu0 %v588
      %1434 = vmatprep.subr.mxu0 0.0
      %1435 = vmatpush1.msra.mxu0 %v589
      %1436 = vmatprep.subr.mxu0 0.0
      %1437 = vmatpush1.msra.mxu0 %v590
      %1438 = vmatprep.subr.mxu0 0.0
      %1439 = vmatpush1.msra.mxu0 %v591
      %1440 = vmatprep.subr.mxu0 0.0
      %1441 = vmatpush1.msra.mxu0 %v592
      %1442 = vmatprep.subr.mxu0 0.0
      %1443 = vmatpush1.msra.mxu0 %v593
      %1444 = vmatprep.subr.mxu0 0.0
      %1445 = vmatpush1.msra.mxu0 %v594
      %1446 = vmatprep.subr.mxu0 0.0
      %1447 = vmatpush1.msra.mxu0 %v595
      %1448 = vmatprep.subr.mxu0 0.0
      %1449 = vmatpush1.msra.mxu0 %v596
      %1450 = vmatprep.subr.mxu0 0.0
      %1451 = vmatpush1.msra.mxu0 %v597
      %1452 = vmatprep.subr.mxu0 0.0
      %1453 = vmatpush1.msra.mxu0 %v598
      %1454 = vmatprep.subr.mxu0 0.0
      %1455 = vmatpush1.msra.mxu0 %v599
      %1456 = vmatprep.subr.mxu0 0.0
      %1457 = vmatpush1.msra.mxu0 %v600
      %1458 = vmatprep.subr.mxu0 0.0
      %1459 = vmatpush1.msra.mxu0 %v601
      %1460 = vmatprep.subr.mxu0 0.0
      %1461 = vmatpush1.msra.mxu0 %v602
      %1462 = vmatprep.subr.mxu0 0.0
      %1463 = vmatpush1.msra.mxu0 %v603
      %1464 = vmatprep.subr.mxu0 0.0
      %1465 = vmatpush1.msra.mxu0 %v604
      %1466 = vmatprep.subr.mxu0 0.0
      %1467 = vmatpush1.msra.mxu0 %v605
      %1468 = vmatprep.subr.mxu0 0.0
      %1469 = vmatpush1.msra.mxu0 %v606
      %1470 = vmatprep.subr.mxu0 0.0
      %1471 = vmatpush1.msra.mxu0 %v607
      %1472 = vmatprep.subr.mxu0 0.0
      %1473 = vmatpush1.msra.mxu0 %v608
      %1474 = vmatprep.subr.mxu0 0.0
      %1475 = vmatpush1.msra.mxu0 %v609
      %1476 = vmatprep.subr.mxu0 0.0
      %1477 = vmatpush1.msra.mxu0 %v610
      %1478 = vmatprep.subr.mxu0 0.0
      %1479 = vmatpush1.msra.mxu0 %v611
      %1480 = vmatprep.subr.mxu0 0.0
      %1481 = vmatpush1.msra.mxu0 %v612
      %1482 = vmatprep.subr.mxu0 0.0
      %1483 = vmatpush1.msra.mxu0 %v613
      %1484 = vmatprep.subr.mxu0 0.0
      %1485 = vmatpush1.msra.mxu0 %v614
      %1486 = vmatprep.subr.mxu0 0.0
      %1487 = vmatpush1.msra.mxu0 %v615
      %1488 = vmatprep.subr.mxu0 0.0
      %1489 = vmatpush1.msra.mxu0 %v616
      %1490 = vmatprep.mubr.f32.mxu0 %v754
      %1491 = vmatmul.mubr.f32.gmra.mrb[0].mxu0 %v752
      %v1492 = vpop.f32.mrb[0].mxu0
      %v1493 = vadd.f32 %v1423, %v1492
      %v1494 = vpop.f32.mrb[0].mxu0
      %1495 = vdwg.mxu0
      %1496 = vmatprep.subr.mxu0 0.0
      %1497 = vmatpush1.msra.mxu0 %v617
      %1498 = vmatprep.subr.mxu0 0.0
      %1499 = vmatpush1.msra.mxu0 %v618
      %1500 = vmatprep.subr.mxu0 0.0
      %1501 = vmatpush1.msra.mxu0 %v619
      %1502 = vmatprep.subr.mxu0 0.0
      %1503 = vmatpush1.msra.mxu0 %v620
      %1504 = vmatprep.subr.mxu0 0.0
      %1505 = vmatpush1.msra.mxu0 %v621
      %1506 = vmatprep.subr.mxu0 0.0
      %1507 = vmatpush1.msra.mxu0 %v622
      %1508 = vmatprep.subr.mxu0 0.0
      %1509 = vmatpush1.msra.mxu0 %v623
      %1510 = vmatprep.subr.mxu0 0.0
      %1511 = vmatpush1.msra.mxu0 %v624
      %1512 = vmatprep.subr.mxu0 0.0
      %1513 = vmatpush1.msra.mxu0 %v625
      %1514 = vmatprep.subr.mxu0 0.0
      %1515 = vmatpush1.msra.mxu0 %v626
      %1516 = vmatprep.subr.mxu0 0.0
      %1517 = vmatpush1.msra.mxu0 %v627
      %1518 = vmatprep.subr.mxu0 0.0
      %1519 = vmatpush1.msra.mxu0 %v628
      %1520 = vmatprep.subr.mxu0 0.0
      %1521 = vmatpush1.msra.mxu0 %v629
      %1522 = vmatprep.subr.mxu0 0.0
      %1523 = vmatpush1.msra.mxu0 %v630
      %1524 = vmatprep.subr.mxu0 0.0
      %1525 = vmatpush1.msra.mxu0 %v631
      %1526 = vmatprep.subr.mxu0 0.0
      %1527 = vmatpush1.msra.mxu0 %v632
      %1528 = vmatprep.subr.mxu0 0.0
      %1529 = vmatpush1.msra.mxu0 %v633
      %1530 = vmatprep.subr.mxu0 0.0
      %1531 = vmatpush1.msra.mxu0 %v634
      %1532 = vmatprep.subr.mxu0 0.0
      %1533 = vmatpush1.msra.mxu0 %v635
      %1534 = vmatprep.subr.mxu0 0.0
      %1535 = vmatpush1.msra.mxu0 %v636
      %1536 = vmatprep.subr.mxu0 0.0
      %1537 = vmatpush1.msra.mxu0 %v637
      %1538 = vmatprep.subr.mxu0 0.0
      %1539 = vmatpush1.msra.mxu0 %v638
      %1540 = vmatprep.subr.mxu0 0.0
      %1541 = vmatpush1.msra.mxu0 %v639
      %1542 = vmatprep.subr.mxu0 0.0
      %1543 = vmatpush1.msra.mxu0 %v640
      %1544 = vmatprep.subr.mxu0 0.0
      %1545 = vmatpush1.msra.mxu0 %v641
      %1546 = vmatprep.subr.mxu0 0.0
      %1547 = vmatpush1.msra.mxu0 %v642
      %1548 = vmatprep.subr.mxu0 0.0
      %1549 = vmatpush1.msra.mxu0 %v643
      %1550 = vmatprep.subr.mxu0 0.0
      %1551 = vmatpush1.msra.mxu0 %v644
      %1552 = vmatprep.subr.mxu0 0.0
      %1553 = vmatpush1.msra.mxu0 %v645
      %1554 = vmatprep.subr.mxu0 0.0
      %1555 = vmatpush1.msra.mxu0 %v646
      %1556 = vmatprep.subr.mxu0 0.0
      %1557 = vmatpush1.msra.mxu0 %v647
      %1558 = vmatprep.subr.mxu0 0.0
      %1559 = vmatpush1.msra.mxu0 %v648
      %1560 = vmatprep.mubr.f32.mxu0 %v770
      %1561 = vmatmul.mubr.f32.gmra.mrb[0].mxu0 %v762
      %v1562 = vpop.f32.mrb[0].mxu0
      %v1563 = vadd.f32 %v1493, %v1562
      %v1564 = vpop.f32.mrb[0].mxu0
      %1565 = vdwg.mxu0
      %1566 = vmatprep.subr.mxu0 0.0
      %1567 = vmatpush1.msra.mxu0 %v649
      %1568 = vmatprep.subr.mxu0 0.0
      %1569 = vmatpush1.msra.mxu0 %v650
      %1570 = vmatprep.subr.mxu0 0.0
      %1571 = vmatpush1.msra.mxu0 %v651
      %1572 = vmatprep.subr.mxu0 0.0
      %1573 = vmatpush1.msra.mxu0 %v652
      %1574 = vmatprep.subr.mxu0 0.0
      %1575 = vmatpush1.msra.mxu0 %v653
      %1576 = vmatprep.subr.mxu0 0.0
      %1577 = vmatpush1.msra.mxu0 %v654
      %1578 = vmatprep.subr.mxu0 0.0
      %1579 = vmatpush1.msra.mxu0 %v655
      %1580 = vmatprep.subr.mxu0 0.0
      %1581 = vmatpush1.msra.mxu0 %v656
      %1582 = vmatprep.subr.mxu0 0.0
      %1583 = vmatpush1.msra.mxu0 0.0
      %1584 = vmatprep.subr.mxu0 0.0
      %1585 = vmatpush1.msra.mxu0 0.0
      %1586 = vmatprep.subr.mxu0 0.0
      %1587 = vmatpush1.msra.mxu0 0.0
      %1588 = vmatprep.subr.mxu0 0.0
      %1589 = vmatpush1.msra.mxu0 0.0
      %1590 = vmatprep.subr.mxu0 0.0
      %1591 = vmatpush1.msra.mxu0 0.0
      %1592 = vmatprep.subr.mxu0 0.0
      %1593 = vmatpush1.msra.mxu0 0.0
      %1594 = vmatprep.subr.mxu0 0.0
      %1595 = vmatpush1.msra.mxu0 0.0
      %1596 = vmatprep.subr.mxu0 0.0
      %1597 = vmatpush1.msra.mxu0 0.0
      %1598 = vmatprep.subr.mxu0 0.0
      %1599 = vmatpush1.msra.mxu0 0.0
      %1600 = vmatprep.subr.mxu0 0.0
      %1601 = vmatpush1.msra.mxu0 0.0
      %1602 = vmatprep.subr.mxu0 0.0
      %1603 = vmatpush1.msra.mxu0 0.0
      %1604 = vmatprep.subr.mxu0 0.0
      %1605 = vmatpush1.msra.mxu0 0.0
      %1606 = vmatprep.subr.mxu0 0.0
      %1607 = vmatpush1.msra.mxu0 0.0
      %1608 = vmatprep.subr.mxu0 0.0
      %1609 = vmatpush1.msra.mxu0 0.0
      %1610 = vmatprep.subr.mxu0 0.0
      %1611 = vmatpush1.msra.mxu0 0.0
      %1612 = vmatprep.subr.mxu0 0.0
      %1613 = vmatpush1.msra.mxu0 0.0
      %1614 = vmatprep.subr.mxu0 0.0
      %1615 = vmatpush1.msra.mxu0 0.0
      %1616 = vmatprep.subr.mxu0 0.0
      %1617 = vmatpush1.msra.mxu0 0.0
      %1618 = vmatprep.subr.mxu0 0.0
      %1619 = vmatpush1.msra.mxu0 0.0
      %1620 = vmatprep.subr.mxu0 0.0
      %1621 = vmatpush1.msra.mxu0 0.0
      %1622 = vmatprep.subr.mxu0 0.0
      %1623 = vmatpush1.msra.mxu0 0.0
      %1624 = vmatprep.subr.mxu0 0.0
      %1625 = vmatpush1.msra.mxu0 0.0
      %1626 = vmatprep.subr.mxu0 0.0
      %1627 = vmatpush1.msra.mxu0 0.0
      %1628 = vmatprep.subr.mxu0 0.0
      %1629 = vmatpush1.msra.mxu0 0.0
      %1630 = vmatprep.mubr.f32.mxu0 0.0
      %1631 = vmatmul.mubr.f32.gmra.mrb[0].mxu0 %v794
      %v1632 = vpop.f32.mrb[0].mxu0
      %v1633 = vadd.f32 %v1563, %v1632
      %v1634 = vpop.f32.mrb[0].mxu0
      %1635 = vdwg.mxu0
      %v1636 = vld [vmem:[%s283] sm:$0xff]
      %v1637 = vld [vmem:[%s283 + $0x8] sm:$0xff]
      %v1638 = vld [vmem:[%s283 + $0x10] sm:$0xff]
      %v1639 = vld [vmem:[%s283 + $0x18] sm:$0xff]
      %v1640 = vld [vmem:[%s283 + $0x20] sm:$0xff]
      %v1641 = vld [vmem:[%s283 + $0x28] sm:$0xff]
      %v1642 = vld [vmem:[%s283 + $0x30] sm:$0xff]
      %v1643 = vld [vmem:[%s283 + $0x38] sm:$0xff]
      %v1644 = vld [vmem:[%s283 + $0x40] sm:$0xff]
      %v1645 = vld [vmem:[%s283 + $0x48] sm:$0xff]
      %v1646 = vld [vmem:[%s283 + $0x50] sm:$0xff]
      %v1647 = vld [vmem:[%s283 + $0x58] sm:$0xff]
      %v1648 = vld [vmem:[%s283 + $0x60] sm:$0xff]
      %v1649 = vld [vmem:[%s283 + $0x68] sm:$0xff]
      %v1650 = vld [vmem:[%s283 + $0x70] sm:$0xff]
      %v1651 = vld [vmem:[%s283 + $0x78] sm:$0xff]
      %v1652 = vld [vmem:[%s286] sm:$0x1]
      %v1654 = vlaneseq
      %v1655 = vshrl.u32 %v1654, 7
      %v1656 = vsub.s32 0, %v1655
      %v1657 = vrot.slane %v1652, %v1656
      %1659 = vmatprep.subr.mxu0 0.0
      %1660 = vmatpush1.msra.mxu0 %v1636
      %1661 = vmatprep.subr.mxu0 0.0
      %1662 = vmatpush1.msra.mxu0 %v1637
      %1663 = vmatprep.subr.mxu0 0.0
      %1664 = vmatpush1.msra.mxu0 %v1638
      %1665 = vmatprep.subr.mxu0 0.0
      %1666 = vmatpush1.msra.mxu0 %v1639
      %1667 = vmatprep.subr.mxu0 0.0
      %1668 = vmatpush1.msra.mxu0 %v1640
      %1669 = vmatprep.subr.mxu0 0.0
      %1670 = vmatpush1.msra.mxu0 %v1641
      %1671 = vmatprep.subr.mxu0 0.0
      %1672 = vmatpush1.msra.mxu0 %v1642
      %1673 = vmatprep.subr.mxu0 0.0
      %1674 = vmatpush1.msra.mxu0 %v1643
      %1675 = vmatprep.subr.mxu0 0.0
      %1676 = vmatpush1.msra.mxu0 %v1644
      %1677 = vmatprep.subr.mxu0 0.0
      %1678 = vmatpush1.msra.mxu0 %v1645
      %1679 = vmatprep.subr.mxu0 0.0
      %1680 = vmatpush1.msra.mxu0 %v1646
      %1681 = vmatprep.subr.mxu0 0.0
      %1682 = vmatpush1.msra.mxu0 %v1647
      %1683 = vmatprep.subr.mxu0 0.0
      %1684 = vmatpush1.msra.mxu0 %v1648
      %1685 = vmatprep.subr.mxu0 0.0
      %1686 = vmatpush1.msra.mxu0 %v1649
      %1687 = vmatprep.subr.mxu0 0.0
      %1688 = vmatpush1.msra.mxu0 %v1650
      %1689 = vmatprep.subr.mxu0 0.0
      %1690 = vmatpush1.msra.mxu0 %v1651
      %1691 = vmatprep.subr.mxu0 0.0
      %1692 = vmatpush1.msra.mxu0 0.0
      %1693 = vmatprep.subr.mxu0 0.0
      %1694 = vmatpush1.msra.mxu0 0.0
      %1695 = vmatprep.subr.mxu0 0.0
      %1696 = vmatpush1.msra.mxu0 0.0
      %1697 = vmatprep.subr.mxu0 0.0
      %1698 = vmatpush1.msra.mxu0 0.0
      %1699 = vmatprep.subr.mxu0 0.0
      %1700 = vmatpush1.msra.mxu0 0.0
      %1701 = vmatprep.subr.mxu0 0.0
      %1702 = vmatpush1.msra.mxu0 0.0
      %1703 = vmatprep.subr.mxu0 0.0
      %1704 = vmatpush1.msra.mxu0 0.0
      %1705 = vmatprep.subr.mxu0 0.0
      %1706 = vmatpush1.msra.mxu0 0.0
      %1707 = vmatprep.subr.mxu0 0.0
      %1708 = vmatpush1.msra.mxu0 0.0
      %1709 = vmatprep.subr.mxu0 0.0
      %1710 = vmatpush1.msra.mxu0 0.0
      %1711 = vmatprep.subr.mxu0 0.0
      %1712 = vmatpush1.msra.mxu0 0.0
      %1713 = vmatprep.subr.mxu0 0.0
      %1714 = vmatpush1.msra.mxu0 0.0
      %1715 = vmatprep.subr.mxu0 0.0
      %1716 = vmatpush1.msra.mxu0 0.0
      %1717 = vmatprep.subr.mxu0 0.0
      %1718 = vmatpush1.msra.mxu0 0.0
      %1719 = vmatprep.subr.mxu0 0.0
      %1720 = vmatpush1.msra.mxu0 0.0
      %1721 = vmatprep.subr.mxu0 0.0
      %1722 = vmatpush1.msra.mxu0 0.0
      %1723 = vmatprep.mubr.f32.mxu0 0.0
      %1724 = vmatmul.mubr.f32.gmra.mrb[0].mxu0 %v1633
      %v1725 = vpop.f32.mrb[0].mxu0
      %v1726 = vadd.f32 %v1657, %v1725
      %v1727 = vpop.f32.mrb[0].mxu0
      %1728 = vdwg.mxu0
      %vm1729 = vcmask 74752
      %1730 = vst.msk [vmem:[%s290] sm:$0x3] %vm1729, %v1726
      %p1731 = scmp.lt.s32.totalorder %s16, 1
      %s1732 = scalar_select %p1731, %s16, 1
      %s1733 = smul.addr %s1732, 2
      %s1734 = scalar_lea.vmem %s5, %s1733
      // Predicated region
      $region41: #{cnn_forward.5} parent=39 // pred_check
        %p1735 = pneg %p164
      $region42: #{cnn_forward.5} parent=39 // pred_check_branch
        %1737 = sbr.rel (%p1735) target = $region44
      $region43: #{cnn_forward.5} parent=39 // pred_region
        _
      $region44: #{cnn_forward.5} parent=39 // pred_fallthru
        _
    $region40: #{cnn_forward.5} parent=5 // pred_fallthru
      _
    %p1738 = scmp.le.s32.totalorder 2, %s11
    // Predicated region
    $region45: #{cnn_forward.5} parent=5 // pred_check
      %p1739 = pneg %p1738
    $region46: #{cnn_forward.5} parent=5 // pred_check_branch
      %1741 = sbr.rel (%p1739) target = $region48
    $region47: #{cnn_forward.5} parent=5 // pred_region
      %s1742 = ssub.s32 %s11, 2
      // Predicated region
      $region49: #{cnn_forward.5} parent=47 // pred_check
        %p1743 = pneg %p170
      $region50: #{cnn_forward.5} parent=47 // pred_check_branch
        %1745 = sbr.rel (%p1743) target = $region52
      $region51: #{cnn_forward.5} parent=47 // pred_region
        %p1746 = scmp.lt.s32.totalorder %s17, 1
        %s1747 = scalar_select %p1746, %s17, 1
        %s1748 = smul.addr %s1747, 2
        %s1749 = scalar_lea.vmem %s5, %s1748
      $region52: #{cnn_forward.5} parent=47 // pred_fallthru
        _
    $region48: #{cnn_forward.5} parent=5 // pred_fallthru
      _
  $region6: #{cnn_forward.5} parent=0 // loop_footer
    %s15 = sadd.s32 1, %s11
  $region7: #{cnn_forward.5} parent=0 // loop_footer_branch
    %10 = sbr.rel target = $region3
  $region8: #{cnn_forward.5} parent=0 // loop_exit
    _

</llo_original>
